<compile_context>
chip_gen: v6e
topology: v6e:2x2x1
jax: 0.10.0
libtpu: 0.0.40
codegen_flags: <defaults>
</compile_context>

<pallas_src>
import functools

import jax
import jax.numpy as jnp
from jax import lax
from jax.experimental import pallas as pl
from jax.experimental.pallas import tpu as pltpu

LEAKY_SLOPE = 0.05
BN_EPS = 1e-5


def _default_vmem_limit_bytes():
    # ~3/4 of physical VMEM, capped at 96 MiB (v5e/v6e: 128 MiB -> 96 MiB,
    # v7x: 64 MiB -> 48 MiB), floor 32 MiB; safe fallback if the query fails.
    try:
        cap = int(pltpu.get_tpu_info().vmem_capacity_bytes)
        return max(32 * 1024 * 1024, min((cap * 3) // 4, 96 * 1024 * 1024))
    except Exception:
        return 48 * 1024 * 1024


VMEM_LIMIT_BYTES = _default_vmem_limit_bytes()


# ----------------------------------------------------------------------------
# Kernel: whole-image Conv2d(k=4, s=2, p=1) + folded scale/shift + LeakyReLU,
# optionally fused with the final 4x4 valid conv ("fc") reduced to a scalar.
# ----------------------------------------------------------------------------
def _make_conv_kernel(Ho, Wo, fused_fc):
    Mp = Ho * (Wo + 1)  # flat rows per image (last column of each row = wrap)

    def kernel(xe_ref, xo_ref, w_ref, shift_ref, *rest):
        # xe_ref/xo_ref: (1, (Ho+1)*(Wo+1)+1, 2*Cin) bf16  row-parity phases
        # w_ref:         (8, 2*Cin, Cout) bf16             BN-folded piece weights
        # shift_ref:     (1, Cout) f32                     folded bias/BN shift
        if fused_fc:
            wfc_ref, bfc_ref, o_ref = rest   # (Mp, Cout) f32, (1,1) f32, (1,1,1) f32
        else:
            mask_ref, o_ref = rest           # (Mp, 1) f32, (1, Mp, Cout) bf16

        # 8 accumulated MXU matmuls over contiguous phase slices — no im2col
        # slab, no f32 staging copy (bf16 operands, f32 accumulation).
        acc = None
        for kh in range(4):
            qh, rh = divmod(kh, 2)
            src = xe_ref if rh == 0 else xo_ref
            for qw in range(2):
                start = qh * (Wo + 1) + qw                   # static offset
                a = src[0, pl.ds(start, Mp), :]              # (Mp, 2*Cin) bf16
                d = jnp.dot(a, w_ref[kh * 2 + qw],
                            preferred_element_type=jnp.float32)
                acc = d if acc is None else acc + d          # (Mp, Cout) f32

        y = acc + shift_ref[...]
        y = jnp.where(y >= 0.0, y, LEAKY_SLOPE * y)          # LeakyReLU(0.05)

        if fused_fc:
            # fc weights pre-flattened to the same (Mp, Cout) row layout with
            # zeros on the wrap column, so fc == full reduce of y * wfc.
            p = y * wfc_ref[...]
            s = jnp.sum(p, axis=1, keepdims=True)            # (Mp, 1)
            s = jnp.sum(s, axis=0, keepdims=True)            # (1, 1)
            o_ref[0] = (s + bfc_ref[...]).astype(o_ref.dtype)
        else:
            # Zero the wrap column so the stored activation doubles as the next
            # layer's right zero-padding (removes the slice + re-pad glue).
            y = y * mask_ref[...]
            o_ref[0] = y.astype(o_ref.dtype)

    return kernel


# ----------------------------------------------------------------------------
# Glue: padded NHWC -> flat row-parity phases (column parity folded into C).
# ----------------------------------------------------------------------------
def _row_parity_phases(xp):
    """xp: zero-padded NHWC (N, H+2, W+2, C) -> two (N, (Ho+1)*(Wo+1)+1, 2*C)."""
    N, Hp, Wp, C = xp.shape

    def phase(rh):
        ph = xp[:, rh::2, :, :]                              # (N, Ho+1, W+2, C)
        ph = ph.reshape(N, (Hp // 2) * (Wp // 2), 2 * C)     # fold col parity (free)
        return jnp.pad(ph, ((0, 0), (0, 1), (0, 0)))         # +1 guard element

    return phase(0), phase(1)


def conv4x4_s2_lrelu(xp, w_hwio, scale, shift, fc_w=None, fc_b=None,
                     act_dtype=jnp.bfloat16):
    """Conv2d(k=4,s=2,p=1) + folded BN scale/shift + LeakyReLU(0.05).

    xp is the ALREADY zero-padded NHWC input (N, H+2, W+2, Cin).  Returns the
    flat (N, Ho*(Wo+1), Cout) activation in act_dtype with the per-row wrap
    column zeroed, or — if fc_w/fc_b are given — the fused final
    Conv2d(k=4, valid) logits of shape (N, 1, 1) in f32.
    """
    N, Hp, Wp, Cin = xp.shape
    H, W = Hp - 2, Wp - 2
    assert H % 2 == 0 and W % 2 == 0
    Ho, Wo = H // 2, W // 2
    Mp = Ho * (Wo + 1)
    Lp = (Ho + 1) * (Wo + 1) + 1
    Cout = w_hwio.shape[-1]
    fused_fc = fc_w is not None
    # Guard element must cover the deepest tap slice (fragile by design).
    assert (Wo + 2) + Mp <= Lp

    xe, xo = _row_parity_phases(xp.astype(act_dtype))        # bf16 phase storage

    # Fold BN scale into the weights; split into 8 (2*Cin, Cout) tap-pair pieces.
    wk = (w_hwio * scale[None, None, None, :]).reshape(4, 2, 2 * Cin, Cout)
    wk = wk.reshape(8, 2 * Cin, Cout).astype(jnp.bfloat16)
    shift2 = shift.reshape(1, Cout).astype(jnp.float32)

    in_specs = [
        pl.BlockSpec((1, Lp, 2 * Cin), lambda n: (n, 0, 0)),
        pl.BlockSpec((1, Lp, 2 * Cin), lambda n: (n, 0, 0)),
        pl.BlockSpec((8, 2 * Cin, Cout), lambda n: (0, 0, 0)),
        pl.BlockSpec((1, Cout), lambda n: (0, 0)),
    ]
    args = [xe, xo, wk, shift2]

    if fused_fc:
        assert (Ho, Wo) == (4, 4), "fc fusion expects a 4x4 feature map"
        # fc weights in the kernel's flat row order, zero on the wrap column.
        wfc = jnp.pad(fc_w[..., 0], ((0, 0), (0, 1), (0, 0)))   # (4, 5, Cout)
        wfc = wfc.reshape(Mp, Cout).astype(jnp.float32)
        bfc = fc_b.reshape(1, 1).astype(jnp.float32)
        in_specs += [pl.BlockSpec((Mp, Cout), lambda n: (0, 0)),
                     pl.BlockSpec((1, 1), lambda n: (0, 0))]
        args += [wfc, bfc]
        out_shape = jax.ShapeDtypeStruct((N, 1, 1), jnp.float32)
        out_specs = pl.BlockSpec((1, 1, 1), lambda n: (n, 0, 0))
    else:
        mask = (jnp.arange(Mp) % (Wo + 1) < Wo).astype(jnp.float32)
        mask = mask.reshape(Mp, 1)
        in_specs += [pl.BlockSpec((Mp, 1), lambda n: (0, 0))]
        args += [mask]
        out_shape = jax.ShapeDtypeStruct((N, Mp, Cout), act_dtype)
        out_specs = pl.BlockSpec((1, Mp, Cout), lambda n: (n, 0, 0))

    return pl.pallas_call(
        _make_conv_kernel(Ho, Wo, fused_fc),
        out_shape=out_shape,
        grid=(N,),
        in_specs=in_specs,
        out_specs=out_specs,
        compiler_params=pltpu.CompilerParams(
            dimension_semantics=("parallel",),
            vmem_limit_bytes=VMEM_LIMIT_BYTES),
    )(*args)


# ----------------------------------------------------------------------------
# D2 parameters (deterministic synthetic init) and forward pass.
# ----------------------------------------------------------------------------
def init_d2_params(key, depth=8):
    ks = jax.random.split(key, 16)

    def w(k, cin, cout):
        return jax.random.normal(k, (4, 4, cin, cout), jnp.float32) * 0.05

    p = {}
    p["w1"] = w(ks[0], 3, depth)
    p["b1"] = jax.random.normal(ks[1], (depth,), jnp.float32) * 0.05

    p["w2"] = w(ks[2], depth, depth * 2)
    p["b2"] = jax.random.normal(ks[3], (depth * 2,), jnp.float32) * 0.05
    p["bn2_gamma"] = 1.0 + 0.1 * jax.random.normal(ks[4], (depth * 2,), jnp.float32)
    p["bn2_beta"] = 0.1 * jax.random.normal(ks[5], (depth * 2,), jnp.float32)
    p["bn2_mean"] = 0.05 * jax.random.normal(ks[6], (depth * 2,), jnp.float32)
    p["bn2_var"] = 0.9 + 0.2 * jax.random.uniform(ks[7], (depth * 2,), jnp.float32)

    p["w3"] = w(ks[8], depth * 2, depth * 4)
    p["b3"] = jax.random.normal(ks[9], (depth * 4,), jnp.float32) * 0.05
    p["bn3_gamma"] = 1.0 + 0.1 * jax.random.normal(ks[10], (depth * 4,), jnp.float32)
    p["bn3_beta"] = 0.1 * jax.random.normal(ks[11], (depth * 4,), jnp.float32)
    p["bn3_mean"] = 0.05 * jax.random.normal(ks[12], (depth * 4,), jnp.float32)
    p["bn3_var"] = 0.9 + 0.2 * jax.random.uniform(ks[13], (depth * 4,), jnp.float32)

    p["w_fc"] = w(ks[14], depth * 4, 1)
    p["b_fc"] = jax.random.normal(ks[15], (1,), jnp.float32) * 0.05
    return p


def _bn_fold(bias, gamma, beta, mean, var):
    scale = gamma / jnp.sqrt(var + BN_EPS)
    shift = beta + (bias - mean) * scale
    return scale, shift


def d2_forward(params, x_nchw, act_dtype=jnp.bfloat16):
    x = jnp.transpose(x_nchw, (0, 2, 3, 1))  # NCHW -> NHWC
    N, H, W, _ = x.shape

    def pad_from_flat(flat, Ho, Wo, C):
        # Kernel output already carries a zeroed right-pad (wrap) column; only
        # top/bottom rows and the left column are added here.
        a = flat.reshape(N, Ho, Wo + 1, C)
        return jnp.pad(a, ((0, 0), (1, 1), (1, 0), (0, 0)))

    # conv1: Conv(3 -> d) + LeakyReLU(0.05)
    xp = jnp.pad(x, ((0, 0), (1, 1), (1, 1), (0, 0)))
    out = conv4x4_s2_lrelu(xp, params["w1"], jnp.ones_like(params["b1"]),
                           params["b1"], act_dtype=act_dtype)
    H, W, C = H // 2, W // 2, params["w1"].shape[-1]

    # conv2: Conv(d -> 2d) + BatchNorm(2d) + LeakyReLU(0.05)
    s2, t2 = _bn_fold(params["b2"], params["bn2_gamma"], params["bn2_beta"],
                      params["bn2_mean"], params["bn2_var"])
    out = conv4x4_s2_lrelu(pad_from_flat(out, H, W, C), params["w2"], s2, t2,
                           act_dtype=act_dtype)
    H, W, C = H // 2, W // 2, params["w2"].shape[-1]

    # conv3 + fc fused: Conv(2d -> 4d) + BN + LeakyReLU, then Conv(4d -> 1, k=4, valid)
    s3, t3 = _bn_fold(params["b3"], params["bn3_gamma"], params["bn3_beta"],
                      params["bn3_mean"], params["bn3_var"])
    out = conv4x4_s2_lrelu(pad_from_flat(out, H, W, C), params["w3"], s3, t3,
                           fc_w=params["w_fc"], fc_b=params["b_fc"],
                           act_dtype=act_dtype)
    return jnp.squeeze(out)                                   # (N,)


# ----------------------------------------------------------------------------
# Pure-JAX reference (inference-mode BN), used as a smoke-test oracle.
# ----------------------------------------------------------------------------
def _reference_forward(params, x_nchw):
    def conv(x, w, b, stride, pad):
        y = lax.conv_general_dilated(
            x, w, window_strides=(stride, stride), padding=pad,
            dimension_numbers=("NCHW", "HWIO", "NCHW"))
        return y + b[None, :, None, None]

    def lrelu(x):
        return jnp.where(x >= 0, x, LEAKY_SLOPE * x)

    def bn(x, g, bta, m, v):
        inv = g / jnp.sqrt(v + BN_EPS)
        return (x - m[None, :, None, None]) * inv[None, :, None, None] \
               + bta[None, :, None, None]

    out = lrelu(conv(x_nchw, params["w1"], params["b1"], 2, ((1, 1), (1, 1))))
    out = lrelu(bn(conv(out, params["w2"], params["b2"], 2, ((1, 1), (1, 1))),
                   params["bn2_gamma"], params["bn2_beta"],
                   params["bn2_mean"], params["bn2_var"]))
    out = lrelu(bn(conv(out, params["w3"], params["b3"], 2, ((1, 1), (1, 1))),
                   params["bn3_gamma"], params["bn3_beta"],
                   params["bn3_mean"], params["bn3_var"]))
    out = conv(out, params["w_fc"], params["b_fc"], 1, "VALID")
    return jnp.squeeze(out)


if __name__ == "__main__":
    key = jax.random.PRNGKey(0)
    pkey, xkey = jax.random.split(key)

    depth = 8                                    # small synthetic depth (module default is 64)
    params = init_d2_params(pkey, depth=depth)

    # PyTorch-style NCHW input; 32x32 spatial -> 16 -> 8 -> 4 -> 1 after the fc conv.
    x = jax.random.normal(xkey, (2, 3, 32, 32), jnp.float32)

    fwd = jax.jit(functools.partial(d2_forward, params))
    y = fwd(x)
    jax.block_until_ready(y)

    assert y.shape == (2,), y.shape
    assert y.dtype == jnp.float32

    ref = _reference_forward(params, x)
    refmag = float(jnp.max(jnp.abs(ref)))
    err = float(jnp.max(jnp.abs(y - ref)))
    # bf16 MXU operands + bf16 activation storage: allclose-style tolerance.
    assert err < 5e-2 + 5e-2 * refmag, f"mismatch vs reference: max abs err {err}"

    print("KERNEL_OK")
</pallas_src>

<mosaic_0001>
module attributes {stable_mosaic.version = 11 : i64} {
  func.func @kernel(%arg0: i32, %arg1: memref<1x290x6xbf16, #tpu.memory_space<vmem>>, %arg2: memref<1x290x6xbf16, #tpu.memory_space<vmem>>, %arg3: memref<8x6x8xbf16, #tpu.memory_space<vmem>>, %arg4: memref<1x8xf32, #tpu.memory_space<vmem>>, %arg5: memref<272x1xf32, #tpu.memory_space<vmem>>, %arg6: memref<1x272x8xbf16, #tpu.memory_space<vmem>>) attributes {dimension_semantics = [#tpu.dimension_semantics<parallel>], iteration_bounds = array<i64: 2>, scalar_prefetch = 0 : i64, scratch_operands = 0 : i64, tpu.core_type = #tpu.core_type<tc>, window_params = [{transform_indices = @transform_0, window_bounds = array<i64: 1, 290, 6>}, {transform_indices = @transform_1, window_bounds = array<i64: 1, 290, 6>}, {pipeline_mode = #tpu.pipeline_mode<synchronous>, transform_indices = @transform_2, window_bounds = array<i64: 8, 6, 8>}, {pipeline_mode = #tpu.pipeline_mode<synchronous>, transform_indices = @transform_3, window_bounds = array<i64: 1, 8>}, {pipeline_mode = #tpu.pipeline_mode<synchronous>, transform_indices = @transform_4, window_bounds = array<i64: 272, 1>}, {transform_indices = @transform_5, window_bounds = array<i64: 1, 272, 8>}]} {
    %c0 = arith.constant 0 : index
    %c0_0 = arith.constant 0 : index
    %c0_1 = arith.constant 0 : index
    %0 = vector.load %arg1[%c0, %c0_0, %c0_1] : memref<1x290x6xbf16, #tpu.memory_space<vmem>>, vector<1x272x6xbf16>
    %1 = vector.shape_cast %0 : vector<1x272x6xbf16> to vector<272x6xbf16>
    %c0_2 = arith.constant 0 : index
    %c0_3 = arith.constant 0 : index
    %c0_4 = arith.constant 0 : index
    %2 = vector.load %arg3[%c0_2, %c0_3, %c0_4] : memref<8x6x8xbf16, #tpu.memory_space<vmem>>, vector<1x6x8xbf16>
    %3 = vector.shape_cast %2 : vector<1x6x8xbf16> to vector<6x8xbf16>
    %cst = arith.constant dense<0.000000e+00> : vector<272x8xf32>
    %4 = tpu.matmul %1, %3, %cst {dimension_numbers = #tpu.dot_dimension_numbers<[1], [0], [0], [1], [0, 0, 1, 1], [], []>} : vector<272x6xbf16>, vector<6x8xbf16>, vector<272x8xf32> -> vector<272x8xf32>
    %c0_5 = arith.constant 0 : index
    %c1 = arith.constant 1 : index
    %c0_6 = arith.constant 0 : index
    %5 = vector.load %arg1[%c0_5, %c1, %c0_6] : memref<1x290x6xbf16, #tpu.memory_space<vmem>>, vector<1x272x6xbf16>
    %6 = vector.shape_cast %5 : vector<1x272x6xbf16> to vector<272x6xbf16>
    %c1_7 = arith.constant 1 : index
    %c0_8 = arith.constant 0 : index
    %c0_9 = arith.constant 0 : index
    %7 = vector.load %arg3[%c1_7, %c0_8, %c0_9] : memref<8x6x8xbf16, #tpu.memory_space<vmem>>, vector<1x6x8xbf16>
    %8 = vector.shape_cast %7 : vector<1x6x8xbf16> to vector<6x8xbf16>
    %cst_10 = arith.constant dense<0.000000e+00> : vector<272x8xf32>
    %9 = tpu.matmul %6, %8, %cst_10 {dimension_numbers = #tpu.dot_dimension_numbers<[1], [0], [0], [1], [0, 0, 1, 1], [], []>} : vector<272x6xbf16>, vector<6x8xbf16>, vector<272x8xf32> -> vector<272x8xf32>
    %10 = arith.addf %4, %9 : vector<272x8xf32>
    %c0_11 = arith.constant 0 : index
    %c0_12 = arith.constant 0 : index
    %c0_13 = arith.constant 0 : index
    %11 = vector.load %arg2[%c0_11, %c0_12, %c0_13] : memref<1x290x6xbf16, #tpu.memory_space<vmem>>, vector<1x272x6xbf16>
    %12 = vector.shape_cast %11 : vector<1x272x6xbf16> to vector<272x6xbf16>
    %c2 = arith.constant 2 : index
    %c0_14 = arith.constant 0 : index
    %c0_15 = arith.constant 0 : index
    %13 = vector.load %arg3[%c2, %c0_14, %c0_15] : memref<8x6x8xbf16, #tpu.memory_space<vmem>>, vector<1x6x8xbf16>
    %14 = vector.shape_cast %13 : vector<1x6x8xbf16> to vector<6x8xbf16>
    %cst_16 = arith.constant dense<0.000000e+00> : vector<272x8xf32>
    %15 = tpu.matmul %12, %14, %cst_16 {dimension_numbers = #tpu.dot_dimension_numbers<[1], [0], [0], [1], [0, 0, 1, 1], [], []>} : vector<272x6xbf16>, vector<6x8xbf16>, vector<272x8xf32> -> vector<272x8xf32>
    %16 = arith.addf %10, %15 : vector<272x8xf32>
    %c0_17 = arith.constant 0 : index
    %c1_18 = arith.constant 1 : index
    %c0_19 = arith.constant 0 : index
    %17 = vector.load %arg2[%c0_17, %c1_18, %c0_19] : memref<1x290x6xbf16, #tpu.memory_space<vmem>>, vector<1x272x6xbf16>
    %18 = vector.shape_cast %17 : vector<1x272x6xbf16> to vector<272x6xbf16>
    %c3 = arith.constant 3 : index
    %c0_20 = arith.constant 0 : index
    %c0_21 = arith.constant 0 : index
    %19 = vector.load %arg3[%c3, %c0_20, %c0_21] : memref<8x6x8xbf16, #tpu.memory_space<vmem>>, vector<1x6x8xbf16>
    %20 = vector.shape_cast %19 : vector<1x6x8xbf16> to vector<6x8xbf16>
    %cst_22 = arith.constant dense<0.000000e+00> : vector<272x8xf32>
    %21 = tpu.matmul %18, %20, %cst_22 {dimension_numbers = #tpu.dot_dimension_numbers<[1], [0], [0], [1], [0, 0, 1, 1], [], []>} : vector<272x6xbf16>, vector<6x8xbf16>, vector<272x8xf32> -> vector<272x8xf32>
    %22 = arith.addf %16, %21 : vector<272x8xf32>
    %c0_23 = arith.constant 0 : index
    %c17 = arith.constant 17 : index
    %c0_24 = arith.constant 0 : index
    %23 = vector.load %arg1[%c0_23, %c17, %c0_24] : memref<1x290x6xbf16, #tpu.memory_space<vmem>>, vector<1x272x6xbf16>
    %24 = vector.shape_cast %23 : vector<1x272x6xbf16> to vector<272x6xbf16>
    %c4 = arith.constant 4 : index
    %c0_25 = arith.constant 0 : index
    %c0_26 = arith.constant 0 : index
    %25 = vector.load %arg3[%c4, %c0_25, %c0_26] : memref<8x6x8xbf16, #tpu.memory_space<vmem>>, vector<1x6x8xbf16>
    %26 = vector.shape_cast %25 : vector<1x6x8xbf16> to vector<6x8xbf16>
    %cst_27 = arith.constant dense<0.000000e+00> : vector<272x8xf32>
    %27 = tpu.matmul %24, %26, %cst_27 {dimension_numbers = #tpu.dot_dimension_numbers<[1], [0], [0], [1], [0, 0, 1, 1], [], []>} : vector<272x6xbf16>, vector<6x8xbf16>, vector<272x8xf32> -> vector<272x8xf32>
    %28 = arith.addf %22, %27 : vector<272x8xf32>
    %c0_28 = arith.constant 0 : index
    %c18 = arith.constant 18 : index
    %c0_29 = arith.constant 0 : index
    %29 = vector.load %arg1[%c0_28, %c18, %c0_29] : memref<1x290x6xbf16, #tpu.memory_space<vmem>>, vector<1x272x6xbf16>
    %30 = vector.shape_cast %29 : vector<1x272x6xbf16> to vector<272x6xbf16>
    %c5 = arith.constant 5 : index
    %c0_30 = arith.constant 0 : index
    %c0_31 = arith.constant 0 : index
    %31 = vector.load %arg3[%c5, %c0_30, %c0_31] : memref<8x6x8xbf16, #tpu.memory_space<vmem>>, vector<1x6x8xbf16>
    %32 = vector.shape_cast %31 : vector<1x6x8xbf16> to vector<6x8xbf16>
    %cst_32 = arith.constant dense<0.000000e+00> : vector<272x8xf32>
    %33 = tpu.matmul %30, %32, %cst_32 {dimension_numbers = #tpu.dot_dimension_numbers<[1], [0], [0], [1], [0, 0, 1, 1], [], []>} : vector<272x6xbf16>, vector<6x8xbf16>, vector<272x8xf32> -> vector<272x8xf32>
    %34 = arith.addf %28, %33 : vector<272x8xf32>
    %c0_33 = arith.constant 0 : index
    %c17_34 = arith.constant 17 : index
    %c0_35 = arith.constant 0 : index
    %35 = vector.load %arg2[%c0_33, %c17_34, %c0_35] : memref<1x290x6xbf16, #tpu.memory_space<vmem>>, vector<1x272x6xbf16>
    %36 = vector.shape_cast %35 : vector<1x272x6xbf16> to vector<272x6xbf16>
    %c6 = arith.constant 6 : index
    %c0_36 = arith.constant 0 : index
    %c0_37 = arith.constant 0 : index
    %37 = vector.load %arg3[%c6, %c0_36, %c0_37] : memref<8x6x8xbf16, #tpu.memory_space<vmem>>, vector<1x6x8xbf16>
    %38 = vector.shape_cast %37 : vector<1x6x8xbf16> to vector<6x8xbf16>
    %cst_38 = arith.constant dense<0.000000e+00> : vector<272x8xf32>
    %39 = tpu.matmul %36, %38, %cst_38 {dimension_numbers = #tpu.dot_dimension_numbers<[1], [0], [0], [1], [0, 0, 1, 1], [], []>} : vector<272x6xbf16>, vector<6x8xbf16>, vector<272x8xf32> -> vector<272x8xf32>
    %40 = arith.addf %34, %39 : vector<272x8xf32>
    %c0_39 = arith.constant 0 : index
    %c18_40 = arith.constant 18 : index
    %c0_41 = arith.constant 0 : index
    %41 = vector.load %arg2[%c0_39, %c18_40, %c0_41] : memref<1x290x6xbf16, #tpu.memory_space<vmem>>, vector<1x272x6xbf16>
    %42 = vector.shape_cast %41 : vector<1x272x6xbf16> to vector<272x6xbf16>
    %c7 = arith.constant 7 : index
    %c0_42 = arith.constant 0 : index
    %c0_43 = arith.constant 0 : index
    %43 = vector.load %arg3[%c7, %c0_42, %c0_43] : memref<8x6x8xbf16, #tpu.memory_space<vmem>>, vector<1x6x8xbf16>
    %44 = vector.shape_cast %43 : vector<1x6x8xbf16> to vector<6x8xbf16>
    %cst_44 = arith.constant dense<0.000000e+00> : vector<272x8xf32>
    %45 = tpu.matmul %42, %44, %cst_44 {dimension_numbers = #tpu.dot_dimension_numbers<[1], [0], [0], [1], [0, 0, 1, 1], [], []>} : vector<272x6xbf16>, vector<6x8xbf16>, vector<272x8xf32> -> vector<272x8xf32>
    %46 = arith.addf %40, %45 : vector<272x8xf32>
    %c0_45 = arith.constant 0 : index
    %c0_46 = arith.constant 0 : index
    %47 = vector.load %arg4[%c0_45, %c0_46] : memref<1x8xf32, #tpu.memory_space<vmem>>, vector<1x8xf32>
    %48 = vector.broadcast %47 : vector<1x8xf32> to vector<272x8xf32>
    %49 = arith.addf %46, %48 : vector<272x8xf32>
    %cst_47 = arith.constant 0.000000e+00 : f32
    %50 = vector.broadcast %cst_47 : f32 to vector<272x8xf32>
    %51 = arith.cmpf oge, %49, %50 : vector<272x8xf32>
    %cst_48 = arith.constant 5.000000e-02 : f32
    %52 = vector.broadcast %cst_48 : f32 to vector<272x8xf32>
    %53 = arith.mulf %52, %49 : vector<272x8xf32>
    %54 = arith.select %51, %49, %53 : vector<272x8xi1>, vector<272x8xf32>
    %c0_49 = arith.constant 0 : index
    %c0_50 = arith.constant 0 : index
    %55 = vector.load %arg5[%c0_49, %c0_50] : memref<272x1xf32, #tpu.memory_space<vmem>>, vector<272x1xf32>
    %56 = vector.broadcast %55 : vector<272x1xf32> to vector<272x8xf32>
    %57 = arith.mulf %54, %56 : vector<272x8xf32>
    %58 = arith.truncf %57 : vector<272x8xf32> to vector<272x8xbf16>
    %c0_51 = arith.constant 0 : index
    %c0_52 = arith.constant 0 : index
    %c0_53 = arith.constant 0 : index
    %59 = vector.load %arg6[%c0_51, %c0_52, %c0_53] : memref<1x272x8xbf16, #tpu.memory_space<vmem>>, vector<1x272x8xbf16>
    %60 = vector.shape_cast %59 : vector<1x272x8xbf16> to vector<272x8xbf16>
    %61 = vector.shape_cast %58 : vector<272x8xbf16> to vector<1x272x8xbf16>
    tpu.vector_store %arg6[%c0_51, %c0_52, %c0_53], %61 {strides = array<i32>} : memref<1x272x8xbf16, #tpu.memory_space<vmem>>, vector<1x272x8xbf16>,
    return
  }
  func.func @transform_0(%arg0: i32) -> (i32, i32, i32) {
    %c0_i32 = arith.constant 0 : i32
    %c0_i32_0 = arith.constant 0 : i32
    %c0_i32_1 = arith.constant 0 : i32
    return %arg0, %c0_i32, %c0_i32_0 : i32, i32, i32
  }
  func.func @transform_1(%arg0: i32) -> (i32, i32, i32) {
    %c0_i32 = arith.constant 0 : i32
    %c0_i32_0 = arith.constant 0 : i32
    %c0_i32_1 = arith.constant 0 : i32
    return %arg0, %c0_i32, %c0_i32_0 : i32, i32, i32
  }
  func.func @transform_2(%arg0: i32) -> (i32, i32, i32) {
    %c0_i32 = arith.constant 0 : i32
    %c0_i32_0 = arith.constant 0 : i32
    %c0_i32_1 = arith.constant 0 : i32
    %c0_i32_2 = arith.constant 0 : i32
    return %c0_i32, %c0_i32_0, %c0_i32_1 : i32, i32, i32
  }
  func.func @transform_3(%arg0: i32) -> (i32, i32) {
    %c0_i32 = arith.constant 0 : i32
    %c0_i32_0 = arith.constant 0 : i32
    %c0_i32_1 = arith.constant 0 : i32
    return %c0_i32, %c0_i32_0 : i32, i32
  }
  func.func @transform_4(%arg0: i32) -> (i32, i32) {
    %c0_i32 = arith.constant 0 : i32
    %c0_i32_0 = arith.constant 0 : i32
    %c0_i32_1 = arith.constant 0 : i32
    return %c0_i32, %c0_i32_0 : i32, i32
  }
  func.func @transform_5(%arg0: i32) -> (i32, i32, i32) {
    %c0_i32 = arith.constant 0 : i32
    %c0_i32_0 = arith.constant 0 : i32
    %c0_i32_1 = arith.constant 0 : i32
    return %arg0, %c0_i32, %c0_i32_0 : i32, i32, i32
  }
}

module attributes {stable_mosaic.version = 11 : i64} {
  func.func @kernel(%arg0: i32, %arg1: memref<1x82x16xbf16, #tpu.memory_space<vmem>>, %arg2: memref<1x82x16xbf16, #tpu.memory_space<vmem>>, %arg3: memref<8x16x16xbf16, #tpu.memory_space<vmem>>, %arg4: memref<1x16xf32, #tpu.memory_space<vmem>>, %arg5: memref<72x1xf32, #tpu.memory_space<vmem>>, %arg6: memref<1x72x16xbf16, #tpu.memory_space<vmem>>) attributes {dimension_semantics = [#tpu.dimension_semantics<parallel>], iteration_bounds = array<i64: 2>, scalar_prefetch = 0 : i64, scratch_operands = 0 : i64, tpu.core_type = #tpu.core_type<tc>, window_params = [{transform_indices = @transform_0, window_bounds = array<i64: 1, 82, 16>}, {transform_indices = @transform_1, window_bounds = array<i64: 1, 82, 16>}, {pipeline_mode = #tpu.pipeline_mode<synchronous>, transform_indices = @transform_2, window_bounds = array<i64: 8, 16, 16>}, {pipeline_mode = #tpu.pipeline_mode<synchronous>, transform_indices = @transform_3, window_bounds = array<i64: 1, 16>}, {pipeline_mode = #tpu.pipeline_mode<synchronous>, transform_indices = @transform_4, window_bounds = array<i64: 72, 1>}, {transform_indices = @transform_5, window_bounds = array<i64: 1, 72, 16>}]} {
    %c0 = arith.constant 0 : index
    %c0_0 = arith.constant 0 : index
    %c0_1 = arith.constant 0 : index
    %0 = vector.load %arg1[%c0, %c0_0, %c0_1] : memref<1x82x16xbf16, #tpu.memory_space<vmem>>, vector<1x72x16xbf16>
    %1 = vector.shape_cast %0 : vector<1x72x16xbf16> to vector<72x16xbf16>
    %c0_2 = arith.constant 0 : index
    %c0_3 = arith.constant 0 : index
    %c0_4 = arith.constant 0 : index
    %2 = vector.load %arg3[%c0_2, %c0_3, %c0_4] : memref<8x16x16xbf16, #tpu.memory_space<vmem>>, vector<1x16x16xbf16>
    %3 = vector.shape_cast %2 : vector<1x16x16xbf16> to vector<16x16xbf16>
    %cst = arith.constant dense<0.000000e+00> : vector<72x16xf32>
    %4 = tpu.matmul %1, %3, %cst {dimension_numbers = #tpu.dot_dimension_numbers<[1], [0], [0], [1], [0, 0, 1, 1], [], []>} : vector<72x16xbf16>, vector<16x16xbf16>, vector<72x16xf32> -> vector<72x16xf32>
    %c0_5 = arith.constant 0 : index
    %c1 = arith.constant 1 : index
    %c0_6 = arith.constant 0 : index
    %5 = vector.load %arg1[%c0_5, %c1, %c0_6] : memref<1x82x16xbf16, #tpu.memory_space<vmem>>, vector<1x72x16xbf16>
    %6 = vector.shape_cast %5 : vector<1x72x16xbf16> to vector<72x16xbf16>
    %c1_7 = arith.constant 1 : index
    %c0_8 = arith.constant 0 : index
    %c0_9 = arith.constant 0 : index
    %7 = vector.load %arg3[%c1_7, %c0_8, %c0_9] : memref<8x16x16xbf16, #tpu.memory_space<vmem>>, vector<1x16x16xbf16>
    %8 = vector.shape_cast %7 : vector<1x16x16xbf16> to vector<16x16xbf16>
    %cst_10 = arith.constant dense<0.000000e+00> : vector<72x16xf32>
    %9 = tpu.matmul %6, %8, %cst_10 {dimension_numbers = #tpu.dot_dimension_numbers<[1], [0], [0], [1], [0, 0, 1, 1], [], []>} : vector<72x16xbf16>, vector<16x16xbf16>, vector<72x16xf32> -> vector<72x16xf32>
    %10 = arith.addf %4, %9 : vector<72x16xf32>
    %c0_11 = arith.constant 0 : index
    %c0_12 = arith.constant 0 : index
    %c0_13 = arith.constant 0 : index
    %11 = vector.load %arg2[%c0_11, %c0_12, %c0_13] : memref<1x82x16xbf16, #tpu.memory_space<vmem>>, vector<1x72x16xbf16>
    %12 = vector.shape_cast %11 : vector<1x72x16xbf16> to vector<72x16xbf16>
    %c2 = arith.constant 2 : index
    %c0_14 = arith.constant 0 : index
    %c0_15 = arith.constant 0 : index
    %13 = vector.load %arg3[%c2, %c0_14, %c0_15] : memref<8x16x16xbf16, #tpu.memory_space<vmem>>, vector<1x16x16xbf16>
    %14 = vector.shape_cast %13 : vector<1x16x16xbf16> to vector<16x16xbf16>
    %cst_16 = arith.constant dense<0.000000e+00> : vector<72x16xf32>
    %15 = tpu.matmul %12, %14, %cst_16 {dimension_numbers = #tpu.dot_dimension_numbers<[1], [0], [0], [1], [0, 0, 1, 1], [], []>} : vector<72x16xbf16>, vector<16x16xbf16>, vector<72x16xf32> -> vector<72x16xf32>
    %16 = arith.addf %10, %15 : vector<72x16xf32>
    %c0_17 = arith.constant 0 : index
    %c1_18 = arith.constant 1 : index
    %c0_19 = arith.constant 0 : index
    %17 = vector.load %arg2[%c0_17, %c1_18, %c0_19] : memref<1x82x16xbf16, #tpu.memory_space<vmem>>, vector<1x72x16xbf16>
    %18 = vector.shape_cast %17 : vector<1x72x16xbf16> to vector<72x16xbf16>
    %c3 = arith.constant 3 : index
    %c0_20 = arith.constant 0 : index
    %c0_21 = arith.constant 0 : index
    %19 = vector.load %arg3[%c3, %c0_20, %c0_21] : memref<8x16x16xbf16, #tpu.memory_space<vmem>>, vector<1x16x16xbf16>
    %20 = vector.shape_cast %19 : vector<1x16x16xbf16> to vector<16x16xbf16>
    %cst_22 = arith.constant dense<0.000000e+00> : vector<72x16xf32>
    %21 = tpu.matmul %18, %20, %cst_22 {dimension_numbers = #tpu.dot_dimension_numbers<[1], [0], [0], [1], [0, 0, 1, 1], [], []>} : vector<72x16xbf16>, vector<16x16xbf16>, vector<72x16xf32> -> vector<72x16xf32>
    %22 = arith.addf %16, %21 : vector<72x16xf32>
    %c0_23 = arith.constant 0 : index
    %c9 = arith.constant 9 : index
    %c0_24 = arith.constant 0 : index
    %23 = vector.load %arg1[%c0_23, %c9, %c0_24] : memref<1x82x16xbf16, #tpu.memory_space<vmem>>, vector<1x72x16xbf16>
    %24 = vector.shape_cast %23 : vector<1x72x16xbf16> to vector<72x16xbf16>
    %c4 = arith.constant 4 : index
    %c0_25 = arith.constant 0 : index
    %c0_26 = arith.constant 0 : index
    %25 = vector.load %arg3[%c4, %c0_25, %c0_26] : memref<8x16x16xbf16, #tpu.memory_space<vmem>>, vector<1x16x16xbf16>
    %26 = vector.shape_cast %25 : vector<1x16x16xbf16> to vector<16x16xbf16>
    %cst_27 = arith.constant dense<0.000000e+00> : vector<72x16xf32>
    %27 = tpu.matmul %24, %26, %cst_27 {dimension_numbers = #tpu.dot_dimension_numbers<[1], [0], [0], [1], [0, 0, 1, 1], [], []>} : vector<72x16xbf16>, vector<16x16xbf16>, vector<72x16xf32> -> vector<72x16xf32>
    %28 = arith.addf %22, %27 : vector<72x16xf32>
    %c0_28 = arith.constant 0 : index
    %c10 = arith.constant 10 : index
    %c0_29 = arith.constant 0 : index
    %29 = vector.load %arg1[%c0_28, %c10, %c0_29] : memref<1x82x16xbf16, #tpu.memory_space<vmem>>, vector<1x72x16xbf16>
    %30 = vector.shape_cast %29 : vector<1x72x16xbf16> to vector<72x16xbf16>
    %c5 = arith.constant 5 : index
    %c0_30 = arith.constant 0 : index
    %c0_31 = arith.constant 0 : index
    %31 = vector.load %arg3[%c5, %c0_30, %c0_31] : memref<8x16x16xbf16, #tpu.memory_space<vmem>>, vector<1x16x16xbf16>
    %32 = vector.shape_cast %31 : vector<1x16x16xbf16> to vector<16x16xbf16>
    %cst_32 = arith.constant dense<0.000000e+00> : vector<72x16xf32>
    %33 = tpu.matmul %30, %32, %cst_32 {dimension_numbers = #tpu.dot_dimension_numbers<[1], [0], [0], [1], [0, 0, 1, 1], [], []>} : vector<72x16xbf16>, vector<16x16xbf16>, vector<72x16xf32> -> vector<72x16xf32>
    %34 = arith.addf %28, %33 : vector<72x16xf32>
    %c0_33 = arith.constant 0 : index
    %c9_34 = arith.constant 9 : index
    %c0_35 = arith.constant 0 : index
    %35 = vector.load %arg2[%c0_33, %c9_34, %c0_35] : memref<1x82x16xbf16, #tpu.memory_space<vmem>>, vector<1x72x16xbf16>
    %36 = vector.shape_cast %35 : vector<1x72x16xbf16> to vector<72x16xbf16>
    %c6 = arith.constant 6 : index
    %c0_36 = arith.constant 0 : index
    %c0_37 = arith.constant 0 : index
    %37 = vector.load %arg3[%c6, %c0_36, %c0_37] : memref<8x16x16xbf16, #tpu.memory_space<vmem>>, vector<1x16x16xbf16>
    %38 = vector.shape_cast %37 : vector<1x16x16xbf16> to vector<16x16xbf16>
    %cst_38 = arith.constant dense<0.000000e+00> : vector<72x16xf32>
    %39 = tpu.matmul %36, %38, %cst_38 {dimension_numbers = #tpu.dot_dimension_numbers<[1], [0], [0], [1], [0, 0, 1, 1], [], []>} : vector<72x16xbf16>, vector<16x16xbf16>, vector<72x16xf32> -> vector<72x16xf32>
    %40 = arith.addf %34, %39 : vector<72x16xf32>
    %c0_39 = arith.constant 0 : index
    %c10_40 = arith.constant 10 : index
    %c0_41 = arith.constant 0 : index
    %41 = vector.load %arg2[%c0_39, %c10_40, %c0_41] : memref<1x82x16xbf16, #tpu.memory_space<vmem>>, vector<1x72x16xbf16>
    %42 = vector.shape_cast %41 : vector<1x72x16xbf16> to vector<72x16xbf16>
    %c7 = arith.constant 7 : index
    %c0_42 = arith.constant 0 : index
    %c0_43 = arith.constant 0 : index
    %43 = vector.load %arg3[%c7, %c0_42, %c0_43] : memref<8x16x16xbf16, #tpu.memory_space<vmem>>, vector<1x16x16xbf16>
    %44 = vector.shape_cast %43 : vector<1x16x16xbf16> to vector<16x16xbf16>
    %cst_44 = arith.constant dense<0.000000e+00> : vector<72x16xf32>
    %45 = tpu.matmul %42, %44, %cst_44 {dimension_numbers = #tpu.dot_dimension_numbers<[1], [0], [0], [1], [0, 0, 1, 1], [], []>} : vector<72x16xbf16>, vector<16x16xbf16>, vector<72x16xf32> -> vector<72x16xf32>
    %46 = arith.addf %40, %45 : vector<72x16xf32>
    %c0_45 = arith.constant 0 : index
    %c0_46 = arith.constant 0 : index
    %47 = vector.load %arg4[%c0_45, %c0_46] : memref<1x16xf32, #tpu.memory_space<vmem>>, vector<1x16xf32>
    %48 = vector.broadcast %47 : vector<1x16xf32> to vector<72x16xf32>
    %49 = arith.addf %46, %48 : vector<72x16xf32>
    %cst_47 = arith.constant 0.000000e+00 : f32
    %50 = vector.broadcast %cst_47 : f32 to vector<72x16xf32>
    %51 = arith.cmpf oge, %49, %50 : vector<72x16xf32>
    %cst_48 = arith.constant 5.000000e-02 : f32
    %52 = vector.broadcast %cst_48 : f32 to vector<72x16xf32>
    %53 = arith.mulf %52, %49 : vector<72x16xf32>
    %54 = arith.select %51, %49, %53 : vector<72x16xi1>, vector<72x16xf32>
    %c0_49 = arith.constant 0 : index
    %c0_50 = arith.constant 0 : index
    %55 = vector.load %arg5[%c0_49, %c0_50] : memref<72x1xf32, #tpu.memory_space<vmem>>, vector<72x1xf32>
    %56 = vector.broadcast %55 : vector<72x1xf32> to vector<72x16xf32>
    %57 = arith.mulf %54, %56 : vector<72x16xf32>
    %58 = arith.truncf %57 : vector<72x16xf32> to vector<72x16xbf16>
    %c0_51 = arith.constant 0 : index
    %c0_52 = arith.constant 0 : index
    %c0_53 = arith.constant 0 : index
    %59 = vector.load %arg6[%c0_51, %c0_52, %c0_53] : memref<1x72x16xbf16, #tpu.memory_space<vmem>>, vector<1x72x16xbf16>
    %60 = vector.shape_cast %59 : vector<1x72x16xbf16> to vector<72x16xbf16>
    %61 = vector.shape_cast %58 : vector<72x16xbf16> to vector<1x72x16xbf16>
    tpu.vector_store %arg6[%c0_51, %c0_52, %c0_53], %61 {strides = array<i32>} : memref<1x72x16xbf16, #tpu.memory_space<vmem>>, vector<1x72x16xbf16>,
    return
  }
  func.func @transform_0(%arg0: i32) -> (i32, i32, i32) {
    %c0_i32 = arith.constant 0 : i32
    %c0_i32_0 = arith.constant 0 : i32
    %c0_i32_1 = arith.constant 0 : i32
    return %arg0, %c0_i32, %c0_i32_0 : i32, i32, i32
  }
  func.func @transform_1(%arg0: i32) -> (i32, i32, i32) {
    %c0_i32 = arith.constant 0 : i32
    %c0_i32_0 = arith.constant 0 : i32
    %c0_i32_1 = arith.constant 0 : i32
    return %arg0, %c0_i32, %c0_i32_0 : i32, i32, i32
  }
  func.func @transform_2(%arg0: i32) -> (i32, i32, i32) {
    %c0_i32 = arith.constant 0 : i32
    %c0_i32_0 = arith.constant 0 : i32
    %c0_i32_1 = arith.constant 0 : i32
    %c0_i32_2 = arith.constant 0 : i32
    return %c0_i32, %c0_i32_0, %c0_i32_1 : i32, i32, i32
  }
  func.func @transform_3(%arg0: i32) -> (i32, i32) {
    %c0_i32 = arith.constant 0 : i32
    %c0_i32_0 = arith.constant 0 : i32
    %c0_i32_1 = arith.constant 0 : i32
    return %c0_i32, %c0_i32_0 : i32, i32
  }
  func.func @transform_4(%arg0: i32) -> (i32, i32) {
    %c0_i32 = arith.constant 0 : i32
    %c0_i32_0 = arith.constant 0 : i32
    %c0_i32_1 = arith.constant 0 : i32
    return %c0_i32, %c0_i32_0 : i32, i32
  }
  func.func @transform_5(%arg0: i32) -> (i32, i32, i32) {
    %c0_i32 = arith.constant 0 : i32
    %c0_i32_0 = arith.constant 0 : i32
    %c0_i32_1 = arith.constant 0 : i32
    return %arg0, %c0_i32, %c0_i32_0 : i32, i32, i32
  }
}

module attributes {stable_mosaic.version = 11 : i64} {
  func.func @kernel(%arg0: i32, %arg1: memref<1x26x32xbf16, #tpu.memory_space<vmem>>, %arg2: memref<1x26x32xbf16, #tpu.memory_space<vmem>>, %arg3: memref<8x32x32xbf16, #tpu.memory_space<vmem>>, %arg4: memref<1x32xf32, #tpu.memory_space<vmem>>, %arg5: memref<20x32xf32, #tpu.memory_space<vmem>>, %arg6: memref<1x1xf32, #tpu.memory_space<vmem>>, %arg7: memref<1x1x1xf32, #tpu.memory_space<vmem>>) attributes {dimension_semantics = [#tpu.dimension_semantics<parallel>], iteration_bounds = array<i64: 2>, scalar_prefetch = 0 : i64, scratch_operands = 0 : i64, tpu.core_type = #tpu.core_type<tc>, window_params = [{transform_indices = @transform_0, window_bounds = array<i64: 1, 26, 32>}, {transform_indices = @transform_1, window_bounds = array<i64: 1, 26, 32>}, {pipeline_mode = #tpu.pipeline_mode<synchronous>, transform_indices = @transform_2, window_bounds = array<i64: 8, 32, 32>}, {pipeline_mode = #tpu.pipeline_mode<synchronous>, transform_indices = @transform_3, window_bounds = array<i64: 1, 32>}, {pipeline_mode = #tpu.pipeline_mode<synchronous>, transform_indices = @transform_4, window_bounds = array<i64: 20, 32>}, {pipeline_mode = #tpu.pipeline_mode<synchronous>, transform_indices = @transform_5, window_bounds = array<i64: 1, 1>}, {transform_indices = @transform_6, window_bounds = array<i64: 1, 1, 1>}]} {
    %c0 = arith.constant 0 : index
    %c0_0 = arith.constant 0 : index
    %c0_1 = arith.constant 0 : index
    %0 = vector.load %arg1[%c0, %c0_0, %c0_1] : memref<1x26x32xbf16, #tpu.memory_space<vmem>>, vector<1x20x32xbf16>
    %1 = vector.shape_cast %0 : vector<1x20x32xbf16> to vector<20x32xbf16>
    %c0_2 = arith.constant 0 : index
    %c0_3 = arith.constant 0 : index
    %c0_4 = arith.constant 0 : index
    %2 = vector.load %arg3[%c0_2, %c0_3, %c0_4] : memref<8x32x32xbf16, #tpu.memory_space<vmem>>, vector<1x32x32xbf16>
    %3 = vector.shape_cast %2 : vector<1x32x32xbf16> to vector<32x32xbf16>
    %cst = arith.constant dense<0.000000e+00> : vector<20x32xf32>
    %4 = tpu.matmul %1, %3, %cst {dimension_numbers = #tpu.dot_dimension_numbers<[1], [0], [0], [1], [0, 0, 1, 1], [], []>} : vector<20x32xbf16>, vector<32x32xbf16>, vector<20x32xf32> -> vector<20x32xf32>
    %c0_5 = arith.constant 0 : index
    %c1 = arith.constant 1 : index
    %c0_6 = arith.constant 0 : index
    %5 = vector.load %arg1[%c0_5, %c1, %c0_6] : memref<1x26x32xbf16, #tpu.memory_space<vmem>>, vector<1x20x32xbf16>
    %6 = vector.shape_cast %5 : vector<1x20x32xbf16> to vector<20x32xbf16>
    %c1_7 = arith.constant 1 : index
    %c0_8 = arith.constant 0 : index
    %c0_9 = arith.constant 0 : index
    %7 = vector.load %arg3[%c1_7, %c0_8, %c0_9] : memref<8x32x32xbf16, #tpu.memory_space<vmem>>, vector<1x32x32xbf16>
    %8 = vector.shape_cast %7 : vector<1x32x32xbf16> to vector<32x32xbf16>
    %cst_10 = arith.constant dense<0.000000e+00> : vector<20x32xf32>
    %9 = tpu.matmul %6, %8, %cst_10 {dimension_numbers = #tpu.dot_dimension_numbers<[1], [0], [0], [1], [0, 0, 1, 1], [], []>} : vector<20x32xbf16>, vector<32x32xbf16>, vector<20x32xf32> -> vector<20x32xf32>
    %10 = arith.addf %4, %9 : vector<20x32xf32>
    %c0_11 = arith.constant 0 : index
    %c0_12 = arith.constant 0 : index
    %c0_13 = arith.constant 0 : index
    %11 = vector.load %arg2[%c0_11, %c0_12, %c0_13] : memref<1x26x32xbf16, #tpu.memory_space<vmem>>, vector<1x20x32xbf16>
    %12 = vector.shape_cast %11 : vector<1x20x32xbf16> to vector<20x32xbf16>
    %c2 = arith.constant 2 : index
    %c0_14 = arith.constant 0 : index
    %c0_15 = arith.constant 0 : index
    %13 = vector.load %arg3[%c2, %c0_14, %c0_15] : memref<8x32x32xbf16, #tpu.memory_space<vmem>>, vector<1x32x32xbf16>
    %14 = vector.shape_cast %13 : vector<1x32x32xbf16> to vector<32x32xbf16>
    %cst_16 = arith.constant dense<0.000000e+00> : vector<20x32xf32>
    %15 = tpu.matmul %12, %14, %cst_16 {dimension_numbers = #tpu.dot_dimension_numbers<[1], [0], [0], [1], [0, 0, 1, 1], [], []>} : vector<20x32xbf16>, vector<32x32xbf16>, vector<20x32xf32> -> vector<20x32xf32>
    %16 = arith.addf %10, %15 : vector<20x32xf32>
    %c0_17 = arith.constant 0 : index
    %c1_18 = arith.constant 1 : index
    %c0_19 = arith.constant 0 : index
    %17 = vector.load %arg2[%c0_17, %c1_18, %c0_19] : memref<1x26x32xbf16, #tpu.memory_space<vmem>>, vector<1x20x32xbf16>
    %18 = vector.shape_cast %17 : vector<1x20x32xbf16> to vector<20x32xbf16>
    %c3 = arith.constant 3 : index
    %c0_20 = arith.constant 0 : index
    %c0_21 = arith.constant 0 : index
    %19 = vector.load %arg3[%c3, %c0_20, %c0_21] : memref<8x32x32xbf16, #tpu.memory_space<vmem>>, vector<1x32x32xbf16>
    %20 = vector.shape_cast %19 : vector<1x32x32xbf16> to vector<32x32xbf16>
    %cst_22 = arith.constant dense<0.000000e+00> : vector<20x32xf32>
    %21 = tpu.matmul %18, %20, %cst_22 {dimension_numbers = #tpu.dot_dimension_numbers<[1], [0], [0], [1], [0, 0, 1, 1], [], []>} : vector<20x32xbf16>, vector<32x32xbf16>, vector<20x32xf32> -> vector<20x32xf32>
    %22 = arith.addf %16, %21 : vector<20x32xf32>
    %c0_23 = arith.constant 0 : index
    %c5 = arith.constant 5 : index
    %c0_24 = arith.constant 0 : index
    %23 = vector.load %arg1[%c0_23, %c5, %c0_24] : memref<1x26x32xbf16, #tpu.memory_space<vmem>>, vector<1x20x32xbf16>
    %24 = vector.shape_cast %23 : vector<1x20x32xbf16> to vector<20x32xbf16>
    %c4 = arith.constant 4 : index
    %c0_25 = arith.constant 0 : index
    %c0_26 = arith.constant 0 : index
    %25 = vector.load %arg3[%c4, %c0_25, %c0_26] : memref<8x32x32xbf16, #tpu.memory_space<vmem>>, vector<1x32x32xbf16>
    %26 = vector.shape_cast %25 : vector<1x32x32xbf16> to vector<32x32xbf16>
    %cst_27 = arith.constant dense<0.000000e+00> : vector<20x32xf32>
    %27 = tpu.matmul %24, %26, %cst_27 {dimension_numbers = #tpu.dot_dimension_numbers<[1], [0], [0], [1], [0, 0, 1, 1], [], []>} : vector<20x32xbf16>, vector<32x32xbf16>, vector<20x32xf32> -> vector<20x32xf32>
    %28 = arith.addf %22, %27 : vector<20x32xf32>
    %c0_28 = arith.constant 0 : index
    %c6 = arith.constant 6 : index
    %c0_29 = arith.constant 0 : index
    %29 = vector.load %arg1[%c0_28, %c6, %c0_29] : memref<1x26x32xbf16, #tpu.memory_space<vmem>>, vector<1x20x32xbf16>
    %30 = vector.shape_cast %29 : vector<1x20x32xbf16> to vector<20x32xbf16>
    %c5_30 = arith.constant 5 : index
    %c0_31 = arith.constant 0 : index
    %c0_32 = arith.constant 0 : index
    %31 = vector.load %arg3[%c5_30, %c0_31, %c0_32] : memref<8x32x32xbf16, #tpu.memory_space<vmem>>, vector<1x32x32xbf16>
    %32 = vector.shape_cast %31 : vector<1x32x32xbf16> to vector<32x32xbf16>
    %cst_33 = arith.constant dense<0.000000e+00> : vector<20x32xf32>
    %33 = tpu.matmul %30, %32, %cst_33 {dimension_numbers = #tpu.dot_dimension_numbers<[1], [0], [0], [1], [0, 0, 1, 1], [], []>} : vector<20x32xbf16>, vector<32x32xbf16>, vector<20x32xf32> -> vector<20x32xf32>
    %34 = arith.addf %28, %33 : vector<20x32xf32>
    %c0_34 = arith.constant 0 : index
    %c5_35 = arith.constant 5 : index
    %c0_36 = arith.constant 0 : index
    %35 = vector.load %arg2[%c0_34, %c5_35, %c0_36] : memref<1x26x32xbf16, #tpu.memory_space<vmem>>, vector<1x20x32xbf16>
    %36 = vector.shape_cast %35 : vector<1x20x32xbf16> to vector<20x32xbf16>
    %c6_37 = arith.constant 6 : index
    %c0_38 = arith.constant 0 : index
    %c0_39 = arith.constant 0 : index
    %37 = vector.load %arg3[%c6_37, %c0_38, %c0_39] : memref<8x32x32xbf16, #tpu.memory_space<vmem>>, vector<1x32x32xbf16>
    %38 = vector.shape_cast %37 : vector<1x32x32xbf16> to vector<32x32xbf16>
    %cst_40 = arith.constant dense<0.000000e+00> : vector<20x32xf32>
    %39 = tpu.matmul %36, %38, %cst_40 {dimension_numbers = #tpu.dot_dimension_numbers<[1], [0], [0], [1], [0, 0, 1, 1], [], []>} : vector<20x32xbf16>, vector<32x32xbf16>, vector<20x32xf32> -> vector<20x32xf32>
    %40 = arith.addf %34, %39 : vector<20x32xf32>
    %c0_41 = arith.constant 0 : index
    %c6_42 = arith.constant 6 : index
    %c0_43 = arith.constant 0 : index
    %41 = vector.load %arg2[%c0_41, %c6_42, %c0_43] : memref<1x26x32xbf16, #tpu.memory_space<vmem>>, vector<1x20x32xbf16>
    %42 = vector.shape_cast %41 : vector<1x20x32xbf16> to vector<20x32xbf16>
    %c7 = arith.constant 7 : index
    %c0_44 = arith.constant 0 : index
    %c0_45 = arith.constant 0 : index
    %43 = vector.load %arg3[%c7, %c0_44, %c0_45] : memref<8x32x32xbf16, #tpu.memory_space<vmem>>, vector<1x32x32xbf16>
    %44 = vector.shape_cast %43 : vector<1x32x32xbf16> to vector<32x32xbf16>
    %cst_46 = arith.constant dense<0.000000e+00> : vector<20x32xf32>
    %45 = tpu.matmul %42, %44, %cst_46 {dimension_numbers = #tpu.dot_dimension_numbers<[1], [0], [0], [1], [0, 0, 1, 1], [], []>} : vector<20x32xbf16>, vector<32x32xbf16>, vector<20x32xf32> -> vector<20x32xf32>
    %46 = arith.addf %40, %45 : vector<20x32xf32>
    %c0_47 = arith.constant 0 : index
    %c0_48 = arith.constant 0 : index
    %47 = vector.load %arg4[%c0_47, %c0_48] : memref<1x32xf32, #tpu.memory_space<vmem>>, vector<1x32xf32>
    %48 = vector.broadcast %47 : vector<1x32xf32> to vector<20x32xf32>
    %49 = arith.addf %46, %48 : vector<20x32xf32>
    %cst_49 = arith.constant 0.000000e+00 : f32
    %50 = vector.broadcast %cst_49 : f32 to vector<20x32xf32>
    %51 = arith.cmpf oge, %49, %50 : vector<20x32xf32>
    %cst_50 = arith.constant 5.000000e-02 : f32
    %52 = vector.broadcast %cst_50 : f32 to vector<20x32xf32>
    %53 = arith.mulf %52, %49 : vector<20x32xf32>
    %54 = arith.select %51, %49, %53 : vector<20x32xi1>, vector<20x32xf32>
    %c0_51 = arith.constant 0 : index
    %c0_52 = arith.constant 0 : index
    %55 = vector.load %arg5[%c0_51, %c0_52] : memref<20x32xf32, #tpu.memory_space<vmem>>, vector<20x32xf32>
    %56 = arith.mulf %54, %55 : vector<20x32xf32>
    %cst_53 = arith.constant dense<0.000000e+00> : vector<20xf32>
    %57 = vector.multi_reduction <add>, %56, %cst_53 [1] : vector<20x32xf32> to vector<20xf32>
    %58 = vector.shape_cast %57 : vector<20xf32> to vector<20x1xf32>
    %cst_54 = arith.constant dense<0.000000e+00> : vector<1xf32>
    %59 = vector.multi_reduction <add>, %58, %cst_54 [0] : vector<20x1xf32> to vector<1xf32>
    %60 = vector.shape_cast %59 : vector<1xf32> to vector<1x1xf32>
    %c0_55 = arith.constant 0 : index
    %c0_56 = arith.constant 0 : index
    %61 = vector.load %arg6[%c0_55, %c0_56] : memref<1x1xf32, #tpu.memory_space<vmem>>, vector<1x1xf32>
    %62 = arith.addf %60, %61 : vector<1x1xf32>
    %c0_57 = arith.constant 0 : index
    %c0_58 = arith.constant 0 : index
    %c0_59 = arith.constant 0 : index
    %63 = vector.load %arg7[%c0_57, %c0_58, %c0_59] : memref<1x1x1xf32, #tpu.memory_space<vmem>>, vector<1x1x1xf32>
    %64 = vector.shape_cast %63 : vector<1x1x1xf32> to vector<1x1xf32>
    %65 = vector.shape_cast %62 : vector<1x1xf32> to vector<1x1x1xf32>
    tpu.vector_store %arg7[%c0_57, %c0_58, %c0_59], %65 {strides = array<i32>} : memref<1x1x1xf32, #tpu.memory_space<vmem>>, vector<1x1x1xf32>,
    return
  }
  func.func @transform_0(%arg0: i32) -> (i32, i32, i32) {
    %c0_i32 = arith.constant 0 : i32
    %c0_i32_0 = arith.constant 0 : i32
    %c0_i32_1 = arith.constant 0 : i32
    return %arg0, %c0_i32, %c0_i32_0 : i32, i32, i32
  }
  func.func @transform_1(%arg0: i32) -> (i32, i32, i32) {
    %c0_i32 = arith.constant 0 : i32
    %c0_i32_0 = arith.constant 0 : i32
    %c0_i32_1 = arith.constant 0 : i32
    return %arg0, %c0_i32, %c0_i32_0 : i32, i32, i32
  }
  func.func @transform_2(%arg0: i32) -> (i32, i32, i32) {
    %c0_i32 = arith.constant 0 : i32
    %c0_i32_0 = arith.constant 0 : i32
    %c0_i32_1 = arith.constant 0 : i32
    %c0_i32_2 = arith.constant 0 : i32
    return %c0_i32, %c0_i32_0, %c0_i32_1 : i32, i32, i32
  }
  func.func @transform_3(%arg0: i32) -> (i32, i32) {
    %c0_i32 = arith.constant 0 : i32
    %c0_i32_0 = arith.constant 0 : i32
    %c0_i32_1 = arith.constant 0 : i32
    return %c0_i32, %c0_i32_0 : i32, i32
  }
  func.func @transform_4(%arg0: i32) -> (i32, i32) {
    %c0_i32 = arith.constant 0 : i32
    %c0_i32_0 = arith.constant 0 : i32
    %c0_i32_1 = arith.constant 0 : i32
    return %c0_i32, %c0_i32_0 : i32, i32
  }
  func.func @transform_5(%arg0: i32) -> (i32, i32) {
    %c0_i32 = arith.constant 0 : i32
    %c0_i32_0 = arith.constant 0 : i32
    %c0_i32_1 = arith.constant 0 : i32
    return %c0_i32, %c0_i32_0 : i32, i32
  }
  func.func @transform_6(%arg0: i32) -> (i32, i32, i32) {
    %c0_i32 = arith.constant 0 : i32
    %c0_i32_0 = arith.constant 0 : i32
    %c0_i32_1 = arith.constant 0 : i32
    return %arg0, %c0_i32, %c0_i32_0 : i32, i32, i32
  }
}

</mosaic_0001>

<llo_original>
// kernel: d2_forward.4
$region0: #{d2_forward.4}
  #allocation0 [shape = 'u32[]', space=smem, size = 0x4, offset = 0x4, fixed_abs, tag = 'smem constant byte address 0x4 - core index']
  #allocation1 [shape = 'u32[144,128]{1,0:T(1,128)}', space=vmem, size = 0x12000, scoped, tag = 'internal scratch']
  %s0 = inlined_call_operand.vmem [shape: bf16[2,82,16], index: 0, kind: input, shape index: {}]
  %s1 = inlined_call_operand.vmem [shape: bf16[2,82,16], index: 1, kind: input, shape index: {}]
  %s2 = inlined_call_operand.vmem [shape: bf16[8,16,16], index: 2, kind: input, shape index: {}]
  %s3 = inlined_call_operand.vmem [shape: f32[1,16], index: 3, kind: input, shape index: {}]
  %s4 = inlined_call_operand.vmem [shape: f32[72,1], index: 4, kind: input, shape index: {}]
  %s5 = inlined_call_operand.vmem [shape: bf16[2,72,16], index: 5, kind: output, shape index: {}]
  %s6 = sld [smem:[#allocation0]]
  $region53: #{d2_forward.4} parent=0
    _
  %s8 = ssub.s32 1, %s6
  %s9 = scalar_select 0, %s8, %s6
  loop: start=0, step=1, limit=4
  $region2: #{d2_forward.4} parent=0 // loop_pre_header
    _
  $region3: #{d2_forward.4} parent=0 // loop_header
    %s11 = sphi 0, %s15
    %p12 = scmp.ge.s32.totalorder %s11, 4
    %s21 = sphi 0, %s23
    %s24 = sphi 0, %s21
    %s25 = sphi 0, %s24
    %s41 = sphi 0, %s25
    %s47 = sphi 0, %s49
    %s50 = sphi 0, %s47
    %s51 = sphi 0, %s50
    %s67 = sphi 0, %s51
    %s71 = sphi 0, %s71
    %s73 = sphi 0, %s71
    %s74 = sphi 0, %s73
    %s88 = sphi 0, %s74
    %s92 = sphi 0, %s92
    %s94 = sphi 0, %s92
    %s95 = sphi 0, %s94
    %s109 = sphi 0, %s95
    %s113 = sphi 0, %s113
    %s115 = sphi 0, %s113
    %s116 = sphi 0, %s115
    %s130 = sphi 0, %s116
    %s136 = sphi 0, %s138
    %s139 = sphi 0, %s136
    %s140 = sphi 0, %s139
    %s156 = sphi 0, %s140
  $region4: #{d2_forward.4} parent=0 // loop_header_branch
    %14 = sbr.rel (%p12) target = $region8
  $region5: #{d2_forward.4} parent=0 // loop_body
    %s16 = ssub.s32 %s11, 1
    %s17 = ssub.s32 %s11, 2
    %s18 = sadd.s32 %s11, 1
    %s19 = ssub.s32 %s11, %s18
    %p20 = scmp.eq.s32.totalorder %s19, 0
    %s22 = sadd.s32 %s21, 1
    %s23 = scalar_select %p20, %s21, %s22
    %p26 = pneg %p20
    %p27 = scmp.eq.s32.totalorder %s11, 1
    %p28 = por %p26, %p27
    %p29 = scmp.ne.s32.totalorder %s21, %s24
    %p30 = scmp.eq.s32.totalorder %s11, 0
    %p31 = por %p29, %p30
    %p32 = scmp.ne.s32.totalorder %s21, %s24
    %p33 = scmp.eq.s32.totalorder %s16, 1
    %p34 = por %p32, %p33
    %p35 = scmp.ne.s32.totalorder %s24, %s25
    %p36 = scmp.eq.s32.totalorder %s16, 0
    %p37 = por %p35, %p36
    %p38 = scmp.ne.s32.totalorder %s24, %s25
    %p39 = scmp.eq.s32.totalorder %s17, 1
    %p40 = por %p38, %p39
    %p42 = scmp.ne.s32.totalorder %s25, %s41
    %p43 = scmp.eq.s32.totalorder %s17, 0
    %p44 = por %p42, %p43
    %s45 = ssub.s32 %s11, %s18
    %p46 = scmp.eq.s32.totalorder %s45, 0
    %s48 = sadd.s32 %s47, 1
    %s49 = scalar_select %p46, %s47, %s48
    %p52 = pneg %p46
    %p53 = scmp.eq.s32.totalorder %s11, 1
    %p54 = por %p52, %p53
    %p55 = scmp.ne.s32.totalorder %s47, %s50
    %p56 = scmp.eq.s32.totalorder %s11, 0
    %p57 = por %p55, %p56
    %p58 = scmp.ne.s32.totalorder %s47, %s50
    %p59 = scmp.eq.s32.totalorder %s16, 1
    %p60 = por %p58, %p59
    %p61 = scmp.ne.s32.totalorder %s50, %s51
    %p62 = scmp.eq.s32.totalorder %s16, 0
    %p63 = por %p61, %p62
    %p64 = scmp.ne.s32.totalorder %s50, %s51
    %p65 = scmp.eq.s32.totalorder %s17, 1
    %p66 = por %p64, %p65
    %p68 = scmp.ne.s32.totalorder %s51, %s67
    %p69 = scmp.eq.s32.totalorder %s17, 0
    %p70 = por %p68, %p69
    %s72 = sadd.s32 %s71, 1
    %p75 = scmp.eq.s32.totalorder %s11, 1
    %p76 = scmp.ne.s32.totalorder %s71, %s73
    %p77 = scmp.eq.s32.totalorder %s11, 0
    %p78 = por %p76, %p77
    %p79 = scmp.ne.s32.totalorder %s71, %s73
    %p80 = scmp.eq.s32.totalorder %s16, 1
    %p81 = por %p79, %p80
    %p82 = scmp.ne.s32.totalorder %s73, %s74
    %p83 = scmp.eq.s32.totalorder %s16, 0
    %p84 = por %p82, %p83
    %p85 = scmp.ne.s32.totalorder %s73, %s74
    %p86 = scmp.eq.s32.totalorder %s17, 1
    %p87 = por %p85, %p86
    %p89 = scmp.ne.s32.totalorder %s74, %s88
    %p90 = scmp.eq.s32.totalorder %s17, 0
    %p91 = por %p89, %p90
    %s93 = sadd.s32 %s92, 1
    %p96 = scmp.eq.s32.totalorder %s11, 1
    %p97 = scmp.ne.s32.totalorder %s92, %s94
    %p98 = scmp.eq.s32.totalorder %s11, 0
    %p99 = por %p97, %p98
    %p100 = scmp.ne.s32.totalorder %s92, %s94
    %p101 = scmp.eq.s32.totalorder %s16, 1
    %p102 = por %p100, %p101
    %p103 = scmp.ne.s32.totalorder %s94, %s95
    %p104 = scmp.eq.s32.totalorder %s16, 0
    %p105 = por %p103, %p104
    %p106 = scmp.ne.s32.totalorder %s94, %s95
    %p107 = scmp.eq.s32.totalorder %s17, 1
    %p108 = por %p106, %p107
    %p110 = scmp.ne.s32.totalorder %s95, %s109
    %p111 = scmp.eq.s32.totalorder %s17, 0
    %p112 = por %p110, %p111
    %s114 = sadd.s32 %s113, 1
    %p117 = scmp.eq.s32.totalorder %s11, 1
    %p118 = scmp.ne.s32.totalorder %s113, %s115
    %p119 = scmp.eq.s32.totalorder %s11, 0
    %p120 = por %p118, %p119
    %p121 = scmp.ne.s32.totalorder %s113, %s115
    %p122 = scmp.eq.s32.totalorder %s16, 1
    %p123 = por %p121, %p122
    %p124 = scmp.ne.s32.totalorder %s115, %s116
    %p125 = scmp.eq.s32.totalorder %s16, 0
    %p126 = por %p124, %p125
    %p127 = scmp.ne.s32.totalorder %s115, %s116
    %p128 = scmp.eq.s32.totalorder %s17, 1
    %p129 = por %p127, %p128
    %p131 = scmp.ne.s32.totalorder %s116, %s130
    %p132 = scmp.eq.s32.totalorder %s17, 0
    %p133 = por %p131, %p132
    %s134 = ssub.s32 %s11, %s18
    %p135 = scmp.eq.s32.totalorder %s134, 0
    %s137 = sadd.s32 %s136, 1
    %s138 = scalar_select %p135, %s136, %s137
    %p141 = pneg %p135
    %p142 = scmp.eq.s32.totalorder %s11, 1
    %p143 = por %p141, %p142
    %p144 = scmp.ne.s32.totalorder %s136, %s139
    %p145 = scmp.eq.s32.totalorder %s11, 0
    %p146 = por %p144, %p145
    %p147 = scmp.ne.s32.totalorder %s136, %s139
    %p148 = scmp.eq.s32.totalorder %s16, 1
    %p149 = por %p147, %p148
    %p150 = scmp.ne.s32.totalorder %s139, %s140
    %p151 = scmp.eq.s32.totalorder %s16, 0
    %p152 = por %p150, %p151
    %p153 = scmp.ne.s32.totalorder %s139, %s140
    %p154 = scmp.eq.s32.totalorder %s17, 1
    %p155 = por %p153, %p154
    %p157 = scmp.ne.s32.totalorder %s140, %s156
    %p158 = scmp.eq.s32.totalorder %s17, 0
    %p159 = por %p157, %p158
    %p160 = scmp.le.s32.totalorder 1, %s11
    %p161 = scmp.lt.s32.totalorder %s11, 3
    %p162 = pnand %p160, %p161
    %p163 = pneg %p162
    // Predicated region
    $region9: #{d2_forward.4} parent=5 // pred_check
      _
    $region10: #{d2_forward.4} parent=5 // pred_check_branch
      %165 = sbr.rel (%p162) target = $region12
    $region11: #{d2_forward.4} parent=5 // pred_region
      %s166 = ssub.s32 %s11, 1
      // Predicated region
      $region13: #{d2_forward.4} parent=11 // pred_check
        %p167 = pneg %p84
      $region14: #{d2_forward.4} parent=11 // pred_check_branch
        %169 = sbr.rel (%p167) target = $region16
      $region15: #{d2_forward.4} parent=11 // pred_region
        _
      $region16: #{d2_forward.4} parent=11 // pred_fallthru
        _
      // Predicated region
      $region17: #{d2_forward.4} parent=11 // pred_check
        %p170 = pneg %p105
      $region18: #{d2_forward.4} parent=11 // pred_check_branch
        %172 = sbr.rel (%p170) target = $region20
      $region19: #{d2_forward.4} parent=11 // pred_region
        _
      $region20: #{d2_forward.4} parent=11 // pred_fallthru
        _
      // Predicated region
      $region21: #{d2_forward.4} parent=11 // pred_check
        %p173 = pneg %p126
      $region22: #{d2_forward.4} parent=11 // pred_check_branch
        %175 = sbr.rel (%p173) target = $region24
      $region23: #{d2_forward.4} parent=11 // pred_region
        _
      $region24: #{d2_forward.4} parent=11 // pred_fallthru
        _
    $region12: #{d2_forward.4} parent=5 // pred_fallthru
      _
    %p176 = scmp.lt.s32.totalorder %s11, 2
    // Predicated region
    $region25: #{d2_forward.4} parent=5 // pred_check
      %p177 = pneg %p176
    $region26: #{d2_forward.4} parent=5 // pred_check_branch
      %179 = sbr.rel (%p177) target = $region28
    $region27: #{d2_forward.4} parent=5 // pred_region
      // Predicated region
      $region29: #{d2_forward.4} parent=27 // pred_check
        %p180 = pneg %p31
      $region30: #{d2_forward.4} parent=27 // pred_check_branch
        %182 = sbr.rel (%p180) target = $region32
      $region31: #{d2_forward.4} parent=27 // pred_region
        %p183 = scmp.lt.s32.totalorder %s11, 1
        %s184 = scalar_select %p183, %s11, 1
        %s185 = smul.addr %s184, 11
        %s186 = smul.addr %s185, 4
        %s187 = scalar_lea.vmem %s0, %s186
      $region32: #{d2_forward.4} parent=27 // pred_fallthru
        _
      // Predicated region
      $region33: #{d2_forward.4} parent=27 // pred_check
        %p188 = pneg %p57
      $region34: #{d2_forward.4} parent=27 // pred_check_branch
        %190 = sbr.rel (%p188) target = $region36
      $region35: #{d2_forward.4} parent=27 // pred_region
        %p191 = scmp.lt.s32.totalorder %s11, 1
        %s192 = scalar_select %p191, %s11, 1
        %s193 = smul.addr %s192, 11
        %s194 = smul.addr %s193, 4
        %s195 = scalar_lea.vmem %s1, %s194
      $region36: #{d2_forward.4} parent=27 // pred_fallthru
        _
    $region28: #{d2_forward.4} parent=5 // pred_fallthru
      _
    %p196 = scmp.le.s32.totalorder 1, %s11
    %p197 = scmp.lt.s32.totalorder %s11, 3
    %p198 = pnand %p196, %p197
    %p199 = pneg %p198
    // Predicated region
    $region37: #{d2_forward.4} parent=5 // pred_check
      _
    $region38: #{d2_forward.4} parent=5 // pred_check_branch
      %201 = sbr.rel (%p198) target = $region40
    $region39: #{d2_forward.4} parent=5 // pred_region
      %s202 = ssub.s32 %s11, 1
      %p203 = scmp.lt.s32.totalorder %s16, 1
      %s204 = scalar_select %p203, %s16, 1
      %s205 = smul.addr %s204, 11
      %s206 = smul.addr %s205, 4
      %s207 = scalar_lea.vmem %s0, %s206
      %p208 = pneg %p37
      %p209 = pneg %p34
      %p210 = scmp.lt.s32.totalorder %s16, 1
      %s211 = scalar_select %p210, %s16, 1
      %s212 = smul.addr %s211, 11
      %s213 = smul.addr %s212, 4
      %s214 = scalar_lea.vmem %s1, %s213
      %p215 = pneg %p63
      %p216 = pneg %p60
      %p217 = pneg %p84
      %p218 = pneg %p81
      %p219 = pneg %p105
      %p220 = pneg %p102
      %p221 = pneg %p126
      %p222 = pneg %p123
      %p223 = pneg %p152
      %p224 = pneg %p149
      %p225 = scmp.lt.s32.totalorder %s16, 1
      %s226 = scalar_select %p225, %s16, 1
      %s227 = smul.addr %s226, 9
      %s228 = smul.addr %s227, 4
      %s229 = scalar_lea.vmem %s5, %s228
      %p230 = scmp.lt.s32.totalorder %s16, 1
      %s231 = scalar_select %p230, %s16, 1
      %s232 = smul.addr %s231, 11
      %s233 = smul.addr %s232, 4
      %s234 = scalar_lea.vmem %s0, %s233
      %p235 = scmp.lt.s32.totalorder %s16, 1
      %s236 = scalar_select %p235, %s16, 1
      %s237 = smul.addr %s236, 11
      %s238 = smul.addr %s237, 4
      %s239 = scalar_lea.vmem %s1, %s238
      %p240 = scmp.lt.s32.totalorder %s16, 1
      %s241 = scalar_select %p240, %s16, 1
      %s242 = smul.addr %s241, 9
      %s243 = smul.addr %s242, 4
      %s244 = scalar_lea.vmem %s5, %s243
      %v246 = vld [vmem:[%s234] sm:$0xf]
      %v247 = vld [vmem:[%s234 + $0x4] sm:$0xf]
      %v248 = vld [vmem:[%s234 + $0x8] sm:$0xf]
      %v249 = vld [vmem:[%s234 + $0xc] sm:$0xf]
      %v250 = vld [vmem:[%s234 + $0x10] sm:$0xf]
      %v251 = vld [vmem:[%s234 + $0x14] sm:$0xf]
      %v252 = vld [vmem:[%s234 + $0x18] sm:$0xf]
      %v253 = vld [vmem:[%s234 + $0x1c] sm:$0xf]
      %v254 = vld [vmem:[%s234 + $0x20] sm:$0xf]
      %v255 = vld [vmem:[%s2] sm:$0xf]
      %v256 = vld [vmem:[%s2 + $0x4] sm:$0xf]
      %v257 = vld [vmem:[%s234 + $0x24] sm:$0x1]
      %s258 = scalar_lea.vmem %s2, 8
      %v259 = vld [vmem:[%s258] sm:$0xf]
      %v260 = vld [vmem:[%s258 + $0x4] sm:$0xf]
      %v271 = vunpack.c.l.b16 %v246
      %v272 = vunpack.c.l.b16 %v247
      %v273 = vunpack.c.l.b16 %v248
      %v274 = vunpack.c.l.b16 %v249
      %v275 = vunpack.c.l.b16 %v250
      %v276 = vunpack.c.l.b16 %v251
      %v277 = vunpack.c.l.b16 %v252
      %v278 = vunpack.c.l.b16 %v253
      %v279 = vunpack.c.l.b16 %v254
      %v280 = vunpack.c.l.b16 %v257
      %v281 = vpack.c.b16 %v272, %v271
      %v282 = vpack.c.b16 %v274, %v273
      %v283 = vpack.c.b16 %v276, %v275
      %v284 = vpack.c.b16 %v278, %v277
      %v285 = vpack.c.b16 %v280, %v279
      %vm286 = vsmask.f32 7424
      %v288 = vshrl.u32 %v281, 16
      %v290 = vshll.u32 %v281, 16
      %v292 = vrot.slane %v290, 1
      %v293 = vor.u32 %v288, %v292
      %v295 = vshll.u32 %v282, 16
      %v297 = vrot.slane %v295, 1
      %v298 = vsel %vm286, %v293, %v297
      %v299 = vshrl.u32 %v282, 16
      %v301 = vor.u32 %v299, %v297
      %v303 = vshll.u32 %v283, 16
      %v305 = vrot.slane %v303, 1
      %v306 = vsel %vm286, %v301, %v305
      %v307 = vshrl.u32 %v283, 16
      %v309 = vor.u32 %v307, %v305
      %v311 = vshll.u32 %v284, 16
      %v313 = vrot.slane %v311, 1
      %v314 = vsel %vm286, %v309, %v313
      %v315 = vshrl.u32 %v284, 16
      %v317 = vor.u32 %v315, %v313
      %v319 = vshll.u32 %v285, 16
      %v321 = vrot.slane %v319, 1
      %v322 = vsel %vm286, %v317, %v321
      %v323 = vshrl.u32 %v285, 16
      %v325 = vor.u32 %v323, %v321
      %v328 = vunpack.c.l.b16 %v259
      %v329 = vunpack.c.l.b16 %v260
      %v330 = vpack.c.b16 %v329, %v328
      %vm332 = vcmask 130048
      %v334 = vsel %vm332, %v298, 0
      %v337 = vsel %vm332, %v306, 0
      %v340 = vsel %vm332, %v314, 0
      %v343 = vsel %vm332, %v322, 0
      %v346 = vsel %vm332, %v325, 0
      %348 = vmatprep.subr.bf16.mxu0 0
      %349 = vmatpush1.bf16.msra.mxu0 0
      %350 = vmatprep.subr.bf16.mxu0 0
      %351 = vmatpush1.bf16.msra.mxu0 0
      %352 = vmatprep.subr.bf16.mxu0 0
      %353 = vmatpush1.bf16.msra.mxu0 0
      %354 = vmatprep.subr.bf16.mxu0 0
      %355 = vmatpush1.bf16.msra.mxu0 0
      %356 = vmatprep.subr.bf16.mxu0 0
      %357 = vmatpush1.bf16.msra.mxu0 0
      %358 = vmatprep.subr.bf16.mxu0 0
      %359 = vmatpush1.bf16.msra.mxu0 0
      %360 = vmatprep.subr.bf16.mxu0 0
      %361 = vmatpush1.bf16.msra.mxu0 0
      %362 = vmatprep.subr.bf16.mxu0 0
      %363 = vmatpush1.bf16.msra.mxu0 %v330
      %364 = vmatprep.subr.bf16.mxu0 0
      %365 = vmatpush2.bf16.msra.mxu0 0
      %366 = vmatprep.subr.bf16.mxu0 0
      %367 = vmatpush2.bf16.msra.mxu0 0
      %368 = vmatprep.subr.bf16.mxu0 0
      %369 = vmatpush2.bf16.msra.mxu0 0
      %370 = vmatprep.subr.bf16.mxu0 0
      %371 = vmatpush2.bf16.msra.mxu0 0
      %372 = vmatprep.subr.bf16.mxu0 0
      %373 = vmatpush2.bf16.msra.mxu0 0
      %374 = vmatprep.subr.bf16.mxu0 0
      %375 = vmatpush2.bf16.msra.mxu0 0
      %376 = vmatprep.subr.bf16.mxu0 0
      %377 = vmatpush2.bf16.msra.mxu0 0
      %378 = vmatprep.subr.bf16.mxu0 0
      %379 = vmatpush2.bf16.msra.mxu0 0
      %380 = vmatprep.mubr.bf16.mxu0 0
      %381 = vmatmul.mubr.bf16.gmra.mxu0 %v334
      %v382 = vpop.f32.mrf.mxu0
      %v383 = vadd.f32 0.0, %v382
      %v384 = vpop.f32.mrf.mxu0
      %v385 = vpop.f32.mrf.mxu0
      %v386 = vadd.f32 0.0, %v385
      %v387 = vpop.f32.mrf.mxu0
      %388 = vmatprep.mubr.bf16.mxu0 0
      %389 = vmatmul.mubr.bf16.gmra.mxu0 %v337
      %v390 = vpop.f32.mrf.mxu0
      %v391 = vadd.f32 0.0, %v390
      %v392 = vpop.f32.mrf.mxu0
      %v393 = vpop.f32.mrf.mxu0
      %v394 = vadd.f32 0.0, %v393
      %v395 = vpop.f32.mrf.mxu0
      %396 = vmatprep.mubr.bf16.mxu0 0
      %397 = vmatmul.mubr.bf16.gmra.mxu0 %v340
      %v398 = vpop.f32.mrf.mxu0
      %v399 = vadd.f32 0.0, %v398
      %v400 = vpop.f32.mrf.mxu0
      %v401 = vpop.f32.mrf.mxu0
      %v402 = vadd.f32 0.0, %v401
      %v403 = vpop.f32.mrf.mxu0
      %404 = vmatprep.mubr.bf16.mxu0 0
      %405 = vmatmul.mubr.bf16.gmra.mxu0 %v343
      %v406 = vpop.f32.mrf.mxu0
      %v407 = vadd.f32 0.0, %v406
      %v408 = vpop.f32.mrf.mxu0
      %v409 = vpop.f32.mrf.mxu0
      %v410 = vadd.f32 0.0, %v409
      %v411 = vpop.f32.mrf.mxu0
      %412 = vmatprep.mubr.bf16.mxu0 0
      %413 = vmatmul.mubr.bf16.gmra.mxu0 %v346
      %v414 = vpop.f32.mrf.mxu0
      %v415 = vadd.f32 0.0, %v414
      %v416 = vpop.f32.mrf.mxu0
      %v417 = vpop.f32.mrf.mxu0
      %v418 = vpop.f32.mrf.mxu0
      %419 = vdwg.mxu0
      %v420 = vpack.c.b16 %v279, %v279
      %v423 = vunpack.c.l.b16 %v255
      %v424 = vunpack.c.l.b16 %v256
      %v425 = vpack.c.b16 %v424, %v423
      %v427 = vsel %vm332, %v281, 0
      %v429 = vsel %vm332, %v282, 0
      %v431 = vsel %vm332, %v283, 0
      %v433 = vsel %vm332, %v284, 0
      %v436 = vsel %vm332, %v420, 0
      %438 = vmatprep.subr.bf16.mxu0 0
      %439 = vmatpush1.bf16.msra.mxu0 0
      %440 = vmatprep.subr.bf16.mxu0 0
      %441 = vmatpush1.bf16.msra.mxu0 0
      %442 = vmatprep.subr.bf16.mxu0 0
      %443 = vmatpush1.bf16.msra.mxu0 0
      %444 = vmatprep.subr.bf16.mxu0 0
      %445 = vmatpush1.bf16.msra.mxu0 0
      %446 = vmatprep.subr.bf16.mxu0 0
      %447 = vmatpush1.bf16.msra.mxu0 0
      %448 = vmatprep.subr.bf16.mxu0 0
      %449 = vmatpush1.bf16.msra.mxu0 0
      %450 = vmatprep.subr.bf16.mxu0 0
      %451 = vmatpush1.bf16.msra.mxu0 0
      %452 = vmatprep.subr.bf16.mxu0 0
      %453 = vmatpush1.bf16.msra.mxu0 %v425
      %454 = vmatprep.subr.bf16.mxu0 0
      %455 = vmatpush2.bf16.msra.mxu0 0
      %456 = vmatprep.subr.bf16.mxu0 0
      %457 = vmatpush2.bf16.msra.mxu0 0
      %458 = vmatprep.subr.bf16.mxu0 0
      %459 = vmatpush2.bf16.msra.mxu0 0
      %460 = vmatprep.subr.bf16.mxu0 0
      %461 = vmatpush2.bf16.msra.mxu0 0
      %462 = vmatprep.subr.bf16.mxu0 0
      %463 = vmatpush2.bf16.msra.mxu0 0
      %464 = vmatprep.subr.bf16.mxu0 0
      %465 = vmatpush2.bf16.msra.mxu0 0
      %466 = vmatprep.subr.bf16.mxu0 0
      %467 = vmatpush2.bf16.msra.mxu0 0
      %468 = vmatprep.subr.bf16.mxu0 0
      %469 = vmatpush2.bf16.msra.mxu0 0
      %470 = vmatprep.mubr.bf16.mxu0 0
      %471 = vmatmul.mubr.bf16.gmra.mxu0 %v427
      %v472 = vpop.f32.mrf.mxu0
      %v473 = vadd.f32 %v383, %v472
      %v474 = vpop.f32.mrf.mxu0
      %v475 = vpop.f32.mrf.mxu0
      %v476 = vadd.f32 %v386, %v475
      %v477 = vpop.f32.mrf.mxu0
      %478 = vmatprep.mubr.bf16.mxu0 0
      %479 = vmatmul.mubr.bf16.gmra.mxu0 %v429
      %v480 = vpop.f32.mrf.mxu0
      %v481 = vadd.f32 %v391, %v480
      %v482 = vpop.f32.mrf.mxu0
      %v483 = vpop.f32.mrf.mxu0
      %v484 = vadd.f32 %v394, %v483
      %v485 = vpop.f32.mrf.mxu0
      %486 = vmatprep.mubr.bf16.mxu0 0
      %487 = vmatmul.mubr.bf16.gmra.mxu0 %v431
      %v488 = vpop.f32.mrf.mxu0
      %v489 = vadd.f32 %v399, %v488
      %v490 = vpop.f32.mrf.mxu0
      %v491 = vpop.f32.mrf.mxu0
      %v492 = vadd.f32 %v402, %v491
      %v493 = vpop.f32.mrf.mxu0
      %494 = vmatprep.mubr.bf16.mxu0 0
      %495 = vmatmul.mubr.bf16.gmra.mxu0 %v433
      %v496 = vpop.f32.mrf.mxu0
      %v497 = vadd.f32 %v407, %v496
      %v498 = vpop.f32.mrf.mxu0
      %v499 = vpop.f32.mrf.mxu0
      %v500 = vadd.f32 %v410, %v499
      %v501 = vpop.f32.mrf.mxu0
      %502 = vmatprep.mubr.bf16.mxu0 0
      %503 = vmatmul.mubr.bf16.gmra.mxu0 %v436
      %v504 = vpop.f32.mrf.mxu0
      %v505 = vadd.f32 %v415, %v504
      %v506 = vpop.f32.mrf.mxu0
      %v507 = vpop.f32.mrf.mxu0
      %v508 = vpop.f32.mrf.mxu0
      %509 = vdwg.mxu0
      %v510 = vld [vmem:[%s239] sm:$0xf]
      %v511 = vld [vmem:[%s239 + $0x4] sm:$0xf]
      %v512 = vld [vmem:[%s239 + $0x8] sm:$0xf]
      %v513 = vld [vmem:[%s239 + $0xc] sm:$0xf]
      %v514 = vld [vmem:[%s239 + $0x10] sm:$0xf]
      %v515 = vld [vmem:[%s239 + $0x14] sm:$0xf]
      %v516 = vld [vmem:[%s239 + $0x18] sm:$0xf]
      %v517 = vld [vmem:[%s239 + $0x1c] sm:$0xf]
      %v518 = vld [vmem:[%s239 + $0x20] sm:$0xf]
      %s519 = scalar_lea.vmem %s2, 16
      %v520 = vld [vmem:[%s519] sm:$0xf]
      %v521 = vld [vmem:[%s519 + $0x4] sm:$0xf]
      %v531 = vunpack.c.l.b16 %v510
      %v532 = vunpack.c.l.b16 %v511
      %v533 = vunpack.c.l.b16 %v512
      %v534 = vunpack.c.l.b16 %v513
      %v535 = vunpack.c.l.b16 %v514
      %v536 = vunpack.c.l.b16 %v515
      %v537 = vunpack.c.l.b16 %v516
      %v538 = vunpack.c.l.b16 %v517
      %v539 = vunpack.c.l.b16 %v518
      %v540 = vpack.c.b16 %v532, %v531
      %v541 = vpack.c.b16 %v534, %v533
      %v542 = vpack.c.b16 %v536, %v535
      %v543 = vpack.c.b16 %v538, %v537
      %v544 = vpack.c.b16 %v539, %v539
      %v547 = vunpack.c.l.b16 %v520
      %v548 = vunpack.c.l.b16 %v521
      %v549 = vpack.c.b16 %v548, %v547
      %v552 = vsel %vm332, %v540, 0
      %v555 = vsel %vm332, %v541, 0
      %v558 = vsel %vm332, %v542, 0
      %v561 = vsel %vm332, %v543, 0
      %v564 = vsel %vm332, %v544, 0
      %566 = vmatprep.subr.bf16.mxu0 0
      %567 = vmatpush1.bf16.msra.mxu0 0
      %568 = vmatprep.subr.bf16.mxu0 0
      %569 = vmatpush1.bf16.msra.mxu0 0
      %570 = vmatprep.subr.bf16.mxu0 0
      %571 = vmatpush1.bf16.msra.mxu0 0
      %572 = vmatprep.subr.bf16.mxu0 0
      %573 = vmatpush1.bf16.msra.mxu0 0
      %574 = vmatprep.subr.bf16.mxu0 0
      %575 = vmatpush1.bf16.msra.mxu0 0
      %576 = vmatprep.subr.bf16.mxu0 0
      %577 = vmatpush1.bf16.msra.mxu0 0
      %578 = vmatprep.subr.bf16.mxu0 0
      %579 = vmatpush1.bf16.msra.mxu0 0
      %580 = vmatprep.subr.bf16.mxu0 0
      %581 = vmatpush1.bf16.msra.mxu0 %v549
      %582 = vmatprep.subr.bf16.mxu0 0
      %583 = vmatpush2.bf16.msra.mxu0 0
      %584 = vmatprep.subr.bf16.mxu0 0
      %585 = vmatpush2.bf16.msra.mxu0 0
      %586 = vmatprep.subr.bf16.mxu0 0
      %587 = vmatpush2.bf16.msra.mxu0 0
      %588 = vmatprep.subr.bf16.mxu0 0
      %589 = vmatpush2.bf16.msra.mxu0 0
      %590 = vmatprep.subr.bf16.mxu0 0
      %591 = vmatpush2.bf16.msra.mxu0 0
      %592 = vmatprep.subr.bf16.mxu0 0
      %593 = vmatpush2.bf16.msra.mxu0 0
      %594 = vmatprep.subr.bf16.mxu0 0
      %595 = vmatpush2.bf16.msra.mxu0 0
      %596 = vmatprep.subr.bf16.mxu0 0
      %597 = vmatpush2.bf16.msra.mxu0 0
      %598 = vmatprep.mubr.bf16.mxu0 0
      %599 = vmatmul.mubr.bf16.gmra.mxu0 %v552
      %v600 = vpop.f32.mrf.mxu0
      %v601 = vadd.f32 0.0, %v600
      %v602 = vpop.f32.mrf.mxu0
      %v603 = vpop.f32.mrf.mxu0
      %v604 = vadd.f32 0.0, %v603
      %v605 = vpop.f32.mrf.mxu0
      %606 = vmatprep.mubr.bf16.mxu0 0
      %607 = vmatmul.mubr.bf16.gmra.mxu0 %v555
      %v608 = vpop.f32.mrf.mxu0
      %v609 = vadd.f32 0.0, %v608
      %v610 = vpop.f32.mrf.mxu0
      %v611 = vpop.f32.mrf.mxu0
      %v612 = vadd.f32 0.0, %v611
      %v613 = vpop.f32.mrf.mxu0
      %614 = vmatprep.mubr.bf16.mxu0 0
      %615 = vmatmul.mubr.bf16.gmra.mxu0 %v558
      %v616 = vpop.f32.mrf.mxu0
      %v617 = vadd.f32 0.0, %v616
      %v618 = vpop.f32.mrf.mxu0
      %v619 = vpop.f32.mrf.mxu0
      %v620 = vadd.f32 0.0, %v619
      %v621 = vpop.f32.mrf.mxu0
      %622 = vmatprep.mubr.bf16.mxu0 0
      %623 = vmatmul.mubr.bf16.gmra.mxu0 %v561
      %v624 = vpop.f32.mrf.mxu0
      %v625 = vadd.f32 0.0, %v624
      %v626 = vpop.f32.mrf.mxu0
      %v627 = vpop.f32.mrf.mxu0
      %v628 = vadd.f32 0.0, %v627
      %v629 = vpop.f32.mrf.mxu0
      %630 = vmatprep.mubr.bf16.mxu0 0
      %631 = vmatmul.mubr.bf16.gmra.mxu0 %v564
      %v632 = vpop.f32.mrf.mxu0
      %v633 = vadd.f32 0.0, %v632
      %v634 = vpop.f32.mrf.mxu0
      %v635 = vpop.f32.mrf.mxu0
      %v636 = vpop.f32.mrf.mxu0
      %637 = vdwg.mxu0
      %v638 = vadd.f32 %v473, %v601
      %v639 = vadd.f32 %v476, %v604
      %v640 = vadd.f32 %v481, %v609
      %v641 = vadd.f32 %v484, %v612
      %v642 = vadd.f32 %v489, %v617
      %v643 = vadd.f32 %v492, %v620
      %v644 = vadd.f32 %v497, %v625
      %v645 = vadd.f32 %v500, %v628
      %v646 = vadd.f32 %v505, %v633
      %v647 = vld [vmem:[%s239] sm:$0xf]
      %v648 = vld [vmem:[%s239 + $0x4] sm:$0xf]
      %v649 = vld [vmem:[%s239 + $0x8] sm:$0xf]
      %v650 = vld [vmem:[%s239 + $0xc] sm:$0xf]
      %v651 = vld [vmem:[%s239 + $0x10] sm:$0xf]
      %v652 = vld [vmem:[%s239 + $0x14] sm:$0xf]
      %v653 = vld [vmem:[%s239 + $0x18] sm:$0xf]
      %v654 = vld [vmem:[%s239 + $0x1c] sm:$0xf]
      %v655 = vld [vmem:[%s239 + $0x20] sm:$0xf]
      %v656 = vld [vmem:[%s239 + $0x24] sm:$0x1]
      %s657 = scalar_lea.vmem %s2, 24
      %v658 = vld [vmem:[%s657] sm:$0xf]
      %v659 = vld [vmem:[%s657 + $0x4] sm:$0xf]
      %v670 = vunpack.c.l.b16 %v647
      %v671 = vunpack.c.l.b16 %v648
      %v672 = vunpack.c.l.b16 %v649
      %v673 = vunpack.c.l.b16 %v650
      %v674 = vunpack.c.l.b16 %v651
      %v675 = vunpack.c.l.b16 %v652
      %v676 = vunpack.c.l.b16 %v653
      %v677 = vunpack.c.l.b16 %v654
      %v678 = vunpack.c.l.b16 %v655
      %v679 = vunpack.c.l.b16 %v656
      %v680 = vpack.c.b16 %v671, %v670
      %v681 = vpack.c.b16 %v673, %v672
      %v682 = vpack.c.b16 %v675, %v674
      %v683 = vpack.c.b16 %v677, %v676
      %v684 = vpack.c.b16 %v679, %v678
      %v686 = vshrl.u32 %v680, 16
      %v688 = vshll.u32 %v680, 16
      %v690 = vrot.slane %v688, 1
      %v691 = vor.u32 %v686, %v690
      %v693 = vshll.u32 %v681, 16
      %v695 = vrot.slane %v693, 1
      %v696 = vsel %vm286, %v691, %v695
      %v697 = vshrl.u32 %v681, 16
      %v699 = vor.u32 %v697, %v695
      %v701 = vshll.u32 %v682, 16
      %v703 = vrot.slane %v701, 1
      %v704 = vsel %vm286, %v699, %v703
      %v705 = vshrl.u32 %v682, 16
      %v707 = vor.u32 %v705, %v703
      %v709 = vshll.u32 %v683, 16
      %v711 = vrot.slane %v709, 1
      %v712 = vsel %vm286, %v707, %v711
      %v713 = vshrl.u32 %v683, 16
      %v715 = vor.u32 %v713, %v711
      %v717 = vshll.u32 %v684, 16
      %v719 = vrot.slane %v717, 1
      %v720 = vsel %vm286, %v715, %v719
      %v721 = vshrl.u32 %v684, 16
      %v723 = vor.u32 %v721, %v719
      %v726 = vunpack.c.l.b16 %v658
      %v727 = vunpack.c.l.b16 %v659
      %v728 = vpack.c.b16 %v727, %v726
      %v731 = vsel %vm332, %v696, 0
      %v734 = vsel %vm332, %v704, 0
      %v737 = vsel %vm332, %v712, 0
      %v740 = vsel %vm332, %v720, 0
      %v743 = vsel %vm332, %v723, 0
      %745 = vmatprep.subr.bf16.mxu0 0
      %746 = vmatpush1.bf16.msra.mxu0 0
      %747 = vmatprep.subr.bf16.mxu0 0
      %748 = vmatpush1.bf16.msra.mxu0 0
      %749 = vmatprep.subr.bf16.mxu0 0
      %750 = vmatpush1.bf16.msra.mxu0 0
      %751 = vmatprep.subr.bf16.mxu0 0
      %752 = vmatpush1.bf16.msra.mxu0 0
      %753 = vmatprep.subr.bf16.mxu0 0
      %754 = vmatpush1.bf16.msra.mxu0 0
      %755 = vmatprep.subr.bf16.mxu0 0
      %756 = vmatpush1.bf16.msra.mxu0 0
      %757 = vmatprep.subr.bf16.mxu0 0
      %758 = vmatpush1.bf16.msra.mxu0 0
      %759 = vmatprep.subr.bf16.mxu0 0
      %760 = vmatpush1.bf16.msra.mxu0 %v728
      %761 = vmatprep.subr.bf16.mxu0 0
      %762 = vmatpush2.bf16.msra.mxu0 0
      %763 = vmatprep.subr.bf16.mxu0 0
      %764 = vmatpush2.bf16.msra.mxu0 0
      %765 = vmatprep.subr.bf16.mxu0 0
      %766 = vmatpush2.bf16.msra.mxu0 0
      %767 = vmatprep.subr.bf16.mxu0 0
      %768 = vmatpush2.bf16.msra.mxu0 0
      %769 = vmatprep.subr.bf16.mxu0 0
      %770 = vmatpush2.bf16.msra.mxu0 0
      %771 = vmatprep.subr.bf16.mxu0 0
      %772 = vmatpush2.bf16.msra.mxu0 0
      %773 = vmatprep.subr.bf16.mxu0 0
      %774 = vmatpush2.bf16.msra.mxu0 0
      %775 = vmatprep.subr.bf16.mxu0 0
      %776 = vmatpush2.bf16.msra.mxu0 0
      %777 = vmatprep.mubr.bf16.mxu0 0
      %778 = vmatmul.mubr.bf16.gmra.mxu0 %v731
      %v779 = vpop.f32.mrf.mxu0
      %v780 = vadd.f32 0.0, %v779
      %v781 = vpop.f32.mrf.mxu0
      %v782 = vpop.f32.mrf.mxu0
      %v783 = vadd.f32 0.0, %v782
      %v784 = vpop.f32.mrf.mxu0
      %785 = vmatprep.mubr.bf16.mxu0 0
      %786 = vmatmul.mubr.bf16.gmra.mxu0 %v734
      %v787 = vpop.f32.mrf.mxu0
      %v788 = vadd.f32 0.0, %v787
      %v789 = vpop.f32.mrf.mxu0
      %v790 = vpop.f32.mrf.mxu0
      %v791 = vadd.f32 0.0, %v790
      %v792 = vpop.f32.mrf.mxu0
      %793 = vmatprep.mubr.bf16.mxu0 0
      %794 = vmatmul.mubr.bf16.gmra.mxu0 %v737
      %v795 = vpop.f32.mrf.mxu0
      %v796 = vadd.f32 0.0, %v795
      %v797 = vpop.f32.mrf.mxu0
      %v798 = vpop.f32.mrf.mxu0
      %v799 = vadd.f32 0.0, %v798
      %v800 = vpop.f32.mrf.mxu0
      %801 = vmatprep.mubr.bf16.mxu0 0
      %802 = vmatmul.mubr.bf16.gmra.mxu0 %v740
      %v803 = vpop.f32.mrf.mxu0
      %v804 = vadd.f32 0.0, %v803
      %v805 = vpop.f32.mrf.mxu0
      %v806 = vpop.f32.mrf.mxu0
      %v807 = vadd.f32 0.0, %v806
      %v808 = vpop.f32.mrf.mxu0
      %809 = vmatprep.mubr.bf16.mxu0 0
      %810 = vmatmul.mubr.bf16.gmra.mxu0 %v743
      %v811 = vpop.f32.mrf.mxu0
      %v812 = vadd.f32 0.0, %v811
      %v813 = vpop.f32.mrf.mxu0
      %v814 = vpop.f32.mrf.mxu0
      %v815 = vpop.f32.mrf.mxu0
      %816 = vdwg.mxu0
      %v817 = vadd.f32 %v638, %v780
      %v818 = vadd.f32 %v639, %v783
      %v819 = vadd.f32 %v640, %v788
      %v820 = vadd.f32 %v641, %v791
      %v821 = vadd.f32 %v642, %v796
      %v822 = vadd.f32 %v643, %v799
      %v823 = vadd.f32 %v644, %v804
      %v824 = vadd.f32 %v645, %v807
      %v825 = vadd.f32 %v646, %v812
      %v826 = vld [vmem:[%s234 + $0x4] sm:$0xf]
      %v827 = vld [vmem:[%s234 + $0x8] sm:$0xf]
      %v828 = vld [vmem:[%s234 + $0xc] sm:$0xf]
      %v829 = vld [vmem:[%s234 + $0x10] sm:$0xf]
      %v830 = vld [vmem:[%s234 + $0x14] sm:$0xf]
      %v831 = vld [vmem:[%s234 + $0x18] sm:$0xf]
      %v832 = vld [vmem:[%s234 + $0x1c] sm:$0xf]
      %v833 = vld [vmem:[%s234 + $0x20] sm:$0xf]
      %v834 = vld [vmem:[%s234 + $0x24] sm:$0xf]
      %v835 = vld [vmem:[%s234 + $0x28] sm:$0x1]
      %s836 = scalar_lea.vmem %s2, 32
      %v837 = vld [vmem:[%s836] sm:$0xf]
      %v838 = vld [vmem:[%s836 + $0x4] sm:$0xf]
      %v849 = vunpack.c.l.b16 %v826
      %v850 = vunpack.c.l.b16 %v827
      %v851 = vunpack.c.l.b16 %v828
      %v852 = vunpack.c.l.b16 %v829
      %v853 = vunpack.c.l.b16 %v830
      %v854 = vunpack.c.l.b16 %v831
      %v855 = vunpack.c.l.b16 %v832
      %v856 = vunpack.c.l.b16 %v833
      %v857 = vunpack.c.l.b16 %v834
      %v858 = vunpack.c.l.b16 %v835
      %v859 = vpack.c.b16 %v850, %v849
      %v860 = vpack.c.b16 %v852, %v851
      %v861 = vpack.c.b16 %v854, %v853
      %v862 = vpack.c.b16 %v856, %v855
      %v863 = vpack.c.b16 %v858, %v857
      %v865 = vshrl.u32 %v859, 16
      %v867 = vshll.u32 %v859, 16
      %v869 = vrot.slane %v867, 1
      %v870 = vor.u32 %v865, %v869
      %v872 = vshll.u32 %v860, 16
      %v874 = vrot.slane %v872, 1
      %v875 = vsel %vm286, %v870, %v874
      %v876 = vshrl.u32 %v860, 16
      %v878 = vor.u32 %v876, %v874
      %v880 = vshll.u32 %v861, 16
      %v882 = vrot.slane %v880, 1
      %v883 = vsel %vm286, %v878, %v882
      %v884 = vshrl.u32 %v861, 16
      %v886 = vor.u32 %v884, %v882
      %v888 = vshll.u32 %v862, 16
      %v890 = vrot.slane %v888, 1
      %v891 = vsel %vm286, %v886, %v890
      %v892 = vshrl.u32 %v862, 16
      %v894 = vor.u32 %v892, %v890
      %v896 = vshll.u32 %v863, 16
      %v898 = vrot.slane %v896, 1
      %v899 = vsel %vm286, %v894, %v898
      %v900 = vshrl.u32 %v863, 16
      %v902 = vor.u32 %v900, %v898
      %v905 = vunpack.c.l.b16 %v837
      %v906 = vunpack.c.l.b16 %v838
      %v907 = vpack.c.b16 %v906, %v905
      %v910 = vsel %vm332, %v875, 0
      %v913 = vsel %vm332, %v883, 0
      %v916 = vsel %vm332, %v891, 0
      %v919 = vsel %vm332, %v899, 0
      %v922 = vsel %vm332, %v902, 0
      %924 = vmatprep.subr.bf16.mxu0 0
      %925 = vmatpush1.bf16.msra.mxu0 0
      %926 = vmatprep.subr.bf16.mxu0 0
      %927 = vmatpush1.bf16.msra.mxu0 0
      %928 = vmatprep.subr.bf16.mxu0 0
      %929 = vmatpush1.bf16.msra.mxu0 0
      %930 = vmatprep.subr.bf16.mxu0 0
      %931 = vmatpush1.bf16.msra.mxu0 0
      %932 = vmatprep.subr.bf16.mxu0 0
      %933 = vmatpush1.bf16.msra.mxu0 0
      %934 = vmatprep.subr.bf16.mxu0 0
      %935 = vmatpush1.bf16.msra.mxu0 0
      %936 = vmatprep.subr.bf16.mxu0 0
      %937 = vmatpush1.bf16.msra.mxu0 0
      %938 = vmatprep.subr.bf16.mxu0 0
      %939 = vmatpush1.bf16.msra.mxu0 %v907
      %940 = vmatprep.subr.bf16.mxu0 0
      %941 = vmatpush2.bf16.msra.mxu0 0
      %942 = vmatprep.subr.bf16.mxu0 0
      %943 = vmatpush2.bf16.msra.mxu0 0
      %944 = vmatprep.subr.bf16.mxu0 0
      %945 = vmatpush2.bf16.msra.mxu0 0
      %946 = vmatprep.subr.bf16.mxu0 0
      %947 = vmatpush2.bf16.msra.mxu0 0
      %948 = vmatprep.subr.bf16.mxu0 0
      %949 = vmatpush2.bf16.msra.mxu0 0
      %950 = vmatprep.subr.bf16.mxu0 0
      %951 = vmatpush2.bf16.msra.mxu0 0
      %952 = vmatprep.subr.bf16.mxu0 0
      %953 = vmatpush2.bf16.msra.mxu0 0
      %954 = vmatprep.subr.bf16.mxu0 0
      %955 = vmatpush2.bf16.msra.mxu0 0
      %956 = vmatprep.mubr.bf16.mxu0 0
      %957 = vmatmul.mubr.bf16.gmra.mxu0 %v910
      %v958 = vpop.f32.mrf.mxu0
      %v959 = vadd.f32 0.0, %v958
      %v960 = vpop.f32.mrf.mxu0
      %v961 = vpop.f32.mrf.mxu0
      %v962 = vadd.f32 0.0, %v961
      %v963 = vpop.f32.mrf.mxu0
      %964 = vmatprep.mubr.bf16.mxu0 0
      %965 = vmatmul.mubr.bf16.gmra.mxu0 %v913
      %v966 = vpop.f32.mrf.mxu0
      %v967 = vadd.f32 0.0, %v966
      %v968 = vpop.f32.mrf.mxu0
      %v969 = vpop.f32.mrf.mxu0
      %v970 = vadd.f32 0.0, %v969
      %v971 = vpop.f32.mrf.mxu0
      %972 = vmatprep.mubr.bf16.mxu0 0
      %973 = vmatmul.mubr.bf16.gmra.mxu0 %v916
      %v974 = vpop.f32.mrf.mxu0
      %v975 = vadd.f32 0.0, %v974
      %v976 = vpop.f32.mrf.mxu0
      %v977 = vpop.f32.mrf.mxu0
      %v978 = vadd.f32 0.0, %v977
      %v979 = vpop.f32.mrf.mxu0
      %980 = vmatprep.mubr.bf16.mxu0 0
      %981 = vmatmul.mubr.bf16.gmra.mxu0 %v919
      %v982 = vpop.f32.mrf.mxu0
      %v983 = vadd.f32 0.0, %v982
      %v984 = vpop.f32.mrf.mxu0
      %v985 = vpop.f32.mrf.mxu0
      %v986 = vadd.f32 0.0, %v985
      %v987 = vpop.f32.mrf.mxu0
      %988 = vmatprep.mubr.bf16.mxu0 0
      %989 = vmatmul.mubr.bf16.gmra.mxu0 %v922
      %v990 = vpop.f32.mrf.mxu0
      %v991 = vadd.f32 0.0, %v990
      %v992 = vpop.f32.mrf.mxu0
      %v993 = vpop.f32.mrf.mxu0
      %v994 = vpop.f32.mrf.mxu0
      %995 = vdwg.mxu0
      %v996 = vadd.f32 %v817, %v959
      %v997 = vadd.f32 %v818, %v962
      %v998 = vadd.f32 %v819, %v967
      %v999 = vadd.f32 %v820, %v970
      %v1000 = vadd.f32 %v821, %v975
      %v1001 = vadd.f32 %v822, %v978
      %v1002 = vadd.f32 %v823, %v983
      %v1003 = vadd.f32 %v824, %v986
      %v1004 = vadd.f32 %v825, %v991
      %v1005 = vld [vmem:[%s234 + $0x4] sm:$0xe]
      %s1006 = scalar_lea.vmem %s2, 40
      %v1007 = vld [vmem:[%s1006] sm:$0xf]
      %v1008 = vld [vmem:[%s1006 + $0x4] sm:$0xf]
      %v1010 = vunpack.c.l.b16 %v1005
      %v1011 = vpack.c.b16 %v850, %v1010
      %vm1012 = vcmask 1046528
      %v1013 = vrot.slane %v1011, 1
      %v1014 = vrot.slane %v860, 1
      %v1015 = vsel %vm1012, %v1013, %v1014
      %v1016 = vrot.slane %v861, 1
      %v1017 = vsel %vm1012, %v1014, %v1016
      %v1018 = vrot.slane %v862, 1
      %v1019 = vsel %vm1012, %v1016, %v1018
      %v1020 = vrot.slane %v863, 1
      %v1021 = vsel %vm1012, %v1018, %v1020
      %v1024 = vunpack.c.l.b16 %v1007
      %v1025 = vunpack.c.l.b16 %v1008
      %v1026 = vpack.c.b16 %v1025, %v1024
      %v1029 = vsel %vm332, %v1015, 0
      %v1032 = vsel %vm332, %v1017, 0
      %v1035 = vsel %vm332, %v1019, 0
      %v1038 = vsel %vm332, %v1021, 0
      %v1041 = vsel %vm332, %v1020, 0
      %1043 = vmatprep.subr.bf16.mxu0 0
      %1044 = vmatpush1.bf16.msra.mxu0 0
      %1045 = vmatprep.subr.bf16.mxu0 0
      %1046 = vmatpush1.bf16.msra.mxu0 0
      %1047 = vmatprep.subr.bf16.mxu0 0
      %1048 = vmatpush1.bf16.msra.mxu0 0
      %1049 = vmatprep.subr.bf16.mxu0 0
      %1050 = vmatpush1.bf16.msra.mxu0 0
      %1051 = vmatprep.subr.bf16.mxu0 0
      %1052 = vmatpush1.bf16.msra.mxu0 0
      %1053 = vmatprep.subr.bf16.mxu0 0
      %1054 = vmatpush1.bf16.msra.mxu0 0
      %1055 = vmatprep.subr.bf16.mxu0 0
      %1056 = vmatpush1.bf16.msra.mxu0 0
      %1057 = vmatprep.subr.bf16.mxu0 0
      %1058 = vmatpush1.bf16.msra.mxu0 %v1026
      %1059 = vmatprep.subr.bf16.mxu0 0
      %1060 = vmatpush2.bf16.msra.mxu0 0
      %1061 = vmatprep.subr.bf16.mxu0 0
      %1062 = vmatpush2.bf16.msra.mxu0 0
      %1063 = vmatprep.subr.bf16.mxu0 0
      %1064 = vmatpush2.bf16.msra.mxu0 0
      %1065 = vmatprep.subr.bf16.mxu0 0
      %1066 = vmatpush2.bf16.msra.mxu0 0
      %1067 = vmatprep.subr.bf16.mxu0 0
      %1068 = vmatpush2.bf16.msra.mxu0 0
      %1069 = vmatprep.subr.bf16.mxu0 0
      %1070 = vmatpush2.bf16.msra.mxu0 0
      %1071 = vmatprep.subr.bf16.mxu0 0
      %1072 = vmatpush2.bf16.msra.mxu0 0
      %1073 = vmatprep.subr.bf16.mxu0 0
      %1074 = vmatpush2.bf16.msra.mxu0 0
      %1075 = vmatprep.mubr.bf16.mxu0 0
      %1076 = vmatmul.mubr.bf16.gmra.mxu0 %v1029
      %v1077 = vpop.f32.mrf.mxu0
      %v1078 = vadd.f32 0.0, %v1077
      %v1079 = vpop.f32.mrf.mxu0
      %v1080 = vpop.f32.mrf.mxu0
      %v1081 = vadd.f32 0.0, %v1080
      %v1082 = vpop.f32.mrf.mxu0
      %1083 = vmatprep.mubr.bf16.mxu0 0
      %1084 = vmatmul.mubr.bf16.gmra.mxu0 %v1032
      %v1085 = vpop.f32.mrf.mxu0
      %v1086 = vadd.f32 0.0, %v1085
      %v1087 = vpop.f32.mrf.mxu0
      %v1088 = vpop.f32.mrf.mxu0
      %v1089 = vadd.f32 0.0, %v1088
      %v1090 = vpop.f32.mrf.mxu0
      %1091 = vmatprep.mubr.bf16.mxu0 0
      %1092 = vmatmul.mubr.bf16.gmra.mxu0 %v1035
      %v1093 = vpop.f32.mrf.mxu0
      %v1094 = vadd.f32 0.0, %v1093
      %v1095 = vpop.f32.mrf.mxu0
      %v1096 = vpop.f32.mrf.mxu0
      %v1097 = vadd.f32 0.0, %v1096
      %v1098 = vpop.f32.mrf.mxu0
      %1099 = vmatprep.mubr.bf16.mxu0 0
      %1100 = vmatmul.mubr.bf16.gmra.mxu0 %v1038
      %v1101 = vpop.f32.mrf.mxu0
      %v1102 = vadd.f32 0.0, %v1101
      %v1103 = vpop.f32.mrf.mxu0
      %v1104 = vpop.f32.mrf.mxu0
      %v1105 = vadd.f32 0.0, %v1104
      %v1106 = vpop.f32.mrf.mxu0
      %1107 = vmatprep.mubr.bf16.mxu0 0
      %1108 = vmatmul.mubr.bf16.gmra.mxu0 %v1041
      %v1109 = vpop.f32.mrf.mxu0
      %v1110 = vadd.f32 0.0, %v1109
      %v1111 = vpop.f32.mrf.mxu0
      %v1112 = vpop.f32.mrf.mxu0
      %v1113 = vpop.f32.mrf.mxu0
      %1114 = vdwg.mxu0
      %v1115 = vadd.f32 %v996, %v1078
      %v1116 = vadd.f32 %v997, %v1081
      %v1117 = vadd.f32 %v998, %v1086
      %v1118 = vadd.f32 %v999, %v1089
      %v1119 = vadd.f32 %v1000, %v1094
      %v1120 = vadd.f32 %v1001, %v1097
      %v1121 = vadd.f32 %v1002, %v1102
      %v1122 = vadd.f32 %v1003, %v1105
      %v1123 = vadd.f32 %v1004, %v1110
      %v1124 = vld [vmem:[%s239 + $0x4] sm:$0xf]
      %v1125 = vld [vmem:[%s239 + $0x8] sm:$0xf]
      %v1126 = vld [vmem:[%s239 + $0xc] sm:$0xf]
      %v1127 = vld [vmem:[%s239 + $0x10] sm:$0xf]
      %v1128 = vld [vmem:[%s239 + $0x14] sm:$0xf]
      %v1129 = vld [vmem:[%s239 + $0x18] sm:$0xf]
      %v1130 = vld [vmem:[%s239 + $0x1c] sm:$0xf]
      %v1131 = vld [vmem:[%s239 + $0x20] sm:$0xf]
      %v1132 = vld [vmem:[%s239 + $0x24] sm:$0xf]
      %v1133 = vld [vmem:[%s239 + $0x28] sm:$0x1]
      %s1134 = scalar_lea.vmem %s2, 48
      %v1135 = vld [vmem:[%s1134] sm:$0xf]
      %v1136 = vld [vmem:[%s1134 + $0x4] sm:$0xf]
      %v1147 = vunpack.c.l.b16 %v1124
      %v1148 = vunpack.c.l.b16 %v1125
      %v1149 = vunpack.c.l.b16 %v1126
      %v1150 = vunpack.c.l.b16 %v1127
      %v1151 = vunpack.c.l.b16 %v1128
      %v1152 = vunpack.c.l.b16 %v1129
      %v1153 = vunpack.c.l.b16 %v1130
      %v1154 = vunpack.c.l.b16 %v1131
      %v1155 = vunpack.c.l.b16 %v1132
      %v1156 = vunpack.c.l.b16 %v1133
      %v1157 = vpack.c.b16 %v1148, %v1147
      %v1158 = vpack.c.b16 %v1150, %v1149
      %v1159 = vpack.c.b16 %v1152, %v1151
      %v1160 = vpack.c.b16 %v1154, %v1153
      %v1161 = vpack.c.b16 %v1156, %v1155
      %v1163 = vshrl.u32 %v1157, 16
      %v1165 = vshll.u32 %v1157, 16
      %v1167 = vrot.slane %v1165, 1
      %v1168 = vor.u32 %v1163, %v1167
      %v1170 = vshll.u32 %v1158, 16
      %v1172 = vrot.slane %v1170, 1
      %v1173 = vsel %vm286, %v1168, %v1172
      %v1174 = vshrl.u32 %v1158, 16
      %v1176 = vor.u32 %v1174, %v1172
      %v1178 = vshll.u32 %v1159, 16
      %v1180 = vrot.slane %v1178, 1
      %v1181 = vsel %vm286, %v1176, %v1180
      %v1182 = vshrl.u32 %v1159, 16
      %v1184 = vor.u32 %v1182, %v1180
      %v1186 = vshll.u32 %v1160, 16
      %v1188 = vrot.slane %v1186, 1
      %v1189 = vsel %vm286, %v1184, %v1188
      %v1190 = vshrl.u32 %v1160, 16
      %v1192 = vor.u32 %v1190, %v1188
      %v1194 = vshll.u32 %v1161, 16
      %v1196 = vrot.slane %v1194, 1
      %v1197 = vsel %vm286, %v1192, %v1196
      %v1198 = vshrl.u32 %v1161, 16
      %v1200 = vor.u32 %v1198, %v1196
      %v1203 = vunpack.c.l.b16 %v1135
      %v1204 = vunpack.c.l.b16 %v1136
      %v1205 = vpack.c.b16 %v1204, %v1203
      %v1208 = vsel %vm332, %v1173, 0
      %v1211 = vsel %vm332, %v1181, 0
      %v1214 = vsel %vm332, %v1189, 0
      %v1217 = vsel %vm332, %v1197, 0
      %v1220 = vsel %vm332, %v1200, 0
      %1222 = vmatprep.subr.bf16.mxu0 0
      %1223 = vmatpush1.bf16.msra.mxu0 0
      %1224 = vmatprep.subr.bf16.mxu0 0
      %1225 = vmatpush1.bf16.msra.mxu0 0
      %1226 = vmatprep.subr.bf16.mxu0 0
      %1227 = vmatpush1.bf16.msra.mxu0 0
      %1228 = vmatprep.subr.bf16.mxu0 0
      %1229 = vmatpush1.bf16.msra.mxu0 0
      %1230 = vmatprep.subr.bf16.mxu0 0
      %1231 = vmatpush1.bf16.msra.mxu0 0
      %1232 = vmatprep.subr.bf16.mxu0 0
      %1233 = vmatpush1.bf16.msra.mxu0 0
      %1234 = vmatprep.subr.bf16.mxu0 0
      %1235 = vmatpush1.bf16.msra.mxu0 0
      %1236 = vmatprep.subr.bf16.mxu0 0
      %1237 = vmatpush1.bf16.msra.mxu0 %v1205
      %1238 = vmatprep.subr.bf16.mxu0 0
      %1239 = vmatpush2.bf16.msra.mxu0 0
      %1240 = vmatprep.subr.bf16.mxu0 0
      %1241 = vmatpush2.bf16.msra.mxu0 0
      %1242 = vmatprep.subr.bf16.mxu0 0
      %1243 = vmatpush2.bf16.msra.mxu0 0
      %1244 = vmatprep.subr.bf16.mxu0 0
      %1245 = vmatpush2.bf16.msra.mxu0 0
      %1246 = vmatprep.subr.bf16.mxu0 0
      %1247 = vmatpush2.bf16.msra.mxu0 0
      %1248 = vmatprep.subr.bf16.mxu0 0
      %1249 = vmatpush2.bf16.msra.mxu0 0
      %1250 = vmatprep.subr.bf16.mxu0 0
      %1251 = vmatpush2.bf16.msra.mxu0 0
      %1252 = vmatprep.subr.bf16.mxu0 0
      %1253 = vmatpush2.bf16.msra.mxu0 0
      %1254 = vmatprep.mubr.bf16.mxu0 0
      %1255 = vmatmul.mubr.bf16.gmra.mxu0 %v1208
      %v1256 = vpop.f32.mrf.mxu0
      %v1257 = vadd.f32 0.0, %v1256
      %v1258 = vpop.f32.mrf.mxu0
      %v1259 = vpop.f32.mrf.mxu0
      %v1260 = vadd.f32 0.0, %v1259
      %v1261 = vpop.f32.mrf.mxu0
      %1262 = vmatprep.mubr.bf16.mxu0 0
      %1263 = vmatmul.mubr.bf16.gmra.mxu0 %v1211
      %v1264 = vpop.f32.mrf.mxu0
      %v1265 = vadd.f32 0.0, %v1264
      %v1266 = vpop.f32.mrf.mxu0
      %v1267 = vpop.f32.mrf.mxu0
      %v1268 = vadd.f32 0.0, %v1267
      %v1269 = vpop.f32.mrf.mxu0
      %1270 = vmatprep.mubr.bf16.mxu0 0
      %1271 = vmatmul.mubr.bf16.gmra.mxu0 %v1214
      %v1272 = vpop.f32.mrf.mxu0
      %v1273 = vadd.f32 0.0, %v1272
      %v1274 = vpop.f32.mrf.mxu0
      %v1275 = vpop.f32.mrf.mxu0
      %v1276 = vadd.f32 0.0, %v1275
      %v1277 = vpop.f32.mrf.mxu0
      %1278 = vmatprep.mubr.bf16.mxu0 0
      %1279 = vmatmul.mubr.bf16.gmra.mxu0 %v1217
      %v1280 = vpop.f32.mrf.mxu0
      %v1281 = vadd.f32 0.0, %v1280
      %v1282 = vpop.f32.mrf.mxu0
      %v1283 = vpop.f32.mrf.mxu0
      %v1284 = vadd.f32 0.0, %v1283
      %v1285 = vpop.f32.mrf.mxu0
      %1286 = vmatprep.mubr.bf16.mxu0 0
      %1287 = vmatmul.mubr.bf16.gmra.mxu0 %v1220
      %v1288 = vpop.f32.mrf.mxu0
      %v1289 = vadd.f32 0.0, %v1288
      %v1290 = vpop.f32.mrf.mxu0
      %v1291 = vpop.f32.mrf.mxu0
      %v1292 = vpop.f32.mrf.mxu0
      %1293 = vdwg.mxu0
      %v1294 = vadd.f32 %v1115, %v1257
      %v1295 = vadd.f32 %v1116, %v1260
      %v1296 = vadd.f32 %v1117, %v1265
      %v1297 = vadd.f32 %v1118, %v1268
      %v1298 = vadd.f32 %v1119, %v1273
      %v1299 = vadd.f32 %v1120, %v1276
      %v1300 = vadd.f32 %v1121, %v1281
      %v1301 = vadd.f32 %v1122, %v1284
      %v1302 = vadd.f32 %v1123, %v1289
      %v1303 = vld [vmem:[%s239 + $0x4] sm:$0xe]
      %s1304 = scalar_lea.vmem %s2, 56
      %v1305 = vld [vmem:[%s1304] sm:$0xf]
      %v1306 = vld [vmem:[%s1304 + $0x4] sm:$0xf]
      %v1308 = vunpack.c.l.b16 %v1303
      %v1309 = vpack.c.b16 %v1148, %v1308
      %v1310 = vrot.slane %v1309, 1
      %v1311 = vrot.slane %v1158, 1
      %v1312 = vsel %vm1012, %v1310, %v1311
      %v1313 = vrot.slane %v1159, 1
      %v1314 = vsel %vm1012, %v1311, %v1313
      %v1315 = vrot.slane %v1160, 1
      %v1316 = vsel %vm1012, %v1313, %v1315
      %v1317 = vrot.slane %v1161, 1
      %v1318 = vsel %vm1012, %v1315, %v1317
      %v1321 = vunpack.c.l.b16 %v1305
      %v1322 = vunpack.c.l.b16 %v1306
      %v1323 = vpack.c.b16 %v1322, %v1321
      %v1326 = vsel %vm332, %v1312, 0
      %v1329 = vsel %vm332, %v1314, 0
      %v1332 = vsel %vm332, %v1316, 0
      %v1335 = vsel %vm332, %v1318, 0
      %v1338 = vsel %vm332, %v1317, 0
      %1340 = vmatprep.subr.bf16.mxu0 0
      %1341 = vmatpush1.bf16.msra.mxu0 0
      %1342 = vmatprep.subr.bf16.mxu0 0
      %1343 = vmatpush1.bf16.msra.mxu0 0
      %1344 = vmatprep.subr.bf16.mxu0 0
      %1345 = vmatpush1.bf16.msra.mxu0 0
      %1346 = vmatprep.subr.bf16.mxu0 0
      %1347 = vmatpush1.bf16.msra.mxu0 0
      %1348 = vmatprep.subr.bf16.mxu0 0
      %1349 = vmatpush1.bf16.msra.mxu0 0
      %1350 = vmatprep.subr.bf16.mxu0 0
      %1351 = vmatpush1.bf16.msra.mxu0 0
      %1352 = vmatprep.subr.bf16.mxu0 0
      %1353 = vmatpush1.bf16.msra.mxu0 0
      %1354 = vmatprep.subr.bf16.mxu0 0
      %1355 = vmatpush1.bf16.msra.mxu0 %v1323
      %1356 = vmatprep.subr.bf16.mxu0 0
      %1357 = vmatpush2.bf16.msra.mxu0 0
      %1358 = vmatprep.subr.bf16.mxu0 0
      %1359 = vmatpush2.bf16.msra.mxu0 0
      %1360 = vmatprep.subr.bf16.mxu0 0
      %1361 = vmatpush2.bf16.msra.mxu0 0
      %1362 = vmatprep.subr.bf16.mxu0 0
      %1363 = vmatpush2.bf16.msra.mxu0 0
      %1364 = vmatprep.subr.bf16.mxu0 0
      %1365 = vmatpush2.bf16.msra.mxu0 0
      %1366 = vmatprep.subr.bf16.mxu0 0
      %1367 = vmatpush2.bf16.msra.mxu0 0
      %1368 = vmatprep.subr.bf16.mxu0 0
      %1369 = vmatpush2.bf16.msra.mxu0 0
      %1370 = vmatprep.subr.bf16.mxu0 0
      %1371 = vmatpush2.bf16.msra.mxu0 0
      %1372 = vmatprep.mubr.bf16.mxu0 0
      %1373 = vmatmul.mubr.bf16.gmra.mxu0 %v1326
      %v1374 = vpop.f32.mrf.mxu0
      %v1375 = vadd.f32 0.0, %v1374
      %v1376 = vpop.f32.mrf.mxu0
      %v1377 = vpop.f32.mrf.mxu0
      %v1378 = vadd.f32 0.0, %v1377
      %v1379 = vpop.f32.mrf.mxu0
      %1380 = vmatprep.mubr.bf16.mxu0 0
      %1381 = vmatmul.mubr.bf16.gmra.mxu0 %v1329
      %v1382 = vpop.f32.mrf.mxu0
      %v1383 = vadd.f32 0.0, %v1382
      %v1384 = vpop.f32.mrf.mxu0
      %v1385 = vpop.f32.mrf.mxu0
      %v1386 = vadd.f32 0.0, %v1385
      %v1387 = vpop.f32.mrf.mxu0
      %1388 = vmatprep.mubr.bf16.mxu0 0
      %1389 = vmatmul.mubr.bf16.gmra.mxu0 %v1332
      %v1390 = vpop.f32.mrf.mxu0
      %v1391 = vadd.f32 0.0, %v1390
      %v1392 = vpop.f32.mrf.mxu0
      %v1393 = vpop.f32.mrf.mxu0
      %v1394 = vadd.f32 0.0, %v1393
      %v1395 = vpop.f32.mrf.mxu0
      %1396 = vmatprep.mubr.bf16.mxu0 0
      %1397 = vmatmul.mubr.bf16.gmra.mxu0 %v1335
      %v1398 = vpop.f32.mrf.mxu0
      %v1399 = vadd.f32 0.0, %v1398
      %v1400 = vpop.f32.mrf.mxu0
      %v1401 = vpop.f32.mrf.mxu0
      %v1402 = vadd.f32 0.0, %v1401
      %v1403 = vpop.f32.mrf.mxu0
      %1404 = vmatprep.mubr.bf16.mxu0 0
      %1405 = vmatmul.mubr.bf16.gmra.mxu0 %v1338
      %v1406 = vpop.f32.mrf.mxu0
      %v1407 = vadd.f32 0.0, %v1406
      %v1408 = vpop.f32.mrf.mxu0
      %v1409 = vpop.f32.mrf.mxu0
      %v1410 = vpop.f32.mrf.mxu0
      %1411 = vdwg.mxu0
      %v1412 = vadd.f32 %v1294, %v1375
      %v1413 = vadd.f32 %v1295, %v1378
      %v1414 = vadd.f32 %v1296, %v1383
      %v1415 = vadd.f32 %v1297, %v1386
      %v1416 = vadd.f32 %v1298, %v1391
      %v1417 = vadd.f32 %v1299, %v1394
      %v1418 = vadd.f32 %v1300, %v1399
      %v1419 = vadd.f32 %v1301, %v1402
      %v1420 = vadd.f32 %v1302, %v1407
      %v1421 = vld [vmem:[%s3] sm:$0x1]
      %v1423 = vlaneseq
      %v1424 = vshrl.u32 %v1423, 7
      %v1425 = vsub.s32 0, %v1424
      %v1426 = vrot.slane %v1421, %v1425
      %v1428 = vadd.f32 %v1412, %v1426
      %v1429 = vadd.f32 %v1413, %v1426
      %v1430 = vadd.f32 %v1414, %v1426
      %v1431 = vadd.f32 %v1415, %v1426
      %v1432 = vadd.f32 %v1416, %v1426
      %v1433 = vadd.f32 %v1417, %v1426
      %v1434 = vadd.f32 %v1418, %v1426
      %v1435 = vadd.f32 %v1419, %v1426
      %v1436 = vadd.f32 %v1420, %v1426
      %vm1437 = vcmp.ge.f32.partialorder %v1428, 0.0
      %vm1438 = vcmp.ge.f32.partialorder %v1429, 0.0
      %vm1439 = vcmp.ge.f32.partialorder %v1430, 0.0
      %vm1440 = vcmp.ge.f32.partialorder %v1431, 0.0
      %vm1441 = vcmp.ge.f32.partialorder %v1432, 0.0
      %vm1442 = vcmp.ge.f32.partialorder %v1433, 0.0
      %vm1443 = vcmp.ge.f32.partialorder %v1434, 0.0
      %vm1444 = vcmp.ge.f32.partialorder %v1435, 0.0
      %vm1445 = vcmp.ge.f32.partialorder %v1436, 0.0
      %v1446 = vmul.f32 %v1428, 0.05
      %v1447 = vmul.f32 %v1429, 0.05
      %v1448 = vmul.f32 %v1430, 0.05
      %v1449 = vmul.f32 %v1431, 0.05
      %v1450 = vmul.f32 %v1432, 0.05
      %v1451 = vmul.f32 %v1433, 0.05
      %v1452 = vmul.f32 %v1434, 0.05
      %v1453 = vmul.f32 %v1435, 0.05
      %v1454 = vmul.f32 %v1436, 0.05
      %v1455 = vsel %vm1437, %v1428, %v1446
      %v1456 = vsel %vm1438, %v1429, %v1447
      %v1457 = vsel %vm1439, %v1430, %v1448
      %v1458 = vsel %vm1440, %v1431, %v1449
      %v1459 = vsel %vm1441, %v1432, %v1450
      %v1460 = vsel %vm1442, %v1433, %v1451
      %v1461 = vsel %vm1443, %v1434, %v1452
      %v1462 = vsel %vm1444, %v1435, %v1453
      %v1463 = vsel %vm1445, %v1436, %v1454
      %v1464 = vld [vmem:[%s4] sm:$0xff]
      %v1465 = vld [vmem:[%s4 + $0x8] sm:$0xff]
      %v1466 = vld [vmem:[%s4 + $0x10] sm:$0xff]
      %v1467 = vld [vmem:[%s4 + $0x18] sm:$0xff]
      %v1468 = vld [vmem:[%s4 + $0x20] sm:$0xff]
      %v1469 = vld [vmem:[%s4 + $0x28] sm:$0xff]
      %v1470 = vld [vmem:[%s4 + $0x30] sm:$0xff]
      %v1471 = vld [vmem:[%s4 + $0x38] sm:$0xff]
      %v1472 = vld [vmem:[%s4 + $0x40] sm:$0xff]
      %1474 = vset.pattern.permute.xlu0 0
      %1475 = vperm.xlu0 %1474, %v1464
      %v1476 = vpop.permute.xlu0 %1475
      %1479 = vset.pattern.permute.xlu0 0
      %1480 = vperm.xlu0 %1479, %v1465
      %v1481 = vpop.permute.xlu0 %1480
      %1484 = vset.pattern.permute.xlu0 0
      %1485 = vperm.xlu0 %1484, %v1466
      %v1486 = vpop.permute.xlu0 %1485
      %1489 = vset.pattern.permute.xlu0 0
      %1490 = vperm.xlu0 %1489, %v1467
      %v1491 = vpop.permute.xlu0 %1490
      %1494 = vset.pattern.permute.xlu0 0
      %1495 = vperm.xlu0 %1494, %v1468
      %v1496 = vpop.permute.xlu0 %1495
      %1499 = vset.pattern.permute.xlu0 0
      %1500 = vperm.xlu0 %1499, %v1469
      %v1501 = vpop.permute.xlu0 %1500
      %1504 = vset.pattern.permute.xlu0 0
      %1505 = vperm.xlu0 %1504, %v1470
      %v1506 = vpop.permute.xlu0 %1505
      %1509 = vset.pattern.permute.xlu0 0
      %1510 = vperm.xlu0 %1509, %v1471
      %v1511 = vpop.permute.xlu0 %1510
      %1514 = vset.pattern.permute.xlu0 0
      %1515 = vperm.xlu0 %1514, %v1472
      %v1516 = vpop.permute.xlu0 %1515
      %v1518 = vmul.f32 %v1455, %v1476
      %v1519 = vmul.f32 %v1456, %v1481
      %v1520 = vmul.f32 %v1457, %v1486
      %v1521 = vmul.f32 %v1458, %v1491
      %v1522 = vmul.f32 %v1459, %v1496
      %v1523 = vmul.f32 %v1460, %v1501
      %v1524 = vmul.f32 %v1461, %v1506
      %v1525 = vmul.f32 %v1462, %v1511
      %v1526 = vmul.f32 %v1463, %v1516
      %v1527 = vpack.c.bf16 %v1519, %v1518
      %v1528 = vpack.c.bf16 %v1521, %v1520
      %v1529 = vpack.c.bf16 %v1523, %v1522
      %v1530 = vpack.c.bf16 %v1525, %v1524
      %v1531 = vpack.c.bf16 %v1526, %v1526
      %v1537 = vunpack.c.l.b16 %v1527
      %v1538 = vunpack.c.h.b16 %v1527
      %v1539 = vunpack.c.l.b16 %v1528
      %v1540 = vunpack.c.h.b16 %v1528
      %v1541 = vunpack.c.l.b16 %v1529
      %v1542 = vunpack.c.h.b16 %v1529
      %v1543 = vunpack.c.l.b16 %v1530
      %v1544 = vunpack.c.h.b16 %v1530
      %v1545 = vunpack.c.l.b16 %v1531
      %v1546 = vpack.c.b16 %v1537, %v1537
      %v1547 = vpack.c.b16 %v1538, %v1538
      %v1548 = vpack.c.b16 %v1539, %v1539
      %v1549 = vpack.c.b16 %v1540, %v1540
      %v1550 = vpack.c.b16 %v1541, %v1541
      %v1551 = vpack.c.b16 %v1542, %v1542
      %v1552 = vpack.c.b16 %v1543, %v1543
      %v1553 = vpack.c.b16 %v1544, %v1544
      %v1554 = vpack.c.b16 %v1545, %v1545
      %vm1564 = vcmask 125952
      %1565 = vst.msk [vmem:[%s244] sm:$0xf] %vm1564, %v1546
      %1566 = vst.msk [vmem:[%s244 + $0x4] sm:$0xf] %vm1564, %v1547
      %1567 = vst.msk [vmem:[%s244 + $0x8] sm:$0xf] %vm1564, %v1548
      %1568 = vst.msk [vmem:[%s244 + $0xc] sm:$0xf] %vm1564, %v1549
      %1569 = vst.msk [vmem:[%s244 + $0x10] sm:$0xf] %vm1564, %v1550
      %1570 = vst.msk [vmem:[%s244 + $0x14] sm:$0xf] %vm1564, %v1551
      %1571 = vst.msk [vmem:[%s244 + $0x18] sm:$0xf] %vm1564, %v1552
      %1572 = vst.msk [vmem:[%s244 + $0x1c] sm:$0xf] %vm1564, %v1553
      %1573 = vst.msk [vmem:[%s244 + $0x20] sm:$0xf] %vm1564, %v1554
      %p1574 = scmp.lt.s32.totalorder %s16, 1
      %s1575 = scalar_select %p1574, %s16, 1
      %s1576 = smul.addr %s1575, 9
      %s1577 = smul.addr %s1576, 4
      %s1578 = scalar_lea.vmem %s5, %s1577
      // Predicated region
      $region41: #{d2_forward.4} parent=39 // pred_check
        %p1579 = pneg %p149
      $region42: #{d2_forward.4} parent=39 // pred_check_branch
        %1581 = sbr.rel (%p1579) target = $region44
      $region43: #{d2_forward.4} parent=39 // pred_region
        _
      $region44: #{d2_forward.4} parent=39 // pred_fallthru
        _
    $region40: #{d2_forward.4} parent=5 // pred_fallthru
      _
    %p1582 = scmp.le.s32.totalorder 2, %s11
    // Predicated region
    $region45: #{d2_forward.4} parent=5 // pred_check
      %p1583 = pneg %p1582
    $region46: #{d2_forward.4} parent=5 // pred_check_branch
      %1585 = sbr.rel (%p1583) target = $region48
    $region47: #{d2_forward.4} parent=5 // pred_region
      %s1586 = ssub.s32 %s11, 2
      // Predicated region
      $region49: #{d2_forward.4} parent=47 // pred_check
        %p1587 = pneg %p155
      $region50: #{d2_forward.4} parent=47 // pred_check_branch
        %1589 = sbr.rel (%p1587) target = $region52
      $region51: #{d2_forward.4} parent=47 // pred_region
        %p1590 = scmp.lt.s32.totalorder %s17, 1
        %s1591 = scalar_select %p1590, %s17, 1
        %s1592 = smul.addr %s1591, 9
        %s1593 = smul.addr %s1592, 4
        %s1594 = scalar_lea.vmem %s5, %s1593
      $region52: #{d2_forward.4} parent=47 // pred_fallthru
        _
    $region48: #{d2_forward.4} parent=5 // pred_fallthru
      _
  $region6: #{d2_forward.4} parent=0 // loop_footer
    %s15 = sadd.s32 1, %s11
  $region7: #{d2_forward.4} parent=0 // loop_footer_branch
    %10 = sbr.rel target = $region3
  $region8: #{d2_forward.4} parent=0 // loop_exit
    _

// kernel: d2_forward.3
$region0: #{d2_forward.3}
  #allocation0 [shape = 'u32[]', space=smem, size = 0x4, offset = 0x4, fixed_abs, tag = 'smem constant byte address 0x4 - core index']
  #allocation1 [shape = 'u32[144,128]{1,0:T(1,128)}', space=vmem, size = 0x12000, scoped, tag = 'internal scratch']
  %s0 = inlined_call_operand.vmem [shape: bf16[2,290,6], index: 0, kind: input, shape index: {}]
  %s1 = inlined_call_operand.vmem [shape: bf16[2,290,6], index: 1, kind: input, shape index: {}]
  %s2 = inlined_call_operand.vmem [shape: bf16[8,6,8], index: 2, kind: input, shape index: {}]
  %s3 = inlined_call_operand.vmem [shape: f32[1,8], index: 3, kind: input, shape index: {}]
  %s4 = inlined_call_operand.vmem [shape: f32[272,1], index: 4, kind: input, shape index: {}]
  %s5 = inlined_call_operand.vmem [shape: bf16[2,272,8], index: 5, kind: output, shape index: {}]
  %s6 = sld [smem:[#allocation0]]
  $region53: #{d2_forward.3} parent=0
    _
  %s8 = ssub.s32 1, %s6
  %s9 = scalar_select 0, %s8, %s6
  loop: start=0, step=1, limit=4
  $region2: #{d2_forward.3} parent=0 // loop_pre_header
    _
  $region3: #{d2_forward.3} parent=0 // loop_header
    %s11 = sphi 0, %s15
    %p12 = scmp.ge.s32.totalorder %s11, 4
    %s21 = sphi 0, %s23
    %s24 = sphi 0, %s21
    %s25 = sphi 0, %s24
    %s41 = sphi 0, %s25
    %s47 = sphi 0, %s49
    %s50 = sphi 0, %s47
    %s51 = sphi 0, %s50
    %s67 = sphi 0, %s51
    %s71 = sphi 0, %s71
    %s73 = sphi 0, %s71
    %s74 = sphi 0, %s73
    %s88 = sphi 0, %s74
    %s92 = sphi 0, %s92
    %s94 = sphi 0, %s92
    %s95 = sphi 0, %s94
    %s109 = sphi 0, %s95
    %s113 = sphi 0, %s113
    %s115 = sphi 0, %s113
    %s116 = sphi 0, %s115
    %s130 = sphi 0, %s116
    %s136 = sphi 0, %s138
    %s139 = sphi 0, %s136
    %s140 = sphi 0, %s139
    %s156 = sphi 0, %s140
  $region4: #{d2_forward.3} parent=0 // loop_header_branch
    %14 = sbr.rel (%p12) target = $region8
  $region5: #{d2_forward.3} parent=0 // loop_body
    %s16 = ssub.s32 %s11, 1
    %s17 = ssub.s32 %s11, 2
    %s18 = sadd.s32 %s11, 1
    %s19 = ssub.s32 %s11, %s18
    %p20 = scmp.eq.s32.totalorder %s19, 0
    %s22 = sadd.s32 %s21, 1
    %s23 = scalar_select %p20, %s21, %s22
    %p26 = pneg %p20
    %p27 = scmp.eq.s32.totalorder %s11, 1
    %p28 = por %p26, %p27
    %p29 = scmp.ne.s32.totalorder %s21, %s24
    %p30 = scmp.eq.s32.totalorder %s11, 0
    %p31 = por %p29, %p30
    %p32 = scmp.ne.s32.totalorder %s21, %s24
    %p33 = scmp.eq.s32.totalorder %s16, 1
    %p34 = por %p32, %p33
    %p35 = scmp.ne.s32.totalorder %s24, %s25
    %p36 = scmp.eq.s32.totalorder %s16, 0
    %p37 = por %p35, %p36
    %p38 = scmp.ne.s32.totalorder %s24, %s25
    %p39 = scmp.eq.s32.totalorder %s17, 1
    %p40 = por %p38, %p39
    %p42 = scmp.ne.s32.totalorder %s25, %s41
    %p43 = scmp.eq.s32.totalorder %s17, 0
    %p44 = por %p42, %p43
    %s45 = ssub.s32 %s11, %s18
    %p46 = scmp.eq.s32.totalorder %s45, 0
    %s48 = sadd.s32 %s47, 1
    %s49 = scalar_select %p46, %s47, %s48
    %p52 = pneg %p46
    %p53 = scmp.eq.s32.totalorder %s11, 1
    %p54 = por %p52, %p53
    %p55 = scmp.ne.s32.totalorder %s47, %s50
    %p56 = scmp.eq.s32.totalorder %s11, 0
    %p57 = por %p55, %p56
    %p58 = scmp.ne.s32.totalorder %s47, %s50
    %p59 = scmp.eq.s32.totalorder %s16, 1
    %p60 = por %p58, %p59
    %p61 = scmp.ne.s32.totalorder %s50, %s51
    %p62 = scmp.eq.s32.totalorder %s16, 0
    %p63 = por %p61, %p62
    %p64 = scmp.ne.s32.totalorder %s50, %s51
    %p65 = scmp.eq.s32.totalorder %s17, 1
    %p66 = por %p64, %p65
    %p68 = scmp.ne.s32.totalorder %s51, %s67
    %p69 = scmp.eq.s32.totalorder %s17, 0
    %p70 = por %p68, %p69
    %s72 = sadd.s32 %s71, 1
    %p75 = scmp.eq.s32.totalorder %s11, 1
    %p76 = scmp.ne.s32.totalorder %s71, %s73
    %p77 = scmp.eq.s32.totalorder %s11, 0
    %p78 = por %p76, %p77
    %p79 = scmp.ne.s32.totalorder %s71, %s73
    %p80 = scmp.eq.s32.totalorder %s16, 1
    %p81 = por %p79, %p80
    %p82 = scmp.ne.s32.totalorder %s73, %s74
    %p83 = scmp.eq.s32.totalorder %s16, 0
    %p84 = por %p82, %p83
    %p85 = scmp.ne.s32.totalorder %s73, %s74
    %p86 = scmp.eq.s32.totalorder %s17, 1
    %p87 = por %p85, %p86
    %p89 = scmp.ne.s32.totalorder %s74, %s88
    %p90 = scmp.eq.s32.totalorder %s17, 0
    %p91 = por %p89, %p90
    %s93 = sadd.s32 %s92, 1
    %p96 = scmp.eq.s32.totalorder %s11, 1
    %p97 = scmp.ne.s32.totalorder %s92, %s94
    %p98 = scmp.eq.s32.totalorder %s11, 0
    %p99 = por %p97, %p98
    %p100 = scmp.ne.s32.totalorder %s92, %s94
    %p101 = scmp.eq.s32.totalorder %s16, 1
    %p102 = por %p100, %p101
    %p103 = scmp.ne.s32.totalorder %s94, %s95
    %p104 = scmp.eq.s32.totalorder %s16, 0
    %p105 = por %p103, %p104
    %p106 = scmp.ne.s32.totalorder %s94, %s95
    %p107 = scmp.eq.s32.totalorder %s17, 1
    %p108 = por %p106, %p107
    %p110 = scmp.ne.s32.totalorder %s95, %s109
    %p111 = scmp.eq.s32.totalorder %s17, 0
    %p112 = por %p110, %p111
    %s114 = sadd.s32 %s113, 1
    %p117 = scmp.eq.s32.totalorder %s11, 1
    %p118 = scmp.ne.s32.totalorder %s113, %s115
    %p119 = scmp.eq.s32.totalorder %s11, 0
    %p120 = por %p118, %p119
    %p121 = scmp.ne.s32.totalorder %s113, %s115
    %p122 = scmp.eq.s32.totalorder %s16, 1
    %p123 = por %p121, %p122
    %p124 = scmp.ne.s32.totalorder %s115, %s116
    %p125 = scmp.eq.s32.totalorder %s16, 0
    %p126 = por %p124, %p125
    %p127 = scmp.ne.s32.totalorder %s115, %s116
    %p128 = scmp.eq.s32.totalorder %s17, 1
    %p129 = por %p127, %p128
    %p131 = scmp.ne.s32.totalorder %s116, %s130
    %p132 = scmp.eq.s32.totalorder %s17, 0
    %p133 = por %p131, %p132
    %s134 = ssub.s32 %s11, %s18
    %p135 = scmp.eq.s32.totalorder %s134, 0
    %s137 = sadd.s32 %s136, 1
    %s138 = scalar_select %p135, %s136, %s137
    %p141 = pneg %p135
    %p142 = scmp.eq.s32.totalorder %s11, 1
    %p143 = por %p141, %p142
    %p144 = scmp.ne.s32.totalorder %s136, %s139
    %p145 = scmp.eq.s32.totalorder %s11, 0
    %p146 = por %p144, %p145
    %p147 = scmp.ne.s32.totalorder %s136, %s139
    %p148 = scmp.eq.s32.totalorder %s16, 1
    %p149 = por %p147, %p148
    %p150 = scmp.ne.s32.totalorder %s139, %s140
    %p151 = scmp.eq.s32.totalorder %s16, 0
    %p152 = por %p150, %p151
    %p153 = scmp.ne.s32.totalorder %s139, %s140
    %p154 = scmp.eq.s32.totalorder %s17, 1
    %p155 = por %p153, %p154
    %p157 = scmp.ne.s32.totalorder %s140, %s156
    %p158 = scmp.eq.s32.totalorder %s17, 0
    %p159 = por %p157, %p158
    %p160 = scmp.le.s32.totalorder 1, %s11
    %p161 = scmp.lt.s32.totalorder %s11, 3
    %p162 = pnand %p160, %p161
    %p163 = pneg %p162
    // Predicated region
    $region9: #{d2_forward.3} parent=5 // pred_check
      _
    $region10: #{d2_forward.3} parent=5 // pred_check_branch
      %165 = sbr.rel (%p162) target = $region12
    $region11: #{d2_forward.3} parent=5 // pred_region
      %s166 = ssub.s32 %s11, 1
      // Predicated region
      $region13: #{d2_forward.3} parent=11 // pred_check
        %p167 = pneg %p84
      $region14: #{d2_forward.3} parent=11 // pred_check_branch
        %169 = sbr.rel (%p167) target = $region16
      $region15: #{d2_forward.3} parent=11 // pred_region
        _
      $region16: #{d2_forward.3} parent=11 // pred_fallthru
        _
      // Predicated region
      $region17: #{d2_forward.3} parent=11 // pred_check
        %p170 = pneg %p105
      $region18: #{d2_forward.3} parent=11 // pred_check_branch
        %172 = sbr.rel (%p170) target = $region20
      $region19: #{d2_forward.3} parent=11 // pred_region
        _
      $region20: #{d2_forward.3} parent=11 // pred_fallthru
        _
      // Predicated region
      $region21: #{d2_forward.3} parent=11 // pred_check
        %p173 = pneg %p126
      $region22: #{d2_forward.3} parent=11 // pred_check_branch
        %175 = sbr.rel (%p173) target = $region24
      $region23: #{d2_forward.3} parent=11 // pred_region
        _
      $region24: #{d2_forward.3} parent=11 // pred_fallthru
        _
    $region12: #{d2_forward.3} parent=5 // pred_fallthru
      _
    %p176 = scmp.lt.s32.totalorder %s11, 2
    // Predicated region
    $region25: #{d2_forward.3} parent=5 // pred_check
      %p177 = pneg %p176
    $region26: #{d2_forward.3} parent=5 // pred_check_branch
      %179 = sbr.rel (%p177) target = $region28
    $region27: #{d2_forward.3} parent=5 // pred_region
      // Predicated region
      $region29: #{d2_forward.3} parent=27 // pred_check
        %p180 = pneg %p31
      $region30: #{d2_forward.3} parent=27 // pred_check_branch
        %182 = sbr.rel (%p180) target = $region32
      $region31: #{d2_forward.3} parent=27 // pred_region
        %p183 = scmp.lt.s32.totalorder %s11, 1
        %s184 = scalar_select %p183, %s11, 1
        %s185 = smul.addr %s184, 37
        %s186 = smul.addr %s185, 4
        %s187 = scalar_lea.vmem %s0, %s186
      $region32: #{d2_forward.3} parent=27 // pred_fallthru
        _
      // Predicated region
      $region33: #{d2_forward.3} parent=27 // pred_check
        %p188 = pneg %p57
      $region34: #{d2_forward.3} parent=27 // pred_check_branch
        %190 = sbr.rel (%p188) target = $region36
      $region35: #{d2_forward.3} parent=27 // pred_region
        %p191 = scmp.lt.s32.totalorder %s11, 1
        %s192 = scalar_select %p191, %s11, 1
        %s193 = smul.addr %s192, 37
        %s194 = smul.addr %s193, 4
        %s195 = scalar_lea.vmem %s1, %s194
      $region36: #{d2_forward.3} parent=27 // pred_fallthru
        _
    $region28: #{d2_forward.3} parent=5 // pred_fallthru
      _
    %p196 = scmp.le.s32.totalorder 1, %s11
    %p197 = scmp.lt.s32.totalorder %s11, 3
    %p198 = pnand %p196, %p197
    %p199 = pneg %p198
    // Predicated region
    $region37: #{d2_forward.3} parent=5 // pred_check
      _
    $region38: #{d2_forward.3} parent=5 // pred_check_branch
      %201 = sbr.rel (%p198) target = $region40
    $region39: #{d2_forward.3} parent=5 // pred_region
      %s202 = ssub.s32 %s11, 1
      %p203 = scmp.lt.s32.totalorder %s16, 1
      %s204 = scalar_select %p203, %s16, 1
      %s205 = smul.addr %s204, 37
      %s206 = smul.addr %s205, 4
      %s207 = scalar_lea.vmem %s0, %s206
      %p208 = pneg %p37
      %p209 = pneg %p34
      %p210 = scmp.lt.s32.totalorder %s16, 1
      %s211 = scalar_select %p210, %s16, 1
      %s212 = smul.addr %s211, 37
      %s213 = smul.addr %s212, 4
      %s214 = scalar_lea.vmem %s1, %s213
      %p215 = pneg %p63
      %p216 = pneg %p60
      %p217 = pneg %p84
      %p218 = pneg %p81
      %p219 = pneg %p105
      %p220 = pneg %p102
      %p221 = pneg %p126
      %p222 = pneg %p123
      %p223 = pneg %p152
      %p224 = pneg %p149
      %p225 = scmp.lt.s32.totalorder %s16, 1
      %s226 = scalar_select %p225, %s16, 1
      %s227 = smul.addr %s226, 34
      %s228 = smul.addr %s227, 4
      %s229 = scalar_lea.vmem %s5, %s228
      %p230 = scmp.lt.s32.totalorder %s16, 1
      %s231 = scalar_select %p230, %s16, 1
      %s232 = smul.addr %s231, 37
      %s233 = smul.addr %s232, 4
      %s234 = scalar_lea.vmem %s0, %s233
      %p235 = scmp.lt.s32.totalorder %s16, 1
      %s236 = scalar_select %p235, %s16, 1
      %s237 = smul.addr %s236, 37
      %s238 = smul.addr %s237, 4
      %s239 = scalar_lea.vmem %s1, %s238
      %p240 = scmp.lt.s32.totalorder %s16, 1
      %s241 = scalar_select %p240, %s16, 1
      %s242 = smul.addr %s241, 34
      %s243 = smul.addr %s242, 4
      %s244 = scalar_lea.vmem %s5, %s243
      %v246 = vld [vmem:[%s234] sm:$0xf]
      %v247 = vld [vmem:[%s234 + $0x4] sm:$0xf]
      %v248 = vld [vmem:[%s234 + $0x8] sm:$0xf]
      %v249 = vld [vmem:[%s234 + $0xc] sm:$0xf]
      %v250 = vld [vmem:[%s234 + $0x10] sm:$0xf]
      %v251 = vld [vmem:[%s234 + $0x14] sm:$0xf]
      %v252 = vld [vmem:[%s234 + $0x18] sm:$0xf]
      %v253 = vld [vmem:[%s234 + $0x1c] sm:$0xf]
      %v254 = vld [vmem:[%s234 + $0x20] sm:$0xf]
      %v255 = vld [vmem:[%s234 + $0x24] sm:$0xf]
      %v256 = vld [vmem:[%s234 + $0x28] sm:$0xf]
      %v257 = vld [vmem:[%s234 + $0x2c] sm:$0xf]
      %v258 = vld [vmem:[%s234 + $0x30] sm:$0xf]
      %v259 = vld [vmem:[%s234 + $0x34] sm:$0xf]
      %v260 = vld [vmem:[%s234 + $0x38] sm:$0xf]
      %v261 = vld [vmem:[%s234 + $0x3c] sm:$0xf]
      %v262 = vld [vmem:[%s234 + $0x40] sm:$0xf]
      %v263 = vld [vmem:[%s234 + $0x44] sm:$0xf]
      %v264 = vld [vmem:[%s234 + $0x48] sm:$0xf]
      %v265 = vld [vmem:[%s234 + $0x4c] sm:$0xf]
      %v266 = vld [vmem:[%s234 + $0x50] sm:$0xf]
      %v267 = vld [vmem:[%s234 + $0x54] sm:$0xf]
      %v268 = vld [vmem:[%s234 + $0x58] sm:$0xf]
      %v269 = vld [vmem:[%s234 + $0x5c] sm:$0xf]
      %v270 = vld [vmem:[%s234 + $0x60] sm:$0xf]
      %v271 = vld [vmem:[%s234 + $0x64] sm:$0xf]
      %v272 = vld [vmem:[%s234 + $0x68] sm:$0xf]
      %v273 = vld [vmem:[%s234 + $0x6c] sm:$0xf]
      %v274 = vld [vmem:[%s234 + $0x70] sm:$0xf]
      %v275 = vld [vmem:[%s234 + $0x74] sm:$0xf]
      %v276 = vld [vmem:[%s234 + $0x78] sm:$0xf]
      %v277 = vld [vmem:[%s234 + $0x7c] sm:$0xf]
      %v278 = vld [vmem:[%s234 + $0x80] sm:$0xf]
      %v279 = vld [vmem:[%s234 + $0x84] sm:$0xf]
      %v280 = vld [vmem:[%s2] sm:$0x7]
      %v281 = vld [vmem:[%s234 + $0x88] sm:$0x1]
      %s282 = scalar_lea.vmem %s2, 4
      %v283 = vld [vmem:[%s282] sm:$0x7]
      %v319 = vunpack.c.l.b16 %v246
      %v320 = vunpack.c.l.b16 %v247
      %v321 = vunpack.c.l.b16 %v248
      %v322 = vunpack.c.l.b16 %v249
      %v323 = vunpack.c.l.b16 %v250
      %v324 = vunpack.c.l.b16 %v251
      %v325 = vunpack.c.l.b16 %v252
      %v326 = vunpack.c.l.b16 %v253
      %v327 = vunpack.c.l.b16 %v254
      %v328 = vunpack.c.l.b16 %v255
      %v329 = vunpack.c.l.b16 %v256
      %v330 = vunpack.c.l.b16 %v257
      %v331 = vunpack.c.l.b16 %v258
      %v332 = vunpack.c.l.b16 %v259
      %v333 = vunpack.c.l.b16 %v260
      %v334 = vunpack.c.l.b16 %v261
      %v335 = vunpack.c.l.b16 %v262
      %v336 = vunpack.c.l.b16 %v263
      %v337 = vunpack.c.l.b16 %v264
      %v338 = vunpack.c.l.b16 %v265
      %v339 = vunpack.c.l.b16 %v266
      %v340 = vunpack.c.l.b16 %v267
      %v341 = vunpack.c.l.b16 %v268
      %v342 = vunpack.c.l.b16 %v269
      %v343 = vunpack.c.l.b16 %v270
      %v344 = vunpack.c.l.b16 %v271
      %v345 = vunpack.c.l.b16 %v272
      %v346 = vunpack.c.l.b16 %v273
      %v347 = vunpack.c.l.b16 %v274
      %v348 = vunpack.c.l.b16 %v275
      %v349 = vunpack.c.l.b16 %v276
      %v350 = vunpack.c.l.b16 %v277
      %v351 = vunpack.c.l.b16 %v278
      %v352 = vunpack.c.l.b16 %v279
      %v353 = vunpack.c.l.b16 %v281
      %v354 = vpack.c.b16 %v320, %v319
      %v355 = vpack.c.b16 %v322, %v321
      %v356 = vpack.c.b16 %v324, %v323
      %v357 = vpack.c.b16 %v326, %v325
      %v358 = vpack.c.b16 %v328, %v327
      %v359 = vpack.c.b16 %v330, %v329
      %v360 = vpack.c.b16 %v332, %v331
      %v361 = vpack.c.b16 %v334, %v333
      %v362 = vpack.c.b16 %v336, %v335
      %v363 = vpack.c.b16 %v338, %v337
      %v364 = vpack.c.b16 %v340, %v339
      %v365 = vpack.c.b16 %v342, %v341
      %v366 = vpack.c.b16 %v344, %v343
      %v367 = vpack.c.b16 %v346, %v345
      %v368 = vpack.c.b16 %v348, %v347
      %v369 = vpack.c.b16 %v350, %v349
      %v370 = vpack.c.b16 %v352, %v351
      %v371 = vpack.c.b16 %v353, %v353
      %vm372 = vsmask.f32 7424
      %v374 = vshrl.u32 %v354, 16
      %v376 = vshll.u32 %v354, 16
      %v378 = vrot.slane %v376, 1
      %v379 = vor.u32 %v374, %v378
      %v381 = vshll.u32 %v355, 16
      %v383 = vrot.slane %v381, 1
      %v384 = vsel %vm372, %v379, %v383
      %v385 = vshrl.u32 %v355, 16
      %v387 = vor.u32 %v385, %v383
      %v389 = vshll.u32 %v356, 16
      %v391 = vrot.slane %v389, 1
      %v392 = vsel %vm372, %v387, %v391
      %v393 = vshrl.u32 %v356, 16
      %v395 = vor.u32 %v393, %v391
      %v397 = vshll.u32 %v357, 16
      %v399 = vrot.slane %v397, 1
      %v400 = vsel %vm372, %v395, %v399
      %v401 = vshrl.u32 %v357, 16
      %v403 = vor.u32 %v401, %v399
      %v405 = vshll.u32 %v358, 16
      %v407 = vrot.slane %v405, 1
      %v408 = vsel %vm372, %v403, %v407
      %v409 = vshrl.u32 %v358, 16
      %v411 = vor.u32 %v409, %v407
      %v413 = vshll.u32 %v359, 16
      %v415 = vrot.slane %v413, 1
      %v416 = vsel %vm372, %v411, %v415
      %v417 = vshrl.u32 %v359, 16
      %v419 = vor.u32 %v417, %v415
      %v421 = vshll.u32 %v360, 16
      %v423 = vrot.slane %v421, 1
      %v424 = vsel %vm372, %v419, %v423
      %v425 = vshrl.u32 %v360, 16
      %v427 = vor.u32 %v425, %v423
      %v429 = vshll.u32 %v361, 16
      %v431 = vrot.slane %v429, 1
      %v432 = vsel %vm372, %v427, %v431
      %v433 = vshrl.u32 %v361, 16
      %v435 = vor.u32 %v433, %v431
      %v437 = vshll.u32 %v362, 16
      %v439 = vrot.slane %v437, 1
      %v440 = vsel %vm372, %v435, %v439
      %v441 = vshrl.u32 %v362, 16
      %v443 = vor.u32 %v441, %v439
      %v445 = vshll.u32 %v363, 16
      %v447 = vrot.slane %v445, 1
      %v448 = vsel %vm372, %v443, %v447
      %v449 = vshrl.u32 %v363, 16
      %v451 = vor.u32 %v449, %v447
      %v453 = vshll.u32 %v364, 16
      %v455 = vrot.slane %v453, 1
      %v456 = vsel %vm372, %v451, %v455
      %v457 = vshrl.u32 %v364, 16
      %v459 = vor.u32 %v457, %v455
      %v461 = vshll.u32 %v365, 16
      %v463 = vrot.slane %v461, 1
      %v464 = vsel %vm372, %v459, %v463
      %v465 = vshrl.u32 %v365, 16
      %v467 = vor.u32 %v465, %v463
      %v469 = vshll.u32 %v366, 16
      %v471 = vrot.slane %v469, 1
      %v472 = vsel %vm372, %v467, %v471
      %v473 = vshrl.u32 %v366, 16
      %v475 = vor.u32 %v473, %v471
      %v477 = vshll.u32 %v367, 16
      %v479 = vrot.slane %v477, 1
      %v480 = vsel %vm372, %v475, %v479
      %v481 = vshrl.u32 %v367, 16
      %v483 = vor.u32 %v481, %v479
      %v485 = vshll.u32 %v368, 16
      %v487 = vrot.slane %v485, 1
      %v488 = vsel %vm372, %v483, %v487
      %v489 = vshrl.u32 %v368, 16
      %v491 = vor.u32 %v489, %v487
      %v493 = vshll.u32 %v369, 16
      %v495 = vrot.slane %v493, 1
      %v496 = vsel %vm372, %v491, %v495
      %v497 = vshrl.u32 %v369, 16
      %v499 = vor.u32 %v497, %v495
      %v501 = vshll.u32 %v370, 16
      %v503 = vrot.slane %v501, 1
      %v504 = vsel %vm372, %v499, %v503
      %v505 = vshrl.u32 %v370, 16
      %v507 = vor.u32 %v505, %v503
      %v509 = vshll.u32 %v371, 16
      %v511 = vrot.slane %v509, 1
      %v512 = vsel %vm372, %v507, %v511
      %vm513 = vcmask 48128
      %v515 = vsel %vm513, %v384, 0
      %v518 = vsel %vm513, %v392, 0
      %v521 = vsel %vm513, %v400, 0
      %v524 = vsel %vm513, %v408, 0
      %v527 = vsel %vm513, %v416, 0
      %v530 = vsel %vm513, %v424, 0
      %v533 = vsel %vm513, %v432, 0
      %v536 = vsel %vm513, %v440, 0
      %v539 = vsel %vm513, %v448, 0
      %v542 = vsel %vm513, %v456, 0
      %v545 = vsel %vm513, %v464, 0
      %v548 = vsel %vm513, %v472, 0
      %v551 = vsel %vm513, %v480, 0
      %v554 = vsel %vm513, %v488, 0
      %v557 = vsel %vm513, %v496, 0
      %v560 = vsel %vm513, %v504, 0
      %v563 = vsel %vm513, %v512, 0
      %vm565 = vcmask 1042432
      %v567 = vsel %vm565, %v283, 0
      %569 = vmatprep.subr.bf16.mxu0 0
      %570 = vmatpush1.bf16.msra.mxu0 0
      %571 = vmatprep.subr.bf16.mxu0 0
      %572 = vmatpush1.bf16.msra.mxu0 0
      %573 = vmatprep.subr.bf16.mxu0 0
      %574 = vmatpush1.bf16.msra.mxu0 0
      %575 = vmatprep.subr.bf16.mxu0 0
      %576 = vmatpush1.bf16.msra.mxu0 0
      %577 = vmatprep.subr.bf16.mxu0 0
      %578 = vmatpush1.bf16.msra.mxu0 0
      %579 = vmatprep.subr.bf16.mxu0 0
      %580 = vmatpush1.bf16.msra.mxu0 0
      %581 = vmatprep.subr.bf16.mxu0 0
      %582 = vmatpush1.bf16.msra.mxu0 0
      %583 = vmatprep.subr.bf16.mxu0 0
      %584 = vmatpush1.bf16.msra.mxu0 %v567
      %585 = vmatprep.subr.bf16.mxu0 0
      %586 = vmatpush2.bf16.msra.mxu0 0
      %587 = vmatprep.subr.bf16.mxu0 0
      %588 = vmatpush2.bf16.msra.mxu0 0
      %589 = vmatprep.subr.bf16.mxu0 0
      %590 = vmatpush2.bf16.msra.mxu0 0
      %591 = vmatprep.subr.bf16.mxu0 0
      %592 = vmatpush2.bf16.msra.mxu0 0
      %593 = vmatprep.subr.bf16.mxu0 0
      %594 = vmatpush2.bf16.msra.mxu0 0
      %595 = vmatprep.subr.bf16.mxu0 0
      %596 = vmatpush2.bf16.msra.mxu0 0
      %597 = vmatprep.subr.bf16.mxu0 0
      %598 = vmatpush2.bf16.msra.mxu0 0
      %599 = vmatprep.subr.bf16.mxu0 0
      %600 = vmatpush2.bf16.msra.mxu0 0
      %601 = vmatprep.mubr.bf16.mxu0 0
      %602 = vmatmul.mubr.bf16.gmra.mxu0 %v515
      %v603 = vpop.f32.mrf.mxu0
      %v604 = vadd.f32 0.0, %v603
      %v605 = vpop.f32.mrf.mxu0
      %v606 = vpop.f32.mrf.mxu0
      %v607 = vadd.f32 0.0, %v606
      %v608 = vpop.f32.mrf.mxu0
      %609 = vmatprep.mubr.bf16.mxu0 0
      %610 = vmatmul.mubr.bf16.gmra.mxu0 %v518
      %v611 = vpop.f32.mrf.mxu0
      %v612 = vadd.f32 0.0, %v611
      %v613 = vpop.f32.mrf.mxu0
      %v614 = vpop.f32.mrf.mxu0
      %v615 = vadd.f32 0.0, %v614
      %v616 = vpop.f32.mrf.mxu0
      %617 = vmatprep.mubr.bf16.mxu0 0
      %618 = vmatmul.mubr.bf16.gmra.mxu0 %v521
      %v619 = vpop.f32.mrf.mxu0
      %v620 = vadd.f32 0.0, %v619
      %v621 = vpop.f32.mrf.mxu0
      %v622 = vpop.f32.mrf.mxu0
      %v623 = vadd.f32 0.0, %v622
      %v624 = vpop.f32.mrf.mxu0
      %625 = vmatprep.mubr.bf16.mxu0 0
      %626 = vmatmul.mubr.bf16.gmra.mxu0 %v524
      %v627 = vpop.f32.mrf.mxu0
      %v628 = vadd.f32 0.0, %v627
      %v629 = vpop.f32.mrf.mxu0
      %v630 = vpop.f32.mrf.mxu0
      %v631 = vadd.f32 0.0, %v630
      %v632 = vpop.f32.mrf.mxu0
      %633 = vmatprep.mubr.bf16.mxu0 0
      %634 = vmatmul.mubr.bf16.gmra.mxu0 %v527
      %v635 = vpop.f32.mrf.mxu0
      %v636 = vadd.f32 0.0, %v635
      %v637 = vpop.f32.mrf.mxu0
      %v638 = vpop.f32.mrf.mxu0
      %v639 = vadd.f32 0.0, %v638
      %v640 = vpop.f32.mrf.mxu0
      %641 = vmatprep.mubr.bf16.mxu0 0
      %642 = vmatmul.mubr.bf16.gmra.mxu0 %v530
      %v643 = vpop.f32.mrf.mxu0
      %v644 = vadd.f32 0.0, %v643
      %v645 = vpop.f32.mrf.mxu0
      %v646 = vpop.f32.mrf.mxu0
      %v647 = vadd.f32 0.0, %v646
      %v648 = vpop.f32.mrf.mxu0
      %649 = vmatprep.mubr.bf16.mxu0 0
      %650 = vmatmul.mubr.bf16.gmra.mxu0 %v533
      %v651 = vpop.f32.mrf.mxu0
      %v652 = vadd.f32 0.0, %v651
      %v653 = vpop.f32.mrf.mxu0
      %v654 = vpop.f32.mrf.mxu0
      %v655 = vadd.f32 0.0, %v654
      %v656 = vpop.f32.mrf.mxu0
      %657 = vmatprep.mubr.bf16.mxu0 0
      %658 = vmatmul.mubr.bf16.gmra.mxu0 %v536
      %v659 = vpop.f32.mrf.mxu0
      %v660 = vadd.f32 0.0, %v659
      %v661 = vpop.f32.mrf.mxu0
      %v662 = vpop.f32.mrf.mxu0
      %v663 = vadd.f32 0.0, %v662
      %v664 = vpop.f32.mrf.mxu0
      %665 = vmatprep.mubr.bf16.mxu0 0
      %666 = vmatmul.mubr.bf16.gmra.mxu0 %v539
      %v667 = vpop.f32.mrf.mxu0
      %v668 = vadd.f32 0.0, %v667
      %v669 = vpop.f32.mrf.mxu0
      %v670 = vpop.f32.mrf.mxu0
      %v671 = vadd.f32 0.0, %v670
      %v672 = vpop.f32.mrf.mxu0
      %673 = vmatprep.mubr.bf16.mxu0 0
      %674 = vmatmul.mubr.bf16.gmra.mxu0 %v542
      %v675 = vpop.f32.mrf.mxu0
      %v676 = vadd.f32 0.0, %v675
      %v677 = vpop.f32.mrf.mxu0
      %v678 = vpop.f32.mrf.mxu0
      %v679 = vadd.f32 0.0, %v678
      %v680 = vpop.f32.mrf.mxu0
      %681 = vmatprep.mubr.bf16.mxu0 0
      %682 = vmatmul.mubr.bf16.gmra.mxu0 %v545
      %v683 = vpop.f32.mrf.mxu0
      %v684 = vadd.f32 0.0, %v683
      %v685 = vpop.f32.mrf.mxu0
      %v686 = vpop.f32.mrf.mxu0
      %v687 = vadd.f32 0.0, %v686
      %v688 = vpop.f32.mrf.mxu0
      %689 = vmatprep.mubr.bf16.mxu0 0
      %690 = vmatmul.mubr.bf16.gmra.mxu0 %v548
      %v691 = vpop.f32.mrf.mxu0
      %v692 = vadd.f32 0.0, %v691
      %v693 = vpop.f32.mrf.mxu0
      %v694 = vpop.f32.mrf.mxu0
      %v695 = vadd.f32 0.0, %v694
      %v696 = vpop.f32.mrf.mxu0
      %697 = vmatprep.mubr.bf16.mxu0 0
      %698 = vmatmul.mubr.bf16.gmra.mxu0 %v551
      %v699 = vpop.f32.mrf.mxu0
      %v700 = vadd.f32 0.0, %v699
      %v701 = vpop.f32.mrf.mxu0
      %v702 = vpop.f32.mrf.mxu0
      %v703 = vadd.f32 0.0, %v702
      %v704 = vpop.f32.mrf.mxu0
      %705 = vmatprep.mubr.bf16.mxu0 0
      %706 = vmatmul.mubr.bf16.gmra.mxu0 %v554
      %v707 = vpop.f32.mrf.mxu0
      %v708 = vadd.f32 0.0, %v707
      %v709 = vpop.f32.mrf.mxu0
      %v710 = vpop.f32.mrf.mxu0
      %v711 = vadd.f32 0.0, %v710
      %v712 = vpop.f32.mrf.mxu0
      %713 = vmatprep.mubr.bf16.mxu0 0
      %714 = vmatmul.mubr.bf16.gmra.mxu0 %v557
      %v715 = vpop.f32.mrf.mxu0
      %v716 = vadd.f32 0.0, %v715
      %v717 = vpop.f32.mrf.mxu0
      %v718 = vpop.f32.mrf.mxu0
      %v719 = vadd.f32 0.0, %v718
      %v720 = vpop.f32.mrf.mxu0
      %721 = vmatprep.mubr.bf16.mxu0 0
      %722 = vmatmul.mubr.bf16.gmra.mxu0 %v560
      %v723 = vpop.f32.mrf.mxu0
      %v724 = vadd.f32 0.0, %v723
      %v725 = vpop.f32.mrf.mxu0
      %v726 = vpop.f32.mrf.mxu0
      %v727 = vadd.f32 0.0, %v726
      %v728 = vpop.f32.mrf.mxu0
      %729 = vmatprep.mubr.bf16.mxu0 0
      %730 = vmatmul.mubr.bf16.gmra.mxu0 %v563
      %v731 = vpop.f32.mrf.mxu0
      %v732 = vadd.f32 0.0, %v731
      %v733 = vpop.f32.mrf.mxu0
      %v734 = vpop.f32.mrf.mxu0
      %v735 = vadd.f32 0.0, %v734
      %v736 = vpop.f32.mrf.mxu0
      %737 = vdwg.mxu0
      %v738 = vsel %vm513, %v354, 0
      %v740 = vsel %vm513, %v355, 0
      %v742 = vsel %vm513, %v356, 0
      %v744 = vsel %vm513, %v357, 0
      %v746 = vsel %vm513, %v358, 0
      %v748 = vsel %vm513, %v359, 0
      %v750 = vsel %vm513, %v360, 0
      %v752 = vsel %vm513, %v361, 0
      %v754 = vsel %vm513, %v362, 0
      %v756 = vsel %vm513, %v363, 0
      %v758 = vsel %vm513, %v364, 0
      %v760 = vsel %vm513, %v365, 0
      %v762 = vsel %vm513, %v366, 0
      %v764 = vsel %vm513, %v367, 0
      %v766 = vsel %vm513, %v368, 0
      %v768 = vsel %vm513, %v369, 0
      %v770 = vsel %vm513, %v370, 0
      %v773 = vsel %vm565, %v280, 0
      %775 = vmatprep.subr.bf16.mxu0 0
      %776 = vmatpush1.bf16.msra.mxu0 0
      %777 = vmatprep.subr.bf16.mxu0 0
      %778 = vmatpush1.bf16.msra.mxu0 0
      %779 = vmatprep.subr.bf16.mxu0 0
      %780 = vmatpush1.bf16.msra.mxu0 0
      %781 = vmatprep.subr.bf16.mxu0 0
      %782 = vmatpush1.bf16.msra.mxu0 0
      %783 = vmatprep.subr.bf16.mxu0 0
      %784 = vmatpush1.bf16.msra.mxu0 0
      %785 = vmatprep.subr.bf16.mxu0 0
      %786 = vmatpush1.bf16.msra.mxu0 0
      %787 = vmatprep.subr.bf16.mxu0 0
      %788 = vmatpush1.bf16.msra.mxu0 0
      %789 = vmatprep.subr.bf16.mxu0 0
      %790 = vmatpush1.bf16.msra.mxu0 %v773
      %791 = vmatprep.subr.bf16.mxu0 0
      %792 = vmatpush2.bf16.msra.mxu0 0
      %793 = vmatprep.subr.bf16.mxu0 0
      %794 = vmatpush2.bf16.msra.mxu0 0
      %795 = vmatprep.subr.bf16.mxu0 0
      %796 = vmatpush2.bf16.msra.mxu0 0
      %797 = vmatprep.subr.bf16.mxu0 0
      %798 = vmatpush2.bf16.msra.mxu0 0
      %799 = vmatprep.subr.bf16.mxu0 0
      %800 = vmatpush2.bf16.msra.mxu0 0
      %801 = vmatprep.subr.bf16.mxu0 0
      %802 = vmatpush2.bf16.msra.mxu0 0
      %803 = vmatprep.subr.bf16.mxu0 0
      %804 = vmatpush2.bf16.msra.mxu0 0
      %805 = vmatprep.subr.bf16.mxu0 0
      %806 = vmatpush2.bf16.msra.mxu0 0
      %807 = vmatprep.mubr.bf16.mxu0 0
      %808 = vmatmul.mubr.bf16.gmra.mxu0 %v738
      %v809 = vpop.f32.mrf.mxu0
      %v810 = vadd.f32 %v604, %v809
      %v811 = vpop.f32.mrf.mxu0
      %v812 = vpop.f32.mrf.mxu0
      %v813 = vadd.f32 %v607, %v812
      %v814 = vpop.f32.mrf.mxu0
      %815 = vmatprep.mubr.bf16.mxu0 0
      %816 = vmatmul.mubr.bf16.gmra.mxu0 %v740
      %v817 = vpop.f32.mrf.mxu0
      %v818 = vadd.f32 %v612, %v817
      %v819 = vpop.f32.mrf.mxu0
      %v820 = vpop.f32.mrf.mxu0
      %v821 = vadd.f32 %v615, %v820
      %v822 = vpop.f32.mrf.mxu0
      %823 = vmatprep.mubr.bf16.mxu0 0
      %824 = vmatmul.mubr.bf16.gmra.mxu0 %v742
      %v825 = vpop.f32.mrf.mxu0
      %v826 = vadd.f32 %v620, %v825
      %v827 = vpop.f32.mrf.mxu0
      %v828 = vpop.f32.mrf.mxu0
      %v829 = vadd.f32 %v623, %v828
      %v830 = vpop.f32.mrf.mxu0
      %831 = vmatprep.mubr.bf16.mxu0 0
      %832 = vmatmul.mubr.bf16.gmra.mxu0 %v744
      %v833 = vpop.f32.mrf.mxu0
      %v834 = vadd.f32 %v628, %v833
      %v835 = vpop.f32.mrf.mxu0
      %v836 = vpop.f32.mrf.mxu0
      %v837 = vadd.f32 %v631, %v836
      %v838 = vpop.f32.mrf.mxu0
      %839 = vmatprep.mubr.bf16.mxu0 0
      %840 = vmatmul.mubr.bf16.gmra.mxu0 %v746
      %v841 = vpop.f32.mrf.mxu0
      %v842 = vadd.f32 %v636, %v841
      %v843 = vpop.f32.mrf.mxu0
      %v844 = vpop.f32.mrf.mxu0
      %v845 = vadd.f32 %v639, %v844
      %v846 = vpop.f32.mrf.mxu0
      %847 = vmatprep.mubr.bf16.mxu0 0
      %848 = vmatmul.mubr.bf16.gmra.mxu0 %v748
      %v849 = vpop.f32.mrf.mxu0
      %v850 = vadd.f32 %v644, %v849
      %v851 = vpop.f32.mrf.mxu0
      %v852 = vpop.f32.mrf.mxu0
      %v853 = vadd.f32 %v647, %v852
      %v854 = vpop.f32.mrf.mxu0
      %855 = vmatprep.mubr.bf16.mxu0 0
      %856 = vmatmul.mubr.bf16.gmra.mxu0 %v750
      %v857 = vpop.f32.mrf.mxu0
      %v858 = vadd.f32 %v652, %v857
      %v859 = vpop.f32.mrf.mxu0
      %v860 = vpop.f32.mrf.mxu0
      %v861 = vadd.f32 %v655, %v860
      %v862 = vpop.f32.mrf.mxu0
      %863 = vmatprep.mubr.bf16.mxu0 0
      %864 = vmatmul.mubr.bf16.gmra.mxu0 %v752
      %v865 = vpop.f32.mrf.mxu0
      %v866 = vadd.f32 %v660, %v865
      %v867 = vpop.f32.mrf.mxu0
      %v868 = vpop.f32.mrf.mxu0
      %v869 = vadd.f32 %v663, %v868
      %v870 = vpop.f32.mrf.mxu0
      %871 = vmatprep.mubr.bf16.mxu0 0
      %872 = vmatmul.mubr.bf16.gmra.mxu0 %v754
      %v873 = vpop.f32.mrf.mxu0
      %v874 = vadd.f32 %v668, %v873
      %v875 = vpop.f32.mrf.mxu0
      %v876 = vpop.f32.mrf.mxu0
      %v877 = vadd.f32 %v671, %v876
      %v878 = vpop.f32.mrf.mxu0
      %879 = vmatprep.mubr.bf16.mxu0 0
      %880 = vmatmul.mubr.bf16.gmra.mxu0 %v756
      %v881 = vpop.f32.mrf.mxu0
      %v882 = vadd.f32 %v676, %v881
      %v883 = vpop.f32.mrf.mxu0
      %v884 = vpop.f32.mrf.mxu0
      %v885 = vadd.f32 %v679, %v884
      %v886 = vpop.f32.mrf.mxu0
      %887 = vmatprep.mubr.bf16.mxu0 0
      %888 = vmatmul.mubr.bf16.gmra.mxu0 %v758
      %v889 = vpop.f32.mrf.mxu0
      %v890 = vadd.f32 %v684, %v889
      %v891 = vpop.f32.mrf.mxu0
      %v892 = vpop.f32.mrf.mxu0
      %v893 = vadd.f32 %v687, %v892
      %v894 = vpop.f32.mrf.mxu0
      %895 = vmatprep.mubr.bf16.mxu0 0
      %896 = vmatmul.mubr.bf16.gmra.mxu0 %v760
      %v897 = vpop.f32.mrf.mxu0
      %v898 = vadd.f32 %v692, %v897
      %v899 = vpop.f32.mrf.mxu0
      %v900 = vpop.f32.mrf.mxu0
      %v901 = vadd.f32 %v695, %v900
      %v902 = vpop.f32.mrf.mxu0
      %903 = vmatprep.mubr.bf16.mxu0 0
      %904 = vmatmul.mubr.bf16.gmra.mxu0 %v762
      %v905 = vpop.f32.mrf.mxu0
      %v906 = vadd.f32 %v700, %v905
      %v907 = vpop.f32.mrf.mxu0
      %v908 = vpop.f32.mrf.mxu0
      %v909 = vadd.f32 %v703, %v908
      %v910 = vpop.f32.mrf.mxu0
      %911 = vmatprep.mubr.bf16.mxu0 0
      %912 = vmatmul.mubr.bf16.gmra.mxu0 %v764
      %v913 = vpop.f32.mrf.mxu0
      %v914 = vadd.f32 %v708, %v913
      %v915 = vpop.f32.mrf.mxu0
      %v916 = vpop.f32.mrf.mxu0
      %v917 = vadd.f32 %v711, %v916
      %v918 = vpop.f32.mrf.mxu0
      %919 = vmatprep.mubr.bf16.mxu0 0
      %920 = vmatmul.mubr.bf16.gmra.mxu0 %v766
      %v921 = vpop.f32.mrf.mxu0
      %v922 = vadd.f32 %v716, %v921
      %v923 = vpop.f32.mrf.mxu0
      %v924 = vpop.f32.mrf.mxu0
      %v925 = vadd.f32 %v719, %v924
      %v926 = vpop.f32.mrf.mxu0
      %927 = vmatprep.mubr.bf16.mxu0 0
      %928 = vmatmul.mubr.bf16.gmra.mxu0 %v768
      %v929 = vpop.f32.mrf.mxu0
      %v930 = vadd.f32 %v724, %v929
      %v931 = vpop.f32.mrf.mxu0
      %v932 = vpop.f32.mrf.mxu0
      %v933 = vadd.f32 %v727, %v932
      %v934 = vpop.f32.mrf.mxu0
      %935 = vmatprep.mubr.bf16.mxu0 0
      %936 = vmatmul.mubr.bf16.gmra.mxu0 %v770
      %v937 = vpop.f32.mrf.mxu0
      %v938 = vadd.f32 %v732, %v937
      %v939 = vpop.f32.mrf.mxu0
      %v940 = vpop.f32.mrf.mxu0
      %v941 = vadd.f32 %v735, %v940
      %v942 = vpop.f32.mrf.mxu0
      %943 = vdwg.mxu0
      %v944 = vld [vmem:[%s239] sm:$0xf]
      %v945 = vld [vmem:[%s239 + $0x4] sm:$0xf]
      %v946 = vld [vmem:[%s239 + $0x8] sm:$0xf]
      %v947 = vld [vmem:[%s239 + $0xc] sm:$0xf]
      %v948 = vld [vmem:[%s239 + $0x10] sm:$0xf]
      %v949 = vld [vmem:[%s239 + $0x14] sm:$0xf]
      %v950 = vld [vmem:[%s239 + $0x18] sm:$0xf]
      %v951 = vld [vmem:[%s239 + $0x1c] sm:$0xf]
      %v952 = vld [vmem:[%s239 + $0x20] sm:$0xf]
      %v953 = vld [vmem:[%s239 + $0x24] sm:$0xf]
      %v954 = vld [vmem:[%s239 + $0x28] sm:$0xf]
      %v955 = vld [vmem:[%s239 + $0x2c] sm:$0xf]
      %v956 = vld [vmem:[%s239 + $0x30] sm:$0xf]
      %v957 = vld [vmem:[%s239 + $0x34] sm:$0xf]
      %v958 = vld [vmem:[%s239 + $0x38] sm:$0xf]
      %v959 = vld [vmem:[%s239 + $0x3c] sm:$0xf]
      %v960 = vld [vmem:[%s239 + $0x40] sm:$0xf]
      %v961 = vld [vmem:[%s239 + $0x44] sm:$0xf]
      %v962 = vld [vmem:[%s239 + $0x48] sm:$0xf]
      %v963 = vld [vmem:[%s239 + $0x4c] sm:$0xf]
      %v964 = vld [vmem:[%s239 + $0x50] sm:$0xf]
      %v965 = vld [vmem:[%s239 + $0x54] sm:$0xf]
      %v966 = vld [vmem:[%s239 + $0x58] sm:$0xf]
      %v967 = vld [vmem:[%s239 + $0x5c] sm:$0xf]
      %v968 = vld [vmem:[%s239 + $0x60] sm:$0xf]
      %v969 = vld [vmem:[%s239 + $0x64] sm:$0xf]
      %v970 = vld [vmem:[%s239 + $0x68] sm:$0xf]
      %v971 = vld [vmem:[%s239 + $0x6c] sm:$0xf]
      %v972 = vld [vmem:[%s239 + $0x70] sm:$0xf]
      %v973 = vld [vmem:[%s239 + $0x74] sm:$0xf]
      %v974 = vld [vmem:[%s239 + $0x78] sm:$0xf]
      %v975 = vld [vmem:[%s239 + $0x7c] sm:$0xf]
      %v976 = vld [vmem:[%s239 + $0x80] sm:$0xf]
      %v977 = vld [vmem:[%s239 + $0x84] sm:$0xf]
      %s978 = scalar_lea.vmem %s2, 8
      %v979 = vld [vmem:[%s978] sm:$0x7]
      %v1014 = vunpack.c.l.b16 %v944
      %v1015 = vunpack.c.l.b16 %v945
      %v1016 = vunpack.c.l.b16 %v946
      %v1017 = vunpack.c.l.b16 %v947
      %v1018 = vunpack.c.l.b16 %v948
      %v1019 = vunpack.c.l.b16 %v949
      %v1020 = vunpack.c.l.b16 %v950
      %v1021 = vunpack.c.l.b16 %v951
      %v1022 = vunpack.c.l.b16 %v952
      %v1023 = vunpack.c.l.b16 %v953
      %v1024 = vunpack.c.l.b16 %v954
      %v1025 = vunpack.c.l.b16 %v955
      %v1026 = vunpack.c.l.b16 %v956
      %v1027 = vunpack.c.l.b16 %v957
      %v1028 = vunpack.c.l.b16 %v958
      %v1029 = vunpack.c.l.b16 %v959
      %v1030 = vunpack.c.l.b16 %v960
      %v1031 = vunpack.c.l.b16 %v961
      %v1032 = vunpack.c.l.b16 %v962
      %v1033 = vunpack.c.l.b16 %v963
      %v1034 = vunpack.c.l.b16 %v964
      %v1035 = vunpack.c.l.b16 %v965
      %v1036 = vunpack.c.l.b16 %v966
      %v1037 = vunpack.c.l.b16 %v967
      %v1038 = vunpack.c.l.b16 %v968
      %v1039 = vunpack.c.l.b16 %v969
      %v1040 = vunpack.c.l.b16 %v970
      %v1041 = vunpack.c.l.b16 %v971
      %v1042 = vunpack.c.l.b16 %v972
      %v1043 = vunpack.c.l.b16 %v973
      %v1044 = vunpack.c.l.b16 %v974
      %v1045 = vunpack.c.l.b16 %v975
      %v1046 = vunpack.c.l.b16 %v976
      %v1047 = vunpack.c.l.b16 %v977
      %v1048 = vpack.c.b16 %v1015, %v1014
      %v1049 = vpack.c.b16 %v1017, %v1016
      %v1050 = vpack.c.b16 %v1019, %v1018
      %v1051 = vpack.c.b16 %v1021, %v1020
      %v1052 = vpack.c.b16 %v1023, %v1022
      %v1053 = vpack.c.b16 %v1025, %v1024
      %v1054 = vpack.c.b16 %v1027, %v1026
      %v1055 = vpack.c.b16 %v1029, %v1028
      %v1056 = vpack.c.b16 %v1031, %v1030
      %v1057 = vpack.c.b16 %v1033, %v1032
      %v1058 = vpack.c.b16 %v1035, %v1034
      %v1059 = vpack.c.b16 %v1037, %v1036
      %v1060 = vpack.c.b16 %v1039, %v1038
      %v1061 = vpack.c.b16 %v1041, %v1040
      %v1062 = vpack.c.b16 %v1043, %v1042
      %v1063 = vpack.c.b16 %v1045, %v1044
      %v1064 = vpack.c.b16 %v1047, %v1046
      %v1066 = vsel %vm513, %v1048, 0
      %v1069 = vsel %vm513, %v1049, 0
      %v1072 = vsel %vm513, %v1050, 0
      %v1075 = vsel %vm513, %v1051, 0
      %v1078 = vsel %vm513, %v1052, 0
      %v1081 = vsel %vm513, %v1053, 0
      %v1084 = vsel %vm513, %v1054, 0
      %v1087 = vsel %vm513, %v1055, 0
      %v1090 = vsel %vm513, %v1056, 0
      %v1093 = vsel %vm513, %v1057, 0
      %v1096 = vsel %vm513, %v1058, 0
      %v1099 = vsel %vm513, %v1059, 0
      %v1102 = vsel %vm513, %v1060, 0
      %v1105 = vsel %vm513, %v1061, 0
      %v1108 = vsel %vm513, %v1062, 0
      %v1111 = vsel %vm513, %v1063, 0
      %v1114 = vsel %vm513, %v1064, 0
      %v1117 = vsel %vm565, %v979, 0
      %1119 = vmatprep.subr.bf16.mxu0 0
      %1120 = vmatpush1.bf16.msra.mxu0 0
      %1121 = vmatprep.subr.bf16.mxu0 0
      %1122 = vmatpush1.bf16.msra.mxu0 0
      %1123 = vmatprep.subr.bf16.mxu0 0
      %1124 = vmatpush1.bf16.msra.mxu0 0
      %1125 = vmatprep.subr.bf16.mxu0 0
      %1126 = vmatpush1.bf16.msra.mxu0 0
      %1127 = vmatprep.subr.bf16.mxu0 0
      %1128 = vmatpush1.bf16.msra.mxu0 0
      %1129 = vmatprep.subr.bf16.mxu0 0
      %1130 = vmatpush1.bf16.msra.mxu0 0
      %1131 = vmatprep.subr.bf16.mxu0 0
      %1132 = vmatpush1.bf16.msra.mxu0 0
      %1133 = vmatprep.subr.bf16.mxu0 0
      %1134 = vmatpush1.bf16.msra.mxu0 %v1117
      %1135 = vmatprep.subr.bf16.mxu0 0
      %1136 = vmatpush2.bf16.msra.mxu0 0
      %1137 = vmatprep.subr.bf16.mxu0 0
      %1138 = vmatpush2.bf16.msra.mxu0 0
      %1139 = vmatprep.subr.bf16.mxu0 0
      %1140 = vmatpush2.bf16.msra.mxu0 0
      %1141 = vmatprep.subr.bf16.mxu0 0
      %1142 = vmatpush2.bf16.msra.mxu0 0
      %1143 = vmatprep.subr.bf16.mxu0 0
      %1144 = vmatpush2.bf16.msra.mxu0 0
      %1145 = vmatprep.subr.bf16.mxu0 0
      %1146 = vmatpush2.bf16.msra.mxu0 0
      %1147 = vmatprep.subr.bf16.mxu0 0
      %1148 = vmatpush2.bf16.msra.mxu0 0
      %1149 = vmatprep.subr.bf16.mxu0 0
      %1150 = vmatpush2.bf16.msra.mxu0 0
      %1151 = vmatprep.mubr.bf16.mxu0 0
      %1152 = vmatmul.mubr.bf16.gmra.mxu0 %v1066
      %v1153 = vpop.f32.mrf.mxu0
      %v1154 = vadd.f32 0.0, %v1153
      %v1155 = vpop.f32.mrf.mxu0
      %v1156 = vpop.f32.mrf.mxu0
      %v1157 = vadd.f32 0.0, %v1156
      %v1158 = vpop.f32.mrf.mxu0
      %1159 = vmatprep.mubr.bf16.mxu0 0
      %1160 = vmatmul.mubr.bf16.gmra.mxu0 %v1069
      %v1161 = vpop.f32.mrf.mxu0
      %v1162 = vadd.f32 0.0, %v1161
      %v1163 = vpop.f32.mrf.mxu0
      %v1164 = vpop.f32.mrf.mxu0
      %v1165 = vadd.f32 0.0, %v1164
      %v1166 = vpop.f32.mrf.mxu0
      %1167 = vmatprep.mubr.bf16.mxu0 0
      %1168 = vmatmul.mubr.bf16.gmra.mxu0 %v1072
      %v1169 = vpop.f32.mrf.mxu0
      %v1170 = vadd.f32 0.0, %v1169
      %v1171 = vpop.f32.mrf.mxu0
      %v1172 = vpop.f32.mrf.mxu0
      %v1173 = vadd.f32 0.0, %v1172
      %v1174 = vpop.f32.mrf.mxu0
      %1175 = vmatprep.mubr.bf16.mxu0 0
      %1176 = vmatmul.mubr.bf16.gmra.mxu0 %v1075
      %v1177 = vpop.f32.mrf.mxu0
      %v1178 = vadd.f32 0.0, %v1177
      %v1179 = vpop.f32.mrf.mxu0
      %v1180 = vpop.f32.mrf.mxu0
      %v1181 = vadd.f32 0.0, %v1180
      %v1182 = vpop.f32.mrf.mxu0
      %1183 = vmatprep.mubr.bf16.mxu0 0
      %1184 = vmatmul.mubr.bf16.gmra.mxu0 %v1078
      %v1185 = vpop.f32.mrf.mxu0
      %v1186 = vadd.f32 0.0, %v1185
      %v1187 = vpop.f32.mrf.mxu0
      %v1188 = vpop.f32.mrf.mxu0
      %v1189 = vadd.f32 0.0, %v1188
      %v1190 = vpop.f32.mrf.mxu0
      %1191 = vmatprep.mubr.bf16.mxu0 0
      %1192 = vmatmul.mubr.bf16.gmra.mxu0 %v1081
      %v1193 = vpop.f32.mrf.mxu0
      %v1194 = vadd.f32 0.0, %v1193
      %v1195 = vpop.f32.mrf.mxu0
      %v1196 = vpop.f32.mrf.mxu0
      %v1197 = vadd.f32 0.0, %v1196
      %v1198 = vpop.f32.mrf.mxu0
      %1199 = vmatprep.mubr.bf16.mxu0 0
      %1200 = vmatmul.mubr.bf16.gmra.mxu0 %v1084
      %v1201 = vpop.f32.mrf.mxu0
      %v1202 = vadd.f32 0.0, %v1201
      %v1203 = vpop.f32.mrf.mxu0
      %v1204 = vpop.f32.mrf.mxu0
      %v1205 = vadd.f32 0.0, %v1204
      %v1206 = vpop.f32.mrf.mxu0
      %1207 = vmatprep.mubr.bf16.mxu0 0
      %1208 = vmatmul.mubr.bf16.gmra.mxu0 %v1087
      %v1209 = vpop.f32.mrf.mxu0
      %v1210 = vadd.f32 0.0, %v1209
      %v1211 = vpop.f32.mrf.mxu0
      %v1212 = vpop.f32.mrf.mxu0
      %v1213 = vadd.f32 0.0, %v1212
      %v1214 = vpop.f32.mrf.mxu0
      %1215 = vmatprep.mubr.bf16.mxu0 0
      %1216 = vmatmul.mubr.bf16.gmra.mxu0 %v1090
      %v1217 = vpop.f32.mrf.mxu0
      %v1218 = vadd.f32 0.0, %v1217
      %v1219 = vpop.f32.mrf.mxu0
      %v1220 = vpop.f32.mrf.mxu0
      %v1221 = vadd.f32 0.0, %v1220
      %v1222 = vpop.f32.mrf.mxu0
      %1223 = vmatprep.mubr.bf16.mxu0 0
      %1224 = vmatmul.mubr.bf16.gmra.mxu0 %v1093
      %v1225 = vpop.f32.mrf.mxu0
      %v1226 = vadd.f32 0.0, %v1225
      %v1227 = vpop.f32.mrf.mxu0
      %v1228 = vpop.f32.mrf.mxu0
      %v1229 = vadd.f32 0.0, %v1228
      %v1230 = vpop.f32.mrf.mxu0
      %1231 = vmatprep.mubr.bf16.mxu0 0
      %1232 = vmatmul.mubr.bf16.gmra.mxu0 %v1096
      %v1233 = vpop.f32.mrf.mxu0
      %v1234 = vadd.f32 0.0, %v1233
      %v1235 = vpop.f32.mrf.mxu0
      %v1236 = vpop.f32.mrf.mxu0
      %v1237 = vadd.f32 0.0, %v1236
      %v1238 = vpop.f32.mrf.mxu0
      %1239 = vmatprep.mubr.bf16.mxu0 0
      %1240 = vmatmul.mubr.bf16.gmra.mxu0 %v1099
      %v1241 = vpop.f32.mrf.mxu0
      %v1242 = vadd.f32 0.0, %v1241
      %v1243 = vpop.f32.mrf.mxu0
      %v1244 = vpop.f32.mrf.mxu0
      %v1245 = vadd.f32 0.0, %v1244
      %v1246 = vpop.f32.mrf.mxu0
      %1247 = vmatprep.mubr.bf16.mxu0 0
      %1248 = vmatmul.mubr.bf16.gmra.mxu0 %v1102
      %v1249 = vpop.f32.mrf.mxu0
      %v1250 = vadd.f32 0.0, %v1249
      %v1251 = vpop.f32.mrf.mxu0
      %v1252 = vpop.f32.mrf.mxu0
      %v1253 = vadd.f32 0.0, %v1252
      %v1254 = vpop.f32.mrf.mxu0
      %1255 = vmatprep.mubr.bf16.mxu0 0
      %1256 = vmatmul.mubr.bf16.gmra.mxu0 %v1105
      %v1257 = vpop.f32.mrf.mxu0
      %v1258 = vadd.f32 0.0, %v1257
      %v1259 = vpop.f32.mrf.mxu0
      %v1260 = vpop.f32.mrf.mxu0
      %v1261 = vadd.f32 0.0, %v1260
      %v1262 = vpop.f32.mrf.mxu0
      %1263 = vmatprep.mubr.bf16.mxu0 0
      %1264 = vmatmul.mubr.bf16.gmra.mxu0 %v1108
      %v1265 = vpop.f32.mrf.mxu0
      %v1266 = vadd.f32 0.0, %v1265
      %v1267 = vpop.f32.mrf.mxu0
      %v1268 = vpop.f32.mrf.mxu0
      %v1269 = vadd.f32 0.0, %v1268
      %v1270 = vpop.f32.mrf.mxu0
      %1271 = vmatprep.mubr.bf16.mxu0 0
      %1272 = vmatmul.mubr.bf16.gmra.mxu0 %v1111
      %v1273 = vpop.f32.mrf.mxu0
      %v1274 = vadd.f32 0.0, %v1273
      %v1275 = vpop.f32.mrf.mxu0
      %v1276 = vpop.f32.mrf.mxu0
      %v1277 = vadd.f32 0.0, %v1276
      %v1278 = vpop.f32.mrf.mxu0
      %1279 = vmatprep.mubr.bf16.mxu0 0
      %1280 = vmatmul.mubr.bf16.gmra.mxu0 %v1114
      %v1281 = vpop.f32.mrf.mxu0
      %v1282 = vadd.f32 0.0, %v1281
      %v1283 = vpop.f32.mrf.mxu0
      %v1284 = vpop.f32.mrf.mxu0
      %v1285 = vadd.f32 0.0, %v1284
      %v1286 = vpop.f32.mrf.mxu0
      %1287 = vdwg.mxu0
      %v1288 = vadd.f32 %v810, %v1154
      %v1289 = vadd.f32 %v813, %v1157
      %v1290 = vadd.f32 %v818, %v1162
      %v1291 = vadd.f32 %v821, %v1165
      %v1292 = vadd.f32 %v826, %v1170
      %v1293 = vadd.f32 %v829, %v1173
      %v1294 = vadd.f32 %v834, %v1178
      %v1295 = vadd.f32 %v837, %v1181
      %v1296 = vadd.f32 %v842, %v1186
      %v1297 = vadd.f32 %v845, %v1189
      %v1298 = vadd.f32 %v850, %v1194
      %v1299 = vadd.f32 %v853, %v1197
      %v1300 = vadd.f32 %v858, %v1202
      %v1301 = vadd.f32 %v861, %v1205
      %v1302 = vadd.f32 %v866, %v1210
      %v1303 = vadd.f32 %v869, %v1213
      %v1304 = vadd.f32 %v874, %v1218
      %v1305 = vadd.f32 %v877, %v1221
      %v1306 = vadd.f32 %v882, %v1226
      %v1307 = vadd.f32 %v885, %v1229
      %v1308 = vadd.f32 %v890, %v1234
      %v1309 = vadd.f32 %v893, %v1237
      %v1310 = vadd.f32 %v898, %v1242
      %v1311 = vadd.f32 %v901, %v1245
      %v1312 = vadd.f32 %v906, %v1250
      %v1313 = vadd.f32 %v909, %v1253
      %v1314 = vadd.f32 %v914, %v1258
      %v1315 = vadd.f32 %v917, %v1261
      %v1316 = vadd.f32 %v922, %v1266
      %v1317 = vadd.f32 %v925, %v1269
      %v1318 = vadd.f32 %v930, %v1274
      %v1319 = vadd.f32 %v933, %v1277
      %v1320 = vadd.f32 %v938, %v1282
      %v1321 = vadd.f32 %v941, %v1285
      %v1322 = vld [vmem:[%s239] sm:$0xf]
      %v1323 = vld [vmem:[%s239 + $0x4] sm:$0xf]
      %v1324 = vld [vmem:[%s239 + $0x8] sm:$0xf]
      %v1325 = vld [vmem:[%s239 + $0xc] sm:$0xf]
      %v1326 = vld [vmem:[%s239 + $0x10] sm:$0xf]
      %v1327 = vld [vmem:[%s239 + $0x14] sm:$0xf]
      %v1328 = vld [vmem:[%s239 + $0x18] sm:$0xf]
      %v1329 = vld [vmem:[%s239 + $0x1c] sm:$0xf]
      %v1330 = vld [vmem:[%s239 + $0x20] sm:$0xf]
      %v1331 = vld [vmem:[%s239 + $0x24] sm:$0xf]
      %v1332 = vld [vmem:[%s239 + $0x28] sm:$0xf]
      %v1333 = vld [vmem:[%s239 + $0x2c] sm:$0xf]
      %v1334 = vld [vmem:[%s239 + $0x30] sm:$0xf]
      %v1335 = vld [vmem:[%s239 + $0x34] sm:$0xf]
      %v1336 = vld [vmem:[%s239 + $0x38] sm:$0xf]
      %v1337 = vld [vmem:[%s239 + $0x3c] sm:$0xf]
      %v1338 = vld [vmem:[%s239 + $0x40] sm:$0xf]
      %v1339 = vld [vmem:[%s239 + $0x44] sm:$0xf]
      %v1340 = vld [vmem:[%s239 + $0x48] sm:$0xf]
      %v1341 = vld [vmem:[%s239 + $0x4c] sm:$0xf]
      %v1342 = vld [vmem:[%s239 + $0x50] sm:$0xf]
      %v1343 = vld [vmem:[%s239 + $0x54] sm:$0xf]
      %v1344 = vld [vmem:[%s239 + $0x58] sm:$0xf]
      %v1345 = vld [vmem:[%s239 + $0x5c] sm:$0xf]
      %v1346 = vld [vmem:[%s239 + $0x60] sm:$0xf]
      %v1347 = vld [vmem:[%s239 + $0x64] sm:$0xf]
      %v1348 = vld [vmem:[%s239 + $0x68] sm:$0xf]
      %v1349 = vld [vmem:[%s239 + $0x6c] sm:$0xf]
      %v1350 = vld [vmem:[%s239 + $0x70] sm:$0xf]
      %v1351 = vld [vmem:[%s239 + $0x74] sm:$0xf]
      %v1352 = vld [vmem:[%s239 + $0x78] sm:$0xf]
      %v1353 = vld [vmem:[%s239 + $0x7c] sm:$0xf]
      %v1354 = vld [vmem:[%s239 + $0x80] sm:$0xf]
      %v1355 = vld [vmem:[%s239 + $0x84] sm:$0xf]
      %v1356 = vld [vmem:[%s239 + $0x88] sm:$0x1]
      %s1357 = scalar_lea.vmem %s2, 12
      %v1358 = vld [vmem:[%s1357] sm:$0x7]
      %v1394 = vunpack.c.l.b16 %v1322
      %v1395 = vunpack.c.l.b16 %v1323
      %v1396 = vunpack.c.l.b16 %v1324
      %v1397 = vunpack.c.l.b16 %v1325
      %v1398 = vunpack.c.l.b16 %v1326
      %v1399 = vunpack.c.l.b16 %v1327
      %v1400 = vunpack.c.l.b16 %v1328
      %v1401 = vunpack.c.l.b16 %v1329
      %v1402 = vunpack.c.l.b16 %v1330
      %v1403 = vunpack.c.l.b16 %v1331
      %v1404 = vunpack.c.l.b16 %v1332
      %v1405 = vunpack.c.l.b16 %v1333
      %v1406 = vunpack.c.l.b16 %v1334
      %v1407 = vunpack.c.l.b16 %v1335
      %v1408 = vunpack.c.l.b16 %v1336
      %v1409 = vunpack.c.l.b16 %v1337
      %v1410 = vunpack.c.l.b16 %v1338
      %v1411 = vunpack.c.l.b16 %v1339
      %v1412 = vunpack.c.l.b16 %v1340
      %v1413 = vunpack.c.l.b16 %v1341
      %v1414 = vunpack.c.l.b16 %v1342
      %v1415 = vunpack.c.l.b16 %v1343
      %v1416 = vunpack.c.l.b16 %v1344
      %v1417 = vunpack.c.l.b16 %v1345
      %v1418 = vunpack.c.l.b16 %v1346
      %v1419 = vunpack.c.l.b16 %v1347
      %v1420 = vunpack.c.l.b16 %v1348
      %v1421 = vunpack.c.l.b16 %v1349
      %v1422 = vunpack.c.l.b16 %v1350
      %v1423 = vunpack.c.l.b16 %v1351
      %v1424 = vunpack.c.l.b16 %v1352
      %v1425 = vunpack.c.l.b16 %v1353
      %v1426 = vunpack.c.l.b16 %v1354
      %v1427 = vunpack.c.l.b16 %v1355
      %v1428 = vunpack.c.l.b16 %v1356
      %v1429 = vpack.c.b16 %v1395, %v1394
      %v1430 = vpack.c.b16 %v1397, %v1396
      %v1431 = vpack.c.b16 %v1399, %v1398
      %v1432 = vpack.c.b16 %v1401, %v1400
      %v1433 = vpack.c.b16 %v1403, %v1402
      %v1434 = vpack.c.b16 %v1405, %v1404
      %v1435 = vpack.c.b16 %v1407, %v1406
      %v1436 = vpack.c.b16 %v1409, %v1408
      %v1437 = vpack.c.b16 %v1411, %v1410
      %v1438 = vpack.c.b16 %v1413, %v1412
      %v1439 = vpack.c.b16 %v1415, %v1414
      %v1440 = vpack.c.b16 %v1417, %v1416
      %v1441 = vpack.c.b16 %v1419, %v1418
      %v1442 = vpack.c.b16 %v1421, %v1420
      %v1443 = vpack.c.b16 %v1423, %v1422
      %v1444 = vpack.c.b16 %v1425, %v1424
      %v1445 = vpack.c.b16 %v1427, %v1426
      %v1446 = vpack.c.b16 %v1428, %v1428
      %v1448 = vshrl.u32 %v1429, 16
      %v1450 = vshll.u32 %v1429, 16
      %v1452 = vrot.slane %v1450, 1
      %v1453 = vor.u32 %v1448, %v1452
      %v1455 = vshll.u32 %v1430, 16
      %v1457 = vrot.slane %v1455, 1
      %v1458 = vsel %vm372, %v1453, %v1457
      %v1459 = vshrl.u32 %v1430, 16
      %v1461 = vor.u32 %v1459, %v1457
      %v1463 = vshll.u32 %v1431, 16
      %v1465 = vrot.slane %v1463, 1
      %v1466 = vsel %vm372, %v1461, %v1465
      %v1467 = vshrl.u32 %v1431, 16
      %v1469 = vor.u32 %v1467, %v1465
      %v1471 = vshll.u32 %v1432, 16
      %v1473 = vrot.slane %v1471, 1
      %v1474 = vsel %vm372, %v1469, %v1473
      %v1475 = vshrl.u32 %v1432, 16
      %v1477 = vor.u32 %v1475, %v1473
      %v1479 = vshll.u32 %v1433, 16
      %v1481 = vrot.slane %v1479, 1
      %v1482 = vsel %vm372, %v1477, %v1481
      %v1483 = vshrl.u32 %v1433, 16
      %v1485 = vor.u32 %v1483, %v1481
      %v1487 = vshll.u32 %v1434, 16
      %v1489 = vrot.slane %v1487, 1
      %v1490 = vsel %vm372, %v1485, %v1489
      %v1491 = vshrl.u32 %v1434, 16
      %v1493 = vor.u32 %v1491, %v1489
      %v1495 = vshll.u32 %v1435, 16
      %v1497 = vrot.slane %v1495, 1
      %v1498 = vsel %vm372, %v1493, %v1497
      %v1499 = vshrl.u32 %v1435, 16
      %v1501 = vor.u32 %v1499, %v1497
      %v1503 = vshll.u32 %v1436, 16
      %v1505 = vrot.slane %v1503, 1
      %v1506 = vsel %vm372, %v1501, %v1505
      %v1507 = vshrl.u32 %v1436, 16
      %v1509 = vor.u32 %v1507, %v1505
      %v1511 = vshll.u32 %v1437, 16
      %v1513 = vrot.slane %v1511, 1
      %v1514 = vsel %vm372, %v1509, %v1513
      %v1515 = vshrl.u32 %v1437, 16
      %v1517 = vor.u32 %v1515, %v1513
      %v1519 = vshll.u32 %v1438, 16
      %v1521 = vrot.slane %v1519, 1
      %v1522 = vsel %vm372, %v1517, %v1521
      %v1523 = vshrl.u32 %v1438, 16
      %v1525 = vor.u32 %v1523, %v1521
      %v1527 = vshll.u32 %v1439, 16
      %v1529 = vrot.slane %v1527, 1
      %v1530 = vsel %vm372, %v1525, %v1529
      %v1531 = vshrl.u32 %v1439, 16
      %v1533 = vor.u32 %v1531, %v1529
      %v1535 = vshll.u32 %v1440, 16
      %v1537 = vrot.slane %v1535, 1
      %v1538 = vsel %vm372, %v1533, %v1537
      %v1539 = vshrl.u32 %v1440, 16
      %v1541 = vor.u32 %v1539, %v1537
      %v1543 = vshll.u32 %v1441, 16
      %v1545 = vrot.slane %v1543, 1
      %v1546 = vsel %vm372, %v1541, %v1545
      %v1547 = vshrl.u32 %v1441, 16
      %v1549 = vor.u32 %v1547, %v1545
      %v1551 = vshll.u32 %v1442, 16
      %v1553 = vrot.slane %v1551, 1
      %v1554 = vsel %vm372, %v1549, %v1553
      %v1555 = vshrl.u32 %v1442, 16
      %v1557 = vor.u32 %v1555, %v1553
      %v1559 = vshll.u32 %v1443, 16
      %v1561 = vrot.slane %v1559, 1
      %v1562 = vsel %vm372, %v1557, %v1561
      %v1563 = vshrl.u32 %v1443, 16
      %v1565 = vor.u32 %v1563, %v1561
      %v1567 = vshll.u32 %v1444, 16
      %v1569 = vrot.slane %v1567, 1
      %v1570 = vsel %vm372, %v1565, %v1569
      %v1571 = vshrl.u32 %v1444, 16
      %v1573 = vor.u32 %v1571, %v1569
      %v1575 = vshll.u32 %v1445, 16
      %v1577 = vrot.slane %v1575, 1
      %v1578 = vsel %vm372, %v1573, %v1577
      %v1579 = vshrl.u32 %v1445, 16
      %v1581 = vor.u32 %v1579, %v1577
      %v1583 = vshll.u32 %v1446, 16
      %v1585 = vrot.slane %v1583, 1
      %v1586 = vsel %vm372, %v1581, %v1585
      %v1588 = vsel %vm513, %v1458, 0
      %v1591 = vsel %vm513, %v1466, 0
      %v1594 = vsel %vm513, %v1474, 0
      %v1597 = vsel %vm513, %v1482, 0
      %v1600 = vsel %vm513, %v1490, 0
      %v1603 = vsel %vm513, %v1498, 0
      %v1606 = vsel %vm513, %v1506, 0
      %v1609 = vsel %vm513, %v1514, 0
      %v1612 = vsel %vm513, %v1522, 0
      %v1615 = vsel %vm513, %v1530, 0
      %v1618 = vsel %vm513, %v1538, 0
      %v1621 = vsel %vm513, %v1546, 0
      %v1624 = vsel %vm513, %v1554, 0
      %v1627 = vsel %vm513, %v1562, 0
      %v1630 = vsel %vm513, %v1570, 0
      %v1633 = vsel %vm513, %v1578, 0
      %v1636 = vsel %vm513, %v1586, 0
      %v1639 = vsel %vm565, %v1358, 0
      %1641 = vmatprep.subr.bf16.mxu0 0
      %1642 = vmatpush1.bf16.msra.mxu0 0
      %1643 = vmatprep.subr.bf16.mxu0 0
      %1644 = vmatpush1.bf16.msra.mxu0 0
      %1645 = vmatprep.subr.bf16.mxu0 0
      %1646 = vmatpush1.bf16.msra.mxu0 0
      %1647 = vmatprep.subr.bf16.mxu0 0
      %1648 = vmatpush1.bf16.msra.mxu0 0
      %1649 = vmatprep.subr.bf16.mxu0 0
      %1650 = vmatpush1.bf16.msra.mxu0 0
      %1651 = vmatprep.subr.bf16.mxu0 0
      %1652 = vmatpush1.bf16.msra.mxu0 0
      %1653 = vmatprep.subr.bf16.mxu0 0
      %1654 = vmatpush1.bf16.msra.mxu0 0
      %1655 = vmatprep.subr.bf16.mxu0 0
      %1656 = vmatpush1.bf16.msra.mxu0 %v1639
      %1657 = vmatprep.subr.bf16.mxu0 0
      %1658 = vmatpush2.bf16.msra.mxu0 0
      %1659 = vmatprep.subr.bf16.mxu0 0
      %1660 = vmatpush2.bf16.msra.mxu0 0
      %1661 = vmatprep.subr.bf16.mxu0 0
      %1662 = vmatpush2.bf16.msra.mxu0 0
      %1663 = vmatprep.subr.bf16.mxu0 0
      %1664 = vmatpush2.bf16.msra.mxu0 0
      %1665 = vmatprep.subr.bf16.mxu0 0
      %1666 = vmatpush2.bf16.msra.mxu0 0
      %1667 = vmatprep.subr.bf16.mxu0 0
      %1668 = vmatpush2.bf16.msra.mxu0 0
      %1669 = vmatprep.subr.bf16.mxu0 0
      %1670 = vmatpush2.bf16.msra.mxu0 0
      %1671 = vmatprep.subr.bf16.mxu0 0
      %1672 = vmatpush2.bf16.msra.mxu0 0
      %1673 = vmatprep.mubr.bf16.mxu0 0
      %1674 = vmatmul.mubr.bf16.gmra.mxu0 %v1588
      %v1675 = vpop.f32.mrf.mxu0
      %v1676 = vadd.f32 0.0, %v1675
      %v1677 = vpop.f32.mrf.mxu0
      %v1678 = vpop.f32.mrf.mxu0
      %v1679 = vadd.f32 0.0, %v1678
      %v1680 = vpop.f32.mrf.mxu0
      %1681 = vmatprep.mubr.bf16.mxu0 0
      %1682 = vmatmul.mubr.bf16.gmra.mxu0 %v1591
      %v1683 = vpop.f32.mrf.mxu0
      %v1684 = vadd.f32 0.0, %v1683
      %v1685 = vpop.f32.mrf.mxu0
      %v1686 = vpop.f32.mrf.mxu0
      %v1687 = vadd.f32 0.0, %v1686
      %v1688 = vpop.f32.mrf.mxu0
      %1689 = vmatprep.mubr.bf16.mxu0 0
      %1690 = vmatmul.mubr.bf16.gmra.mxu0 %v1594
      %v1691 = vpop.f32.mrf.mxu0
      %v1692 = vadd.f32 0.0, %v1691
      %v1693 = vpop.f32.mrf.mxu0
      %v1694 = vpop.f32.mrf.mxu0
      %v1695 = vadd.f32 0.0, %v1694
      %v1696 = vpop.f32.mrf.mxu0
      %1697 = vmatprep.mubr.bf16.mxu0 0
      %1698 = vmatmul.mubr.bf16.gmra.mxu0 %v1597
      %v1699 = vpop.f32.mrf.mxu0
      %v1700 = vadd.f32 0.0, %v1699
      %v1701 = vpop.f32.mrf.mxu0
      %v1702 = vpop.f32.mrf.mxu0
      %v1703 = vadd.f32 0.0, %v1702
      %v1704 = vpop.f32.mrf.mxu0
      %1705 = vmatprep.mubr.bf16.mxu0 0
      %1706 = vmatmul.mubr.bf16.gmra.mxu0 %v1600
      %v1707 = vpop.f32.mrf.mxu0
      %v1708 = vadd.f32 0.0, %v1707
      %v1709 = vpop.f32.mrf.mxu0
      %v1710 = vpop.f32.mrf.mxu0
      %v1711 = vadd.f32 0.0, %v1710
      %v1712 = vpop.f32.mrf.mxu0
      %1713 = vmatprep.mubr.bf16.mxu0 0
      %1714 = vmatmul.mubr.bf16.gmra.mxu0 %v1603
      %v1715 = vpop.f32.mrf.mxu0
      %v1716 = vadd.f32 0.0, %v1715
      %v1717 = vpop.f32.mrf.mxu0
      %v1718 = vpop.f32.mrf.mxu0
      %v1719 = vadd.f32 0.0, %v1718
      %v1720 = vpop.f32.mrf.mxu0
      %1721 = vmatprep.mubr.bf16.mxu0 0
      %1722 = vmatmul.mubr.bf16.gmra.mxu0 %v1606
      %v1723 = vpop.f32.mrf.mxu0
      %v1724 = vadd.f32 0.0, %v1723
      %v1725 = vpop.f32.mrf.mxu0
      %v1726 = vpop.f32.mrf.mxu0
      %v1727 = vadd.f32 0.0, %v1726
      %v1728 = vpop.f32.mrf.mxu0
      %1729 = vmatprep.mubr.bf16.mxu0 0
      %1730 = vmatmul.mubr.bf16.gmra.mxu0 %v1609
      %v1731 = vpop.f32.mrf.mxu0
      %v1732 = vadd.f32 0.0, %v1731
      %v1733 = vpop.f32.mrf.mxu0
      %v1734 = vpop.f32.mrf.mxu0
      %v1735 = vadd.f32 0.0, %v1734
      %v1736 = vpop.f32.mrf.mxu0
      %1737 = vmatprep.mubr.bf16.mxu0 0
      %1738 = vmatmul.mubr.bf16.gmra.mxu0 %v1612
      %v1739 = vpop.f32.mrf.mxu0
      %v1740 = vadd.f32 0.0, %v1739
      %v1741 = vpop.f32.mrf.mxu0
      %v1742 = vpop.f32.mrf.mxu0
      %v1743 = vadd.f32 0.0, %v1742
      %v1744 = vpop.f32.mrf.mxu0
      %1745 = vmatprep.mubr.bf16.mxu0 0
      %1746 = vmatmul.mubr.bf16.gmra.mxu0 %v1615
      %v1747 = vpop.f32.mrf.mxu0
      %v1748 = vadd.f32 0.0, %v1747
      %v1749 = vpop.f32.mrf.mxu0
      %v1750 = vpop.f32.mrf.mxu0
      %v1751 = vadd.f32 0.0, %v1750
      %v1752 = vpop.f32.mrf.mxu0
      %1753 = vmatprep.mubr.bf16.mxu0 0
      %1754 = vmatmul.mubr.bf16.gmra.mxu0 %v1618
      %v1755 = vpop.f32.mrf.mxu0
      %v1756 = vadd.f32 0.0, %v1755
      %v1757 = vpop.f32.mrf.mxu0
      %v1758 = vpop.f32.mrf.mxu0
      %v1759 = vadd.f32 0.0, %v1758
      %v1760 = vpop.f32.mrf.mxu0
      %1761 = vmatprep.mubr.bf16.mxu0 0
      %1762 = vmatmul.mubr.bf16.gmra.mxu0 %v1621
      %v1763 = vpop.f32.mrf.mxu0
      %v1764 = vadd.f32 0.0, %v1763
      %v1765 = vpop.f32.mrf.mxu0
      %v1766 = vpop.f32.mrf.mxu0
      %v1767 = vadd.f32 0.0, %v1766
      %v1768 = vpop.f32.mrf.mxu0
      %1769 = vmatprep.mubr.bf16.mxu0 0
      %1770 = vmatmul.mubr.bf16.gmra.mxu0 %v1624
      %v1771 = vpop.f32.mrf.mxu0
      %v1772 = vadd.f32 0.0, %v1771
      %v1773 = vpop.f32.mrf.mxu0
      %v1774 = vpop.f32.mrf.mxu0
      %v1775 = vadd.f32 0.0, %v1774
      %v1776 = vpop.f32.mrf.mxu0
      %1777 = vmatprep.mubr.bf16.mxu0 0
      %1778 = vmatmul.mubr.bf16.gmra.mxu0 %v1627
      %v1779 = vpop.f32.mrf.mxu0
      %v1780 = vadd.f32 0.0, %v1779
      %v1781 = vpop.f32.mrf.mxu0
      %v1782 = vpop.f32.mrf.mxu0
      %v1783 = vadd.f32 0.0, %v1782
      %v1784 = vpop.f32.mrf.mxu0
      %1785 = vmatprep.mubr.bf16.mxu0 0
      %1786 = vmatmul.mubr.bf16.gmra.mxu0 %v1630
      %v1787 = vpop.f32.mrf.mxu0
      %v1788 = vadd.f32 0.0, %v1787
      %v1789 = vpop.f32.mrf.mxu0
      %v1790 = vpop.f32.mrf.mxu0
      %v1791 = vadd.f32 0.0, %v1790
      %v1792 = vpop.f32.mrf.mxu0
      %1793 = vmatprep.mubr.bf16.mxu0 0
      %1794 = vmatmul.mubr.bf16.gmra.mxu0 %v1633
      %v1795 = vpop.f32.mrf.mxu0
      %v1796 = vadd.f32 0.0, %v1795
      %v1797 = vpop.f32.mrf.mxu0
      %v1798 = vpop.f32.mrf.mxu0
      %v1799 = vadd.f32 0.0, %v1798
      %v1800 = vpop.f32.mrf.mxu0
      %1801 = vmatprep.mubr.bf16.mxu0 0
      %1802 = vmatmul.mubr.bf16.gmra.mxu0 %v1636
      %v1803 = vpop.f32.mrf.mxu0
      %v1804 = vadd.f32 0.0, %v1803
      %v1805 = vpop.f32.mrf.mxu0
      %v1806 = vpop.f32.mrf.mxu0
      %v1807 = vadd.f32 0.0, %v1806
      %v1808 = vpop.f32.mrf.mxu0
      %1809 = vdwg.mxu0
      %v1810 = vadd.f32 %v1288, %v1676
      %v1811 = vadd.f32 %v1289, %v1679
      %v1812 = vadd.f32 %v1290, %v1684
      %v1813 = vadd.f32 %v1291, %v1687
      %v1814 = vadd.f32 %v1292, %v1692
      %v1815 = vadd.f32 %v1293, %v1695
      %v1816 = vadd.f32 %v1294, %v1700
      %v1817 = vadd.f32 %v1295, %v1703
      %v1818 = vadd.f32 %v1296, %v1708
      %v1819 = vadd.f32 %v1297, %v1711
      %v1820 = vadd.f32 %v1298, %v1716
      %v1821 = vadd.f32 %v1299, %v1719
      %v1822 = vadd.f32 %v1300, %v1724
      %v1823 = vadd.f32 %v1301, %v1727
      %v1824 = vadd.f32 %v1302, %v1732
      %v1825 = vadd.f32 %v1303, %v1735
      %v1826 = vadd.f32 %v1304, %v1740
      %v1827 = vadd.f32 %v1305, %v1743
      %v1828 = vadd.f32 %v1306, %v1748
      %v1829 = vadd.f32 %v1307, %v1751
      %v1830 = vadd.f32 %v1308, %v1756
      %v1831 = vadd.f32 %v1309, %v1759
      %v1832 = vadd.f32 %v1310, %v1764
      %v1833 = vadd.f32 %v1311, %v1767
      %v1834 = vadd.f32 %v1312, %v1772
      %v1835 = vadd.f32 %v1313, %v1775
      %v1836 = vadd.f32 %v1314, %v1780
      %v1837 = vadd.f32 %v1315, %v1783
      %v1838 = vadd.f32 %v1316, %v1788
      %v1839 = vadd.f32 %v1317, %v1791
      %v1840 = vadd.f32 %v1318, %v1796
      %v1841 = vadd.f32 %v1319, %v1799
      %v1842 = vadd.f32 %v1320, %v1804
      %v1843 = vadd.f32 %v1321, %v1807
      %v1844 = vld [vmem:[%s234 + $0x8] sm:$0xf]
      %v1845 = vld [vmem:[%s234 + $0xc] sm:$0xf]
      %v1846 = vld [vmem:[%s234 + $0x10] sm:$0xf]
      %v1847 = vld [vmem:[%s234 + $0x14] sm:$0xf]
      %v1848 = vld [vmem:[%s234 + $0x18] sm:$0xf]
      %v1849 = vld [vmem:[%s234 + $0x1c] sm:$0xf]
      %v1850 = vld [vmem:[%s234 + $0x20] sm:$0xf]
      %v1851 = vld [vmem:[%s234 + $0x24] sm:$0xf]
      %v1852 = vld [vmem:[%s234 + $0x28] sm:$0xf]
      %v1853 = vld [vmem:[%s234 + $0x2c] sm:$0xf]
      %v1854 = vld [vmem:[%s234 + $0x30] sm:$0xf]
      %v1855 = vld [vmem:[%s234 + $0x34] sm:$0xf]
      %v1856 = vld [vmem:[%s234 + $0x38] sm:$0xf]
      %v1857 = vld [vmem:[%s234 + $0x3c] sm:$0xf]
      %v1858 = vld [vmem:[%s234 + $0x40] sm:$0xf]
      %v1859 = vld [vmem:[%s234 + $0x44] sm:$0xf]
      %v1860 = vld [vmem:[%s234 + $0x48] sm:$0xf]
      %v1861 = vld [vmem:[%s234 + $0x4c] sm:$0xf]
      %v1862 = vld [vmem:[%s234 + $0x50] sm:$0xf]
      %v1863 = vld [vmem:[%s234 + $0x54] sm:$0xf]
      %v1864 = vld [vmem:[%s234 + $0x58] sm:$0xf]
      %v1865 = vld [vmem:[%s234 + $0x5c] sm:$0xf]
      %v1866 = vld [vmem:[%s234 + $0x60] sm:$0xf]
      %v1867 = vld [vmem:[%s234 + $0x64] sm:$0xf]
      %v1868 = vld [vmem:[%s234 + $0x68] sm:$0xf]
      %v1869 = vld [vmem:[%s234 + $0x6c] sm:$0xf]
      %v1870 = vld [vmem:[%s234 + $0x70] sm:$0xf]
      %v1871 = vld [vmem:[%s234 + $0x74] sm:$0xf]
      %v1872 = vld [vmem:[%s234 + $0x78] sm:$0xf]
      %v1873 = vld [vmem:[%s234 + $0x7c] sm:$0xf]
      %v1874 = vld [vmem:[%s234 + $0x80] sm:$0xf]
      %v1875 = vld [vmem:[%s234 + $0x84] sm:$0xf]
      %v1876 = vld [vmem:[%s234 + $0x88] sm:$0xf]
      %v1877 = vld [vmem:[%s234 + $0x8c] sm:$0xf]
      %v1878 = vld [vmem:[%s234 + $0x90] sm:$0x1]
      %s1879 = scalar_lea.vmem %s2, 16
      %v1880 = vld [vmem:[%s1879] sm:$0x7]
      %v1916 = vunpack.c.l.b16 %v1844
      %v1917 = vunpack.c.l.b16 %v1845
      %v1918 = vunpack.c.l.b16 %v1846
      %v1919 = vunpack.c.l.b16 %v1847
      %v1920 = vunpack.c.l.b16 %v1848
      %v1921 = vunpack.c.l.b16 %v1849
      %v1922 = vunpack.c.l.b16 %v1850
      %v1923 = vunpack.c.l.b16 %v1851
      %v1924 = vunpack.c.l.b16 %v1852
      %v1925 = vunpack.c.l.b16 %v1853
      %v1926 = vunpack.c.l.b16 %v1854
      %v1927 = vunpack.c.l.b16 %v1855
      %v1928 = vunpack.c.l.b16 %v1856
      %v1929 = vunpack.c.l.b16 %v1857
      %v1930 = vunpack.c.l.b16 %v1858
      %v1931 = vunpack.c.l.b16 %v1859
      %v1932 = vunpack.c.l.b16 %v1860
      %v1933 = vunpack.c.l.b16 %v1861
      %v1934 = vunpack.c.l.b16 %v1862
      %v1935 = vunpack.c.l.b16 %v1863
      %v1936 = vunpack.c.l.b16 %v1864
      %v1937 = vunpack.c.l.b16 %v1865
      %v1938 = vunpack.c.l.b16 %v1866
      %v1939 = vunpack.c.l.b16 %v1867
      %v1940 = vunpack.c.l.b16 %v1868
      %v1941 = vunpack.c.l.b16 %v1869
      %v1942 = vunpack.c.l.b16 %v1870
      %v1943 = vunpack.c.l.b16 %v1871
      %v1944 = vunpack.c.l.b16 %v1872
      %v1945 = vunpack.c.l.b16 %v1873
      %v1946 = vunpack.c.l.b16 %v1874
      %v1947 = vunpack.c.l.b16 %v1875
      %v1948 = vunpack.c.l.b16 %v1876
      %v1949 = vunpack.c.l.b16 %v1877
      %v1950 = vunpack.c.l.b16 %v1878
      %v1951 = vpack.c.b16 %v1917, %v1916
      %v1952 = vpack.c.b16 %v1919, %v1918
      %v1953 = vpack.c.b16 %v1921, %v1920
      %v1954 = vpack.c.b16 %v1923, %v1922
      %v1955 = vpack.c.b16 %v1925, %v1924
      %v1956 = vpack.c.b16 %v1927, %v1926
      %v1957 = vpack.c.b16 %v1929, %v1928
      %v1958 = vpack.c.b16 %v1931, %v1930
      %v1959 = vpack.c.b16 %v1933, %v1932
      %v1960 = vpack.c.b16 %v1935, %v1934
      %v1961 = vpack.c.b16 %v1937, %v1936
      %v1962 = vpack.c.b16 %v1939, %v1938
      %v1963 = vpack.c.b16 %v1941, %v1940
      %v1964 = vpack.c.b16 %v1943, %v1942
      %v1965 = vpack.c.b16 %v1945, %v1944
      %v1966 = vpack.c.b16 %v1947, %v1946
      %v1967 = vpack.c.b16 %v1949, %v1948
      %v1968 = vpack.c.b16 %v1950, %v1950
      %v1970 = vshrl.u32 %v1951, 16
      %v1972 = vshll.u32 %v1951, 16
      %v1974 = vrot.slane %v1972, 1
      %v1975 = vor.u32 %v1970, %v1974
      %v1977 = vshll.u32 %v1952, 16
      %v1979 = vrot.slane %v1977, 1
      %v1980 = vsel %vm372, %v1975, %v1979
      %v1981 = vshrl.u32 %v1952, 16
      %v1983 = vor.u32 %v1981, %v1979
      %v1985 = vshll.u32 %v1953, 16
      %v1987 = vrot.slane %v1985, 1
      %v1988 = vsel %vm372, %v1983, %v1987
      %v1989 = vshrl.u32 %v1953, 16
      %v1991 = vor.u32 %v1989, %v1987
      %v1993 = vshll.u32 %v1954, 16
      %v1995 = vrot.slane %v1993, 1
      %v1996 = vsel %vm372, %v1991, %v1995
      %v1997 = vshrl.u32 %v1954, 16
      %v1999 = vor.u32 %v1997, %v1995
      %v2001 = vshll.u32 %v1955, 16
      %v2003 = vrot.slane %v2001, 1
      %v2004 = vsel %vm372, %v1999, %v2003
      %v2005 = vshrl.u32 %v1955, 16
      %v2007 = vor.u32 %v2005, %v2003
      %v2009 = vshll.u32 %v1956, 16
      %v2011 = vrot.slane %v2009, 1
      %v2012 = vsel %vm372, %v2007, %v2011
      %v2013 = vshrl.u32 %v1956, 16
      %v2015 = vor.u32 %v2013, %v2011
      %v2017 = vshll.u32 %v1957, 16
      %v2019 = vrot.slane %v2017, 1
      %v2020 = vsel %vm372, %v2015, %v2019
      %v2021 = vshrl.u32 %v1957, 16
      %v2023 = vor.u32 %v2021, %v2019
      %v2025 = vshll.u32 %v1958, 16
      %v2027 = vrot.slane %v2025, 1
      %v2028 = vsel %vm372, %v2023, %v2027
      %v2029 = vshrl.u32 %v1958, 16
      %v2031 = vor.u32 %v2029, %v2027
      %v2033 = vshll.u32 %v1959, 16
      %v2035 = vrot.slane %v2033, 1
      %v2036 = vsel %vm372, %v2031, %v2035
      %v2037 = vshrl.u32 %v1959, 16
      %v2039 = vor.u32 %v2037, %v2035
      %v2041 = vshll.u32 %v1960, 16
      %v2043 = vrot.slane %v2041, 1
      %v2044 = vsel %vm372, %v2039, %v2043
      %v2045 = vshrl.u32 %v1960, 16
      %v2047 = vor.u32 %v2045, %v2043
      %v2049 = vshll.u32 %v1961, 16
      %v2051 = vrot.slane %v2049, 1
      %v2052 = vsel %vm372, %v2047, %v2051
      %v2053 = vshrl.u32 %v1961, 16
      %v2055 = vor.u32 %v2053, %v2051
      %v2057 = vshll.u32 %v1962, 16
      %v2059 = vrot.slane %v2057, 1
      %v2060 = vsel %vm372, %v2055, %v2059
      %v2061 = vshrl.u32 %v1962, 16
      %v2063 = vor.u32 %v2061, %v2059
      %v2065 = vshll.u32 %v1963, 16
      %v2067 = vrot.slane %v2065, 1
      %v2068 = vsel %vm372, %v2063, %v2067
      %v2069 = vshrl.u32 %v1963, 16
      %v2071 = vor.u32 %v2069, %v2067
      %v2073 = vshll.u32 %v1964, 16
      %v2075 = vrot.slane %v2073, 1
      %v2076 = vsel %vm372, %v2071, %v2075
      %v2077 = vshrl.u32 %v1964, 16
      %v2079 = vor.u32 %v2077, %v2075
      %v2081 = vshll.u32 %v1965, 16
      %v2083 = vrot.slane %v2081, 1
      %v2084 = vsel %vm372, %v2079, %v2083
      %v2085 = vshrl.u32 %v1965, 16
      %v2087 = vor.u32 %v2085, %v2083
      %v2089 = vshll.u32 %v1966, 16
      %v2091 = vrot.slane %v2089, 1
      %v2092 = vsel %vm372, %v2087, %v2091
      %v2093 = vshrl.u32 %v1966, 16
      %v2095 = vor.u32 %v2093, %v2091
      %v2097 = vshll.u32 %v1967, 16
      %v2099 = vrot.slane %v2097, 1
      %v2100 = vsel %vm372, %v2095, %v2099
      %v2101 = vshrl.u32 %v1967, 16
      %v2103 = vor.u32 %v2101, %v2099
      %v2105 = vshll.u32 %v1968, 16
      %v2107 = vrot.slane %v2105, 1
      %v2108 = vsel %vm372, %v2103, %v2107
      %v2110 = vsel %vm513, %v1980, 0
      %v2113 = vsel %vm513, %v1988, 0
      %v2116 = vsel %vm513, %v1996, 0
      %v2119 = vsel %vm513, %v2004, 0
      %v2122 = vsel %vm513, %v2012, 0
      %v2125 = vsel %vm513, %v2020, 0
      %v2128 = vsel %vm513, %v2028, 0
      %v2131 = vsel %vm513, %v2036, 0
      %v2134 = vsel %vm513, %v2044, 0
      %v2137 = vsel %vm513, %v2052, 0
      %v2140 = vsel %vm513, %v2060, 0
      %v2143 = vsel %vm513, %v2068, 0
      %v2146 = vsel %vm513, %v2076, 0
      %v2149 = vsel %vm513, %v2084, 0
      %v2152 = vsel %vm513, %v2092, 0
      %v2155 = vsel %vm513, %v2100, 0
      %v2158 = vsel %vm513, %v2108, 0
      %v2161 = vsel %vm565, %v1880, 0
      %2163 = vmatprep.subr.bf16.mxu0 0
      %2164 = vmatpush1.bf16.msra.mxu0 0
      %2165 = vmatprep.subr.bf16.mxu0 0
      %2166 = vmatpush1.bf16.msra.mxu0 0
      %2167 = vmatprep.subr.bf16.mxu0 0
      %2168 = vmatpush1.bf16.msra.mxu0 0
      %2169 = vmatprep.subr.bf16.mxu0 0
      %2170 = vmatpush1.bf16.msra.mxu0 0
      %2171 = vmatprep.subr.bf16.mxu0 0
      %2172 = vmatpush1.bf16.msra.mxu0 0
      %2173 = vmatprep.subr.bf16.mxu0 0
      %2174 = vmatpush1.bf16.msra.mxu0 0
      %2175 = vmatprep.subr.bf16.mxu0 0
      %2176 = vmatpush1.bf16.msra.mxu0 0
      %2177 = vmatprep.subr.bf16.mxu0 0
      %2178 = vmatpush1.bf16.msra.mxu0 %v2161
      %2179 = vmatprep.subr.bf16.mxu0 0
      %2180 = vmatpush2.bf16.msra.mxu0 0
      %2181 = vmatprep.subr.bf16.mxu0 0
      %2182 = vmatpush2.bf16.msra.mxu0 0
      %2183 = vmatprep.subr.bf16.mxu0 0
      %2184 = vmatpush2.bf16.msra.mxu0 0
      %2185 = vmatprep.subr.bf16.mxu0 0
      %2186 = vmatpush2.bf16.msra.mxu0 0
      %2187 = vmatprep.subr.bf16.mxu0 0
      %2188 = vmatpush2.bf16.msra.mxu0 0
      %2189 = vmatprep.subr.bf16.mxu0 0
      %2190 = vmatpush2.bf16.msra.mxu0 0
      %2191 = vmatprep.subr.bf16.mxu0 0
      %2192 = vmatpush2.bf16.msra.mxu0 0
      %2193 = vmatprep.subr.bf16.mxu0 0
      %2194 = vmatpush2.bf16.msra.mxu0 0
      %2195 = vmatprep.mubr.bf16.mxu0 0
      %2196 = vmatmul.mubr.bf16.gmra.mxu0 %v2110
      %v2197 = vpop.f32.mrf.mxu0
      %v2198 = vadd.f32 0.0, %v2197
      %v2199 = vpop.f32.mrf.mxu0
      %v2200 = vpop.f32.mrf.mxu0
      %v2201 = vadd.f32 0.0, %v2200
      %v2202 = vpop.f32.mrf.mxu0
      %2203 = vmatprep.mubr.bf16.mxu0 0
      %2204 = vmatmul.mubr.bf16.gmra.mxu0 %v2113
      %v2205 = vpop.f32.mrf.mxu0
      %v2206 = vadd.f32 0.0, %v2205
      %v2207 = vpop.f32.mrf.mxu0
      %v2208 = vpop.f32.mrf.mxu0
      %v2209 = vadd.f32 0.0, %v2208
      %v2210 = vpop.f32.mrf.mxu0
      %2211 = vmatprep.mubr.bf16.mxu0 0
      %2212 = vmatmul.mubr.bf16.gmra.mxu0 %v2116
      %v2213 = vpop.f32.mrf.mxu0
      %v2214 = vadd.f32 0.0, %v2213
      %v2215 = vpop.f32.mrf.mxu0
      %v2216 = vpop.f32.mrf.mxu0
      %v2217 = vadd.f32 0.0, %v2216
      %v2218 = vpop.f32.mrf.mxu0
      %2219 = vmatprep.mubr.bf16.mxu0 0
      %2220 = vmatmul.mubr.bf16.gmra.mxu0 %v2119
      %v2221 = vpop.f32.mrf.mxu0
      %v2222 = vadd.f32 0.0, %v2221
      %v2223 = vpop.f32.mrf.mxu0
      %v2224 = vpop.f32.mrf.mxu0
      %v2225 = vadd.f32 0.0, %v2224
      %v2226 = vpop.f32.mrf.mxu0
      %2227 = vmatprep.mubr.bf16.mxu0 0
      %2228 = vmatmul.mubr.bf16.gmra.mxu0 %v2122
      %v2229 = vpop.f32.mrf.mxu0
      %v2230 = vadd.f32 0.0, %v2229
      %v2231 = vpop.f32.mrf.mxu0
      %v2232 = vpop.f32.mrf.mxu0
      %v2233 = vadd.f32 0.0, %v2232
      %v2234 = vpop.f32.mrf.mxu0
      %2235 = vmatprep.mubr.bf16.mxu0 0
      %2236 = vmatmul.mubr.bf16.gmra.mxu0 %v2125
      %v2237 = vpop.f32.mrf.mxu0
      %v2238 = vadd.f32 0.0, %v2237
      %v2239 = vpop.f32.mrf.mxu0
      %v2240 = vpop.f32.mrf.mxu0
      %v2241 = vadd.f32 0.0, %v2240
      %v2242 = vpop.f32.mrf.mxu0
      %2243 = vmatprep.mubr.bf16.mxu0 0
      %2244 = vmatmul.mubr.bf16.gmra.mxu0 %v2128
      %v2245 = vpop.f32.mrf.mxu0
      %v2246 = vadd.f32 0.0, %v2245
      %v2247 = vpop.f32.mrf.mxu0
      %v2248 = vpop.f32.mrf.mxu0
      %v2249 = vadd.f32 0.0, %v2248
      %v2250 = vpop.f32.mrf.mxu0
      %2251 = vmatprep.mubr.bf16.mxu0 0
      %2252 = vmatmul.mubr.bf16.gmra.mxu0 %v2131
      %v2253 = vpop.f32.mrf.mxu0
      %v2254 = vadd.f32 0.0, %v2253
      %v2255 = vpop.f32.mrf.mxu0
      %v2256 = vpop.f32.mrf.mxu0
      %v2257 = vadd.f32 0.0, %v2256
      %v2258 = vpop.f32.mrf.mxu0
      %2259 = vmatprep.mubr.bf16.mxu0 0
      %2260 = vmatmul.mubr.bf16.gmra.mxu0 %v2134
      %v2261 = vpop.f32.mrf.mxu0
      %v2262 = vadd.f32 0.0, %v2261
      %v2263 = vpop.f32.mrf.mxu0
      %v2264 = vpop.f32.mrf.mxu0
      %v2265 = vadd.f32 0.0, %v2264
      %v2266 = vpop.f32.mrf.mxu0
      %2267 = vmatprep.mubr.bf16.mxu0 0
      %2268 = vmatmul.mubr.bf16.gmra.mxu0 %v2137
      %v2269 = vpop.f32.mrf.mxu0
      %v2270 = vadd.f32 0.0, %v2269
      %v2271 = vpop.f32.mrf.mxu0
      %v2272 = vpop.f32.mrf.mxu0
      %v2273 = vadd.f32 0.0, %v2272
      %v2274 = vpop.f32.mrf.mxu0
      %2275 = vmatprep.mubr.bf16.mxu0 0
      %2276 = vmatmul.mubr.bf16.gmra.mxu0 %v2140
      %v2277 = vpop.f32.mrf.mxu0
      %v2278 = vadd.f32 0.0, %v2277
      %v2279 = vpop.f32.mrf.mxu0
      %v2280 = vpop.f32.mrf.mxu0
      %v2281 = vadd.f32 0.0, %v2280
      %v2282 = vpop.f32.mrf.mxu0
      %2283 = vmatprep.mubr.bf16.mxu0 0
      %2284 = vmatmul.mubr.bf16.gmra.mxu0 %v2143
      %v2285 = vpop.f32.mrf.mxu0
      %v2286 = vadd.f32 0.0, %v2285
      %v2287 = vpop.f32.mrf.mxu0
      %v2288 = vpop.f32.mrf.mxu0
      %v2289 = vadd.f32 0.0, %v2288
      %v2290 = vpop.f32.mrf.mxu0
      %2291 = vmatprep.mubr.bf16.mxu0 0
      %2292 = vmatmul.mubr.bf16.gmra.mxu0 %v2146
      %v2293 = vpop.f32.mrf.mxu0
      %v2294 = vadd.f32 0.0, %v2293
      %v2295 = vpop.f32.mrf.mxu0
      %v2296 = vpop.f32.mrf.mxu0
      %v2297 = vadd.f32 0.0, %v2296
      %v2298 = vpop.f32.mrf.mxu0
      %2299 = vmatprep.mubr.bf16.mxu0 0
      %2300 = vmatmul.mubr.bf16.gmra.mxu0 %v2149
      %v2301 = vpop.f32.mrf.mxu0
      %v2302 = vadd.f32 0.0, %v2301
      %v2303 = vpop.f32.mrf.mxu0
      %v2304 = vpop.f32.mrf.mxu0
      %v2305 = vadd.f32 0.0, %v2304
      %v2306 = vpop.f32.mrf.mxu0
      %2307 = vmatprep.mubr.bf16.mxu0 0
      %2308 = vmatmul.mubr.bf16.gmra.mxu0 %v2152
      %v2309 = vpop.f32.mrf.mxu0
      %v2310 = vadd.f32 0.0, %v2309
      %v2311 = vpop.f32.mrf.mxu0
      %v2312 = vpop.f32.mrf.mxu0
      %v2313 = vadd.f32 0.0, %v2312
      %v2314 = vpop.f32.mrf.mxu0
      %2315 = vmatprep.mubr.bf16.mxu0 0
      %2316 = vmatmul.mubr.bf16.gmra.mxu0 %v2155
      %v2317 = vpop.f32.mrf.mxu0
      %v2318 = vadd.f32 0.0, %v2317
      %v2319 = vpop.f32.mrf.mxu0
      %v2320 = vpop.f32.mrf.mxu0
      %v2321 = vadd.f32 0.0, %v2320
      %v2322 = vpop.f32.mrf.mxu0
      %2323 = vmatprep.mubr.bf16.mxu0 0
      %2324 = vmatmul.mubr.bf16.gmra.mxu0 %v2158
      %v2325 = vpop.f32.mrf.mxu0
      %v2326 = vadd.f32 0.0, %v2325
      %v2327 = vpop.f32.mrf.mxu0
      %v2328 = vpop.f32.mrf.mxu0
      %v2329 = vadd.f32 0.0, %v2328
      %v2330 = vpop.f32.mrf.mxu0
      %2331 = vdwg.mxu0
      %v2332 = vadd.f32 %v1810, %v2198
      %v2333 = vadd.f32 %v1811, %v2201
      %v2334 = vadd.f32 %v1812, %v2206
      %v2335 = vadd.f32 %v1813, %v2209
      %v2336 = vadd.f32 %v1814, %v2214
      %v2337 = vadd.f32 %v1815, %v2217
      %v2338 = vadd.f32 %v1816, %v2222
      %v2339 = vadd.f32 %v1817, %v2225
      %v2340 = vadd.f32 %v1818, %v2230
      %v2341 = vadd.f32 %v1819, %v2233
      %v2342 = vadd.f32 %v1820, %v2238
      %v2343 = vadd.f32 %v1821, %v2241
      %v2344 = vadd.f32 %v1822, %v2246
      %v2345 = vadd.f32 %v1823, %v2249
      %v2346 = vadd.f32 %v1824, %v2254
      %v2347 = vadd.f32 %v1825, %v2257
      %v2348 = vadd.f32 %v1826, %v2262
      %v2349 = vadd.f32 %v1827, %v2265
      %v2350 = vadd.f32 %v1828, %v2270
      %v2351 = vadd.f32 %v1829, %v2273
      %v2352 = vadd.f32 %v1830, %v2278
      %v2353 = vadd.f32 %v1831, %v2281
      %v2354 = vadd.f32 %v1832, %v2286
      %v2355 = vadd.f32 %v1833, %v2289
      %v2356 = vadd.f32 %v1834, %v2294
      %v2357 = vadd.f32 %v1835, %v2297
      %v2358 = vadd.f32 %v1836, %v2302
      %v2359 = vadd.f32 %v1837, %v2305
      %v2360 = vadd.f32 %v1838, %v2310
      %v2361 = vadd.f32 %v1839, %v2313
      %v2362 = vadd.f32 %v1840, %v2318
      %v2363 = vadd.f32 %v1841, %v2321
      %v2364 = vadd.f32 %v1842, %v2326
      %v2365 = vadd.f32 %v1843, %v2329
      %v2366 = vld [vmem:[%s234 + $0x8] sm:$0xe]
      %s2367 = scalar_lea.vmem %s2, 20
      %v2368 = vld [vmem:[%s2367] sm:$0x7]
      %v2370 = vunpack.c.l.b16 %v2366
      %v2371 = vpack.c.b16 %v1917, %v2370
      %vm2372 = vcmask 1046528
      %v2373 = vrot.slane %v2371, 1
      %v2374 = vrot.slane %v1952, 1
      %v2375 = vsel %vm2372, %v2373, %v2374
      %v2376 = vrot.slane %v1953, 1
      %v2377 = vsel %vm2372, %v2374, %v2376
      %v2378 = vrot.slane %v1954, 1
      %v2379 = vsel %vm2372, %v2376, %v2378
      %v2380 = vrot.slane %v1955, 1
      %v2381 = vsel %vm2372, %v2378, %v2380
      %v2382 = vrot.slane %v1956, 1
      %v2383 = vsel %vm2372, %v2380, %v2382
      %v2384 = vrot.slane %v1957, 1
      %v2385 = vsel %vm2372, %v2382, %v2384
      %v2386 = vrot.slane %v1958, 1
      %v2387 = vsel %vm2372, %v2384, %v2386
      %v2388 = vrot.slane %v1959, 1
      %v2389 = vsel %vm2372, %v2386, %v2388
      %v2390 = vrot.slane %v1960, 1
      %v2391 = vsel %vm2372, %v2388, %v2390
      %v2392 = vrot.slane %v1961, 1
      %v2393 = vsel %vm2372, %v2390, %v2392
      %v2394 = vrot.slane %v1962, 1
      %v2395 = vsel %vm2372, %v2392, %v2394
      %v2396 = vrot.slane %v1963, 1
      %v2397 = vsel %vm2372, %v2394, %v2396
      %v2398 = vrot.slane %v1964, 1
      %v2399 = vsel %vm2372, %v2396, %v2398
      %v2400 = vrot.slane %v1965, 1
      %v2401 = vsel %vm2372, %v2398, %v2400
      %v2402 = vrot.slane %v1966, 1
      %v2403 = vsel %vm2372, %v2400, %v2402
      %v2404 = vrot.slane %v1967, 1
      %v2405 = vsel %vm2372, %v2402, %v2404
      %v2406 = vrot.slane %v1968, 1
      %v2407 = vsel %vm2372, %v2404, %v2406
      %v2409 = vsel %vm513, %v2375, 0
      %v2412 = vsel %vm513, %v2377, 0
      %v2415 = vsel %vm513, %v2379, 0
      %v2418 = vsel %vm513, %v2381, 0
      %v2421 = vsel %vm513, %v2383, 0
      %v2424 = vsel %vm513, %v2385, 0
      %v2427 = vsel %vm513, %v2387, 0
      %v2430 = vsel %vm513, %v2389, 0
      %v2433 = vsel %vm513, %v2391, 0
      %v2436 = vsel %vm513, %v2393, 0
      %v2439 = vsel %vm513, %v2395, 0
      %v2442 = vsel %vm513, %v2397, 0
      %v2445 = vsel %vm513, %v2399, 0
      %v2448 = vsel %vm513, %v2401, 0
      %v2451 = vsel %vm513, %v2403, 0
      %v2454 = vsel %vm513, %v2405, 0
      %v2457 = vsel %vm513, %v2407, 0
      %v2460 = vsel %vm565, %v2368, 0
      %2462 = vmatprep.subr.bf16.mxu0 0
      %2463 = vmatpush1.bf16.msra.mxu0 0
      %2464 = vmatprep.subr.bf16.mxu0 0
      %2465 = vmatpush1.bf16.msra.mxu0 0
      %2466 = vmatprep.subr.bf16.mxu0 0
      %2467 = vmatpush1.bf16.msra.mxu0 0
      %2468 = vmatprep.subr.bf16.mxu0 0
      %2469 = vmatpush1.bf16.msra.mxu0 0
      %2470 = vmatprep.subr.bf16.mxu0 0
      %2471 = vmatpush1.bf16.msra.mxu0 0
      %2472 = vmatprep.subr.bf16.mxu0 0
      %2473 = vmatpush1.bf16.msra.mxu0 0
      %2474 = vmatprep.subr.bf16.mxu0 0
      %2475 = vmatpush1.bf16.msra.mxu0 0
      %2476 = vmatprep.subr.bf16.mxu0 0
      %2477 = vmatpush1.bf16.msra.mxu0 %v2460
      %2478 = vmatprep.subr.bf16.mxu0 0
      %2479 = vmatpush2.bf16.msra.mxu0 0
      %2480 = vmatprep.subr.bf16.mxu0 0
      %2481 = vmatpush2.bf16.msra.mxu0 0
      %2482 = vmatprep.subr.bf16.mxu0 0
      %2483 = vmatpush2.bf16.msra.mxu0 0
      %2484 = vmatprep.subr.bf16.mxu0 0
      %2485 = vmatpush2.bf16.msra.mxu0 0
      %2486 = vmatprep.subr.bf16.mxu0 0
      %2487 = vmatpush2.bf16.msra.mxu0 0
      %2488 = vmatprep.subr.bf16.mxu0 0
      %2489 = vmatpush2.bf16.msra.mxu0 0
      %2490 = vmatprep.subr.bf16.mxu0 0
      %2491 = vmatpush2.bf16.msra.mxu0 0
      %2492 = vmatprep.subr.bf16.mxu0 0
      %2493 = vmatpush2.bf16.msra.mxu0 0
      %2494 = vmatprep.mubr.bf16.mxu0 0
      %2495 = vmatmul.mubr.bf16.gmra.mxu0 %v2409
      %v2496 = vpop.f32.mrf.mxu0
      %v2497 = vadd.f32 0.0, %v2496
      %v2498 = vpop.f32.mrf.mxu0
      %v2499 = vpop.f32.mrf.mxu0
      %v2500 = vadd.f32 0.0, %v2499
      %v2501 = vpop.f32.mrf.mxu0
      %2502 = vmatprep.mubr.bf16.mxu0 0
      %2503 = vmatmul.mubr.bf16.gmra.mxu0 %v2412
      %v2504 = vpop.f32.mrf.mxu0
      %v2505 = vadd.f32 0.0, %v2504
      %v2506 = vpop.f32.mrf.mxu0
      %v2507 = vpop.f32.mrf.mxu0
      %v2508 = vadd.f32 0.0, %v2507
      %v2509 = vpop.f32.mrf.mxu0
      %2510 = vmatprep.mubr.bf16.mxu0 0
      %2511 = vmatmul.mubr.bf16.gmra.mxu0 %v2415
      %v2512 = vpop.f32.mrf.mxu0
      %v2513 = vadd.f32 0.0, %v2512
      %v2514 = vpop.f32.mrf.mxu0
      %v2515 = vpop.f32.mrf.mxu0
      %v2516 = vadd.f32 0.0, %v2515
      %v2517 = vpop.f32.mrf.mxu0
      %2518 = vmatprep.mubr.bf16.mxu0 0
      %2519 = vmatmul.mubr.bf16.gmra.mxu0 %v2418
      %v2520 = vpop.f32.mrf.mxu0
      %v2521 = vadd.f32 0.0, %v2520
      %v2522 = vpop.f32.mrf.mxu0
      %v2523 = vpop.f32.mrf.mxu0
      %v2524 = vadd.f32 0.0, %v2523
      %v2525 = vpop.f32.mrf.mxu0
      %2526 = vmatprep.mubr.bf16.mxu0 0
      %2527 = vmatmul.mubr.bf16.gmra.mxu0 %v2421
      %v2528 = vpop.f32.mrf.mxu0
      %v2529 = vadd.f32 0.0, %v2528
      %v2530 = vpop.f32.mrf.mxu0
      %v2531 = vpop.f32.mrf.mxu0
      %v2532 = vadd.f32 0.0, %v2531
      %v2533 = vpop.f32.mrf.mxu0
      %2534 = vmatprep.mubr.bf16.mxu0 0
      %2535 = vmatmul.mubr.bf16.gmra.mxu0 %v2424
      %v2536 = vpop.f32.mrf.mxu0
      %v2537 = vadd.f32 0.0, %v2536
      %v2538 = vpop.f32.mrf.mxu0
      %v2539 = vpop.f32.mrf.mxu0
      %v2540 = vadd.f32 0.0, %v2539
      %v2541 = vpop.f32.mrf.mxu0
      %2542 = vmatprep.mubr.bf16.mxu0 0
      %2543 = vmatmul.mubr.bf16.gmra.mxu0 %v2427
      %v2544 = vpop.f32.mrf.mxu0
      %v2545 = vadd.f32 0.0, %v2544
      %v2546 = vpop.f32.mrf.mxu0
      %v2547 = vpop.f32.mrf.mxu0
      %v2548 = vadd.f32 0.0, %v2547
      %v2549 = vpop.f32.mrf.mxu0
      %2550 = vmatprep.mubr.bf16.mxu0 0
      %2551 = vmatmul.mubr.bf16.gmra.mxu0 %v2430
      %v2552 = vpop.f32.mrf.mxu0
      %v2553 = vadd.f32 0.0, %v2552
      %v2554 = vpop.f32.mrf.mxu0
      %v2555 = vpop.f32.mrf.mxu0
      %v2556 = vadd.f32 0.0, %v2555
      %v2557 = vpop.f32.mrf.mxu0
      %2558 = vmatprep.mubr.bf16.mxu0 0
      %2559 = vmatmul.mubr.bf16.gmra.mxu0 %v2433
      %v2560 = vpop.f32.mrf.mxu0
      %v2561 = vadd.f32 0.0, %v2560
      %v2562 = vpop.f32.mrf.mxu0
      %v2563 = vpop.f32.mrf.mxu0
      %v2564 = vadd.f32 0.0, %v2563
      %v2565 = vpop.f32.mrf.mxu0
      %2566 = vmatprep.mubr.bf16.mxu0 0
      %2567 = vmatmul.mubr.bf16.gmra.mxu0 %v2436
      %v2568 = vpop.f32.mrf.mxu0
      %v2569 = vadd.f32 0.0, %v2568
      %v2570 = vpop.f32.mrf.mxu0
      %v2571 = vpop.f32.mrf.mxu0
      %v2572 = vadd.f32 0.0, %v2571
      %v2573 = vpop.f32.mrf.mxu0
      %2574 = vmatprep.mubr.bf16.mxu0 0
      %2575 = vmatmul.mubr.bf16.gmra.mxu0 %v2439
      %v2576 = vpop.f32.mrf.mxu0
      %v2577 = vadd.f32 0.0, %v2576
      %v2578 = vpop.f32.mrf.mxu0
      %v2579 = vpop.f32.mrf.mxu0
      %v2580 = vadd.f32 0.0, %v2579
      %v2581 = vpop.f32.mrf.mxu0
      %2582 = vmatprep.mubr.bf16.mxu0 0
      %2583 = vmatmul.mubr.bf16.gmra.mxu0 %v2442
      %v2584 = vpop.f32.mrf.mxu0
      %v2585 = vadd.f32 0.0, %v2584
      %v2586 = vpop.f32.mrf.mxu0
      %v2587 = vpop.f32.mrf.mxu0
      %v2588 = vadd.f32 0.0, %v2587
      %v2589 = vpop.f32.mrf.mxu0
      %2590 = vmatprep.mubr.bf16.mxu0 0
      %2591 = vmatmul.mubr.bf16.gmra.mxu0 %v2445
      %v2592 = vpop.f32.mrf.mxu0
      %v2593 = vadd.f32 0.0, %v2592
      %v2594 = vpop.f32.mrf.mxu0
      %v2595 = vpop.f32.mrf.mxu0
      %v2596 = vadd.f32 0.0, %v2595
      %v2597 = vpop.f32.mrf.mxu0
      %2598 = vmatprep.mubr.bf16.mxu0 0
      %2599 = vmatmul.mubr.bf16.gmra.mxu0 %v2448
      %v2600 = vpop.f32.mrf.mxu0
      %v2601 = vadd.f32 0.0, %v2600
      %v2602 = vpop.f32.mrf.mxu0
      %v2603 = vpop.f32.mrf.mxu0
      %v2604 = vadd.f32 0.0, %v2603
      %v2605 = vpop.f32.mrf.mxu0
      %2606 = vmatprep.mubr.bf16.mxu0 0
      %2607 = vmatmul.mubr.bf16.gmra.mxu0 %v2451
      %v2608 = vpop.f32.mrf.mxu0
      %v2609 = vadd.f32 0.0, %v2608
      %v2610 = vpop.f32.mrf.mxu0
      %v2611 = vpop.f32.mrf.mxu0
      %v2612 = vadd.f32 0.0, %v2611
      %v2613 = vpop.f32.mrf.mxu0
      %2614 = vmatprep.mubr.bf16.mxu0 0
      %2615 = vmatmul.mubr.bf16.gmra.mxu0 %v2454
      %v2616 = vpop.f32.mrf.mxu0
      %v2617 = vadd.f32 0.0, %v2616
      %v2618 = vpop.f32.mrf.mxu0
      %v2619 = vpop.f32.mrf.mxu0
      %v2620 = vadd.f32 0.0, %v2619
      %v2621 = vpop.f32.mrf.mxu0
      %2622 = vmatprep.mubr.bf16.mxu0 0
      %2623 = vmatmul.mubr.bf16.gmra.mxu0 %v2457
      %v2624 = vpop.f32.mrf.mxu0
      %v2625 = vadd.f32 0.0, %v2624
      %v2626 = vpop.f32.mrf.mxu0
      %v2627 = vpop.f32.mrf.mxu0
      %v2628 = vadd.f32 0.0, %v2627
      %v2629 = vpop.f32.mrf.mxu0
      %2630 = vdwg.mxu0
      %v2631 = vadd.f32 %v2332, %v2497
      %v2632 = vadd.f32 %v2333, %v2500
      %v2633 = vadd.f32 %v2334, %v2505
      %v2634 = vadd.f32 %v2335, %v2508
      %v2635 = vadd.f32 %v2336, %v2513
      %v2636 = vadd.f32 %v2337, %v2516
      %v2637 = vadd.f32 %v2338, %v2521
      %v2638 = vadd.f32 %v2339, %v2524
      %v2639 = vadd.f32 %v2340, %v2529
      %v2640 = vadd.f32 %v2341, %v2532
      %v2641 = vadd.f32 %v2342, %v2537
      %v2642 = vadd.f32 %v2343, %v2540
      %v2643 = vadd.f32 %v2344, %v2545
      %v2644 = vadd.f32 %v2345, %v2548
      %v2645 = vadd.f32 %v2346, %v2553
      %v2646 = vadd.f32 %v2347, %v2556
      %v2647 = vadd.f32 %v2348, %v2561
      %v2648 = vadd.f32 %v2349, %v2564
      %v2649 = vadd.f32 %v2350, %v2569
      %v2650 = vadd.f32 %v2351, %v2572
      %v2651 = vadd.f32 %v2352, %v2577
      %v2652 = vadd.f32 %v2353, %v2580
      %v2653 = vadd.f32 %v2354, %v2585
      %v2654 = vadd.f32 %v2355, %v2588
      %v2655 = vadd.f32 %v2356, %v2593
      %v2656 = vadd.f32 %v2357, %v2596
      %v2657 = vadd.f32 %v2358, %v2601
      %v2658 = vadd.f32 %v2359, %v2604
      %v2659 = vadd.f32 %v2360, %v2609
      %v2660 = vadd.f32 %v2361, %v2612
      %v2661 = vadd.f32 %v2362, %v2617
      %v2662 = vadd.f32 %v2363, %v2620
      %v2663 = vadd.f32 %v2364, %v2625
      %v2664 = vadd.f32 %v2365, %v2628
      %v2665 = vld [vmem:[%s239 + $0x8] sm:$0xf]
      %v2666 = vld [vmem:[%s239 + $0xc] sm:$0xf]
      %v2667 = vld [vmem:[%s239 + $0x10] sm:$0xf]
      %v2668 = vld [vmem:[%s239 + $0x14] sm:$0xf]
      %v2669 = vld [vmem:[%s239 + $0x18] sm:$0xf]
      %v2670 = vld [vmem:[%s239 + $0x1c] sm:$0xf]
      %v2671 = vld [vmem:[%s239 + $0x20] sm:$0xf]
      %v2672 = vld [vmem:[%s239 + $0x24] sm:$0xf]
      %v2673 = vld [vmem:[%s239 + $0x28] sm:$0xf]
      %v2674 = vld [vmem:[%s239 + $0x2c] sm:$0xf]
      %v2675 = vld [vmem:[%s239 + $0x30] sm:$0xf]
      %v2676 = vld [vmem:[%s239 + $0x34] sm:$0xf]
      %v2677 = vld [vmem:[%s239 + $0x38] sm:$0xf]
      %v2678 = vld [vmem:[%s239 + $0x3c] sm:$0xf]
      %v2679 = vld [vmem:[%s239 + $0x40] sm:$0xf]
      %v2680 = vld [vmem:[%s239 + $0x44] sm:$0xf]
      %v2681 = vld [vmem:[%s239 + $0x48] sm:$0xf]
      %v2682 = vld [vmem:[%s239 + $0x4c] sm:$0xf]
      %v2683 = vld [vmem:[%s239 + $0x50] sm:$0xf]
      %v2684 = vld [vmem:[%s239 + $0x54] sm:$0xf]
      %v2685 = vld [vmem:[%s239 + $0x58] sm:$0xf]
      %v2686 = vld [vmem:[%s239 + $0x5c] sm:$0xf]
      %v2687 = vld [vmem:[%s239 + $0x60] sm:$0xf]
      %v2688 = vld [vmem:[%s239 + $0x64] sm:$0xf]
      %v2689 = vld [vmem:[%s239 + $0x68] sm:$0xf]
      %v2690 = vld [vmem:[%s239 + $0x6c] sm:$0xf]
      %v2691 = vld [vmem:[%s239 + $0x70] sm:$0xf]
      %v2692 = vld [vmem:[%s239 + $0x74] sm:$0xf]
      %v2693 = vld [vmem:[%s239 + $0x78] sm:$0xf]
      %v2694 = vld [vmem:[%s239 + $0x7c] sm:$0xf]
      %v2695 = vld [vmem:[%s239 + $0x80] sm:$0xf]
      %v2696 = vld [vmem:[%s239 + $0x84] sm:$0xf]
      %v2697 = vld [vmem:[%s239 + $0x88] sm:$0xf]
      %v2698 = vld [vmem:[%s239 + $0x8c] sm:$0xf]
      %v2699 = vld [vmem:[%s239 + $0x90] sm:$0x1]
      %s2700 = scalar_lea.vmem %s2, 24
      %v2701 = vld [vmem:[%s2700] sm:$0x7]
      %v2737 = vunpack.c.l.b16 %v2665
      %v2738 = vunpack.c.l.b16 %v2666
      %v2739 = vunpack.c.l.b16 %v2667
      %v2740 = vunpack.c.l.b16 %v2668
      %v2741 = vunpack.c.l.b16 %v2669
      %v2742 = vunpack.c.l.b16 %v2670
      %v2743 = vunpack.c.l.b16 %v2671
      %v2744 = vunpack.c.l.b16 %v2672
      %v2745 = vunpack.c.l.b16 %v2673
      %v2746 = vunpack.c.l.b16 %v2674
      %v2747 = vunpack.c.l.b16 %v2675
      %v2748 = vunpack.c.l.b16 %v2676
      %v2749 = vunpack.c.l.b16 %v2677
      %v2750 = vunpack.c.l.b16 %v2678
      %v2751 = vunpack.c.l.b16 %v2679
      %v2752 = vunpack.c.l.b16 %v2680
      %v2753 = vunpack.c.l.b16 %v2681
      %v2754 = vunpack.c.l.b16 %v2682
      %v2755 = vunpack.c.l.b16 %v2683
      %v2756 = vunpack.c.l.b16 %v2684
      %v2757 = vunpack.c.l.b16 %v2685
      %v2758 = vunpack.c.l.b16 %v2686
      %v2759 = vunpack.c.l.b16 %v2687
      %v2760 = vunpack.c.l.b16 %v2688
      %v2761 = vunpack.c.l.b16 %v2689
      %v2762 = vunpack.c.l.b16 %v2690
      %v2763 = vunpack.c.l.b16 %v2691
      %v2764 = vunpack.c.l.b16 %v2692
      %v2765 = vunpack.c.l.b16 %v2693
      %v2766 = vunpack.c.l.b16 %v2694
      %v2767 = vunpack.c.l.b16 %v2695
      %v2768 = vunpack.c.l.b16 %v2696
      %v2769 = vunpack.c.l.b16 %v2697
      %v2770 = vunpack.c.l.b16 %v2698
      %v2771 = vunpack.c.l.b16 %v2699
      %v2772 = vpack.c.b16 %v2738, %v2737
      %v2773 = vpack.c.b16 %v2740, %v2739
      %v2774 = vpack.c.b16 %v2742, %v2741
      %v2775 = vpack.c.b16 %v2744, %v2743
      %v2776 = vpack.c.b16 %v2746, %v2745
      %v2777 = vpack.c.b16 %v2748, %v2747
      %v2778 = vpack.c.b16 %v2750, %v2749
      %v2779 = vpack.c.b16 %v2752, %v2751
      %v2780 = vpack.c.b16 %v2754, %v2753
      %v2781 = vpack.c.b16 %v2756, %v2755
      %v2782 = vpack.c.b16 %v2758, %v2757
      %v2783 = vpack.c.b16 %v2760, %v2759
      %v2784 = vpack.c.b16 %v2762, %v2761
      %v2785 = vpack.c.b16 %v2764, %v2763
      %v2786 = vpack.c.b16 %v2766, %v2765
      %v2787 = vpack.c.b16 %v2768, %v2767
      %v2788 = vpack.c.b16 %v2770, %v2769
      %v2789 = vpack.c.b16 %v2771, %v2771
      %v2791 = vshrl.u32 %v2772, 16
      %v2793 = vshll.u32 %v2772, 16
      %v2795 = vrot.slane %v2793, 1
      %v2796 = vor.u32 %v2791, %v2795
      %v2798 = vshll.u32 %v2773, 16
      %v2800 = vrot.slane %v2798, 1
      %v2801 = vsel %vm372, %v2796, %v2800
      %v2802 = vshrl.u32 %v2773, 16
      %v2804 = vor.u32 %v2802, %v2800
      %v2806 = vshll.u32 %v2774, 16
      %v2808 = vrot.slane %v2806, 1
      %v2809 = vsel %vm372, %v2804, %v2808
      %v2810 = vshrl.u32 %v2774, 16
      %v2812 = vor.u32 %v2810, %v2808
      %v2814 = vshll.u32 %v2775, 16
      %v2816 = vrot.slane %v2814, 1
      %v2817 = vsel %vm372, %v2812, %v2816
      %v2818 = vshrl.u32 %v2775, 16
      %v2820 = vor.u32 %v2818, %v2816
      %v2822 = vshll.u32 %v2776, 16
      %v2824 = vrot.slane %v2822, 1
      %v2825 = vsel %vm372, %v2820, %v2824
      %v2826 = vshrl.u32 %v2776, 16
      %v2828 = vor.u32 %v2826, %v2824
      %v2830 = vshll.u32 %v2777, 16
      %v2832 = vrot.slane %v2830, 1
      %v2833 = vsel %vm372, %v2828, %v2832
      %v2834 = vshrl.u32 %v2777, 16
      %v2836 = vor.u32 %v2834, %v2832
      %v2838 = vshll.u32 %v2778, 16
      %v2840 = vrot.slane %v2838, 1
      %v2841 = vsel %vm372, %v2836, %v2840
      %v2842 = vshrl.u32 %v2778, 16
      %v2844 = vor.u32 %v2842, %v2840
      %v2846 = vshll.u32 %v2779, 16
      %v2848 = vrot.slane %v2846, 1
      %v2849 = vsel %vm372, %v2844, %v2848
      %v2850 = vshrl.u32 %v2779, 16
      %v2852 = vor.u32 %v2850, %v2848
      %v2854 = vshll.u32 %v2780, 16
      %v2856 = vrot.slane %v2854, 1
      %v2857 = vsel %vm372, %v2852, %v2856
      %v2858 = vshrl.u32 %v2780, 16
      %v2860 = vor.u32 %v2858, %v2856
      %v2862 = vshll.u32 %v2781, 16
      %v2864 = vrot.slane %v2862, 1
      %v2865 = vsel %vm372, %v2860, %v2864
      %v2866 = vshrl.u32 %v2781, 16
      %v2868 = vor.u32 %v2866, %v2864
      %v2870 = vshll.u32 %v2782, 16
      %v2872 = vrot.slane %v2870, 1
      %v2873 = vsel %vm372, %v2868, %v2872
      %v2874 = vshrl.u32 %v2782, 16
      %v2876 = vor.u32 %v2874, %v2872
      %v2878 = vshll.u32 %v2783, 16
      %v2880 = vrot.slane %v2878, 1
      %v2881 = vsel %vm372, %v2876, %v2880
      %v2882 = vshrl.u32 %v2783, 16
      %v2884 = vor.u32 %v2882, %v2880
      %v2886 = vshll.u32 %v2784, 16
      %v2888 = vrot.slane %v2886, 1
      %v2889 = vsel %vm372, %v2884, %v2888
      %v2890 = vshrl.u32 %v2784, 16
      %v2892 = vor.u32 %v2890, %v2888
      %v2894 = vshll.u32 %v2785, 16
      %v2896 = vrot.slane %v2894, 1
      %v2897 = vsel %vm372, %v2892, %v2896
      %v2898 = vshrl.u32 %v2785, 16
      %v2900 = vor.u32 %v2898, %v2896
      %v2902 = vshll.u32 %v2786, 16
      %v2904 = vrot.slane %v2902, 1
      %v2905 = vsel %vm372, %v2900, %v2904
      %v2906 = vshrl.u32 %v2786, 16
      %v2908 = vor.u32 %v2906, %v2904
      %v2910 = vshll.u32 %v2787, 16
      %v2912 = vrot.slane %v2910, 1
      %v2913 = vsel %vm372, %v2908, %v2912
      %v2914 = vshrl.u32 %v2787, 16
      %v2916 = vor.u32 %v2914, %v2912
      %v2918 = vshll.u32 %v2788, 16
      %v2920 = vrot.slane %v2918, 1
      %v2921 = vsel %vm372, %v2916, %v2920
      %v2922 = vshrl.u32 %v2788, 16
      %v2924 = vor.u32 %v2922, %v2920
      %v2926 = vshll.u32 %v2789, 16
      %v2928 = vrot.slane %v2926, 1
      %v2929 = vsel %vm372, %v2924, %v2928
      %v2931 = vsel %vm513, %v2801, 0
      %v2934 = vsel %vm513, %v2809, 0
      %v2937 = vsel %vm513, %v2817, 0
      %v2940 = vsel %vm513, %v2825, 0
      %v2943 = vsel %vm513, %v2833, 0
      %v2946 = vsel %vm513, %v2841, 0
      %v2949 = vsel %vm513, %v2849, 0
      %v2952 = vsel %vm513, %v2857, 0
      %v2955 = vsel %vm513, %v2865, 0
      %v2958 = vsel %vm513, %v2873, 0
      %v2961 = vsel %vm513, %v2881, 0
      %v2964 = vsel %vm513, %v2889, 0
      %v2967 = vsel %vm513, %v2897, 0
      %v2970 = vsel %vm513, %v2905, 0
      %v2973 = vsel %vm513, %v2913, 0
      %v2976 = vsel %vm513, %v2921, 0
      %v2979 = vsel %vm513, %v2929, 0
      %v2982 = vsel %vm565, %v2701, 0
      %2984 = vmatprep.subr.bf16.mxu0 0
      %2985 = vmatpush1.bf16.msra.mxu0 0
      %2986 = vmatprep.subr.bf16.mxu0 0
      %2987 = vmatpush1.bf16.msra.mxu0 0
      %2988 = vmatprep.subr.bf16.mxu0 0
      %2989 = vmatpush1.bf16.msra.mxu0 0
      %2990 = vmatprep.subr.bf16.mxu0 0
      %2991 = vmatpush1.bf16.msra.mxu0 0
      %2992 = vmatprep.subr.bf16.mxu0 0
      %2993 = vmatpush1.bf16.msra.mxu0 0
      %2994 = vmatprep.subr.bf16.mxu0 0
      %2995 = vmatpush1.bf16.msra.mxu0 0
      %2996 = vmatprep.subr.bf16.mxu0 0
      %2997 = vmatpush1.bf16.msra.mxu0 0
      %2998 = vmatprep.subr.bf16.mxu0 0
      %2999 = vmatpush1.bf16.msra.mxu0 %v2982
      %3000 = vmatprep.subr.bf16.mxu0 0
      %3001 = vmatpush2.bf16.msra.mxu0 0
      %3002 = vmatprep.subr.bf16.mxu0 0
      %3003 = vmatpush2.bf16.msra.mxu0 0
      %3004 = vmatprep.subr.bf16.mxu0 0
      %3005 = vmatpush2.bf16.msra.mxu0 0
      %3006 = vmatprep.subr.bf16.mxu0 0
      %3007 = vmatpush2.bf16.msra.mxu0 0
      %3008 = vmatprep.subr.bf16.mxu0 0
      %3009 = vmatpush2.bf16.msra.mxu0 0
      %3010 = vmatprep.subr.bf16.mxu0 0
      %3011 = vmatpush2.bf16.msra.mxu0 0
      %3012 = vmatprep.subr.bf16.mxu0 0
      %3013 = vmatpush2.bf16.msra.mxu0 0
      %3014 = vmatprep.subr.bf16.mxu0 0
      %3015 = vmatpush2.bf16.msra.mxu0 0
      %3016 = vmatprep.mubr.bf16.mxu0 0
      %3017 = vmatmul.mubr.bf16.gmra.mxu0 %v2931
      %v3018 = vpop.f32.mrf.mxu0
      %v3019 = vadd.f32 0.0, %v3018
      %v3020 = vpop.f32.mrf.mxu0
      %v3021 = vpop.f32.mrf.mxu0
      %v3022 = vadd.f32 0.0, %v3021
      %v3023 = vpop.f32.mrf.mxu0
      %3024 = vmatprep.mubr.bf16.mxu0 0
      %3025 = vmatmul.mubr.bf16.gmra.mxu0 %v2934
      %v3026 = vpop.f32.mrf.mxu0
      %v3027 = vadd.f32 0.0, %v3026
      %v3028 = vpop.f32.mrf.mxu0
      %v3029 = vpop.f32.mrf.mxu0
      %v3030 = vadd.f32 0.0, %v3029
      %v3031 = vpop.f32.mrf.mxu0
      %3032 = vmatprep.mubr.bf16.mxu0 0
      %3033 = vmatmul.mubr.bf16.gmra.mxu0 %v2937
      %v3034 = vpop.f32.mrf.mxu0
      %v3035 = vadd.f32 0.0, %v3034
      %v3036 = vpop.f32.mrf.mxu0
      %v3037 = vpop.f32.mrf.mxu0
      %v3038 = vadd.f32 0.0, %v3037
      %v3039 = vpop.f32.mrf.mxu0
      %3040 = vmatprep.mubr.bf16.mxu0 0
      %3041 = vmatmul.mubr.bf16.gmra.mxu0 %v2940
      %v3042 = vpop.f32.mrf.mxu0
      %v3043 = vadd.f32 0.0, %v3042
      %v3044 = vpop.f32.mrf.mxu0
      %v3045 = vpop.f32.mrf.mxu0
      %v3046 = vadd.f32 0.0, %v3045
      %v3047 = vpop.f32.mrf.mxu0
      %3048 = vmatprep.mubr.bf16.mxu0 0
      %3049 = vmatmul.mubr.bf16.gmra.mxu0 %v2943
      %v3050 = vpop.f32.mrf.mxu0
      %v3051 = vadd.f32 0.0, %v3050
      %v3052 = vpop.f32.mrf.mxu0
      %v3053 = vpop.f32.mrf.mxu0
      %v3054 = vadd.f32 0.0, %v3053
      %v3055 = vpop.f32.mrf.mxu0
      %3056 = vmatprep.mubr.bf16.mxu0 0
      %3057 = vmatmul.mubr.bf16.gmra.mxu0 %v2946
      %v3058 = vpop.f32.mrf.mxu0
      %v3059 = vadd.f32 0.0, %v3058
      %v3060 = vpop.f32.mrf.mxu0
      %v3061 = vpop.f32.mrf.mxu0
      %v3062 = vadd.f32 0.0, %v3061
      %v3063 = vpop.f32.mrf.mxu0
      %3064 = vmatprep.mubr.bf16.mxu0 0
      %3065 = vmatmul.mubr.bf16.gmra.mxu0 %v2949
      %v3066 = vpop.f32.mrf.mxu0
      %v3067 = vadd.f32 0.0, %v3066
      %v3068 = vpop.f32.mrf.mxu0
      %v3069 = vpop.f32.mrf.mxu0
      %v3070 = vadd.f32 0.0, %v3069
      %v3071 = vpop.f32.mrf.mxu0
      %3072 = vmatprep.mubr.bf16.mxu0 0
      %3073 = vmatmul.mubr.bf16.gmra.mxu0 %v2952
      %v3074 = vpop.f32.mrf.mxu0
      %v3075 = vadd.f32 0.0, %v3074
      %v3076 = vpop.f32.mrf.mxu0
      %v3077 = vpop.f32.mrf.mxu0
      %v3078 = vadd.f32 0.0, %v3077
      %v3079 = vpop.f32.mrf.mxu0
      %3080 = vmatprep.mubr.bf16.mxu0 0
      %3081 = vmatmul.mubr.bf16.gmra.mxu0 %v2955
      %v3082 = vpop.f32.mrf.mxu0
      %v3083 = vadd.f32 0.0, %v3082
      %v3084 = vpop.f32.mrf.mxu0
      %v3085 = vpop.f32.mrf.mxu0
      %v3086 = vadd.f32 0.0, %v3085
      %v3087 = vpop.f32.mrf.mxu0
      %3088 = vmatprep.mubr.bf16.mxu0 0
      %3089 = vmatmul.mubr.bf16.gmra.mxu0 %v2958
      %v3090 = vpop.f32.mrf.mxu0
      %v3091 = vadd.f32 0.0, %v3090
      %v3092 = vpop.f32.mrf.mxu0
      %v3093 = vpop.f32.mrf.mxu0
      %v3094 = vadd.f32 0.0, %v3093
      %v3095 = vpop.f32.mrf.mxu0
      %3096 = vmatprep.mubr.bf16.mxu0 0
      %3097 = vmatmul.mubr.bf16.gmra.mxu0 %v2961
      %v3098 = vpop.f32.mrf.mxu0
      %v3099 = vadd.f32 0.0, %v3098
      %v3100 = vpop.f32.mrf.mxu0
      %v3101 = vpop.f32.mrf.mxu0
      %v3102 = vadd.f32 0.0, %v3101
      %v3103 = vpop.f32.mrf.mxu0
      %3104 = vmatprep.mubr.bf16.mxu0 0
      %3105 = vmatmul.mubr.bf16.gmra.mxu0 %v2964
      %v3106 = vpop.f32.mrf.mxu0
      %v3107 = vadd.f32 0.0, %v3106
      %v3108 = vpop.f32.mrf.mxu0
      %v3109 = vpop.f32.mrf.mxu0
      %v3110 = vadd.f32 0.0, %v3109
      %v3111 = vpop.f32.mrf.mxu0
      %3112 = vmatprep.mubr.bf16.mxu0 0
      %3113 = vmatmul.mubr.bf16.gmra.mxu0 %v2967
      %v3114 = vpop.f32.mrf.mxu0
      %v3115 = vadd.f32 0.0, %v3114
      %v3116 = vpop.f32.mrf.mxu0
      %v3117 = vpop.f32.mrf.mxu0
      %v3118 = vadd.f32 0.0, %v3117
      %v3119 = vpop.f32.mrf.mxu0
      %3120 = vmatprep.mubr.bf16.mxu0 0
      %3121 = vmatmul.mubr.bf16.gmra.mxu0 %v2970
      %v3122 = vpop.f32.mrf.mxu0
      %v3123 = vadd.f32 0.0, %v3122
      %v3124 = vpop.f32.mrf.mxu0
      %v3125 = vpop.f32.mrf.mxu0
      %v3126 = vadd.f32 0.0, %v3125
      %v3127 = vpop.f32.mrf.mxu0
      %3128 = vmatprep.mubr.bf16.mxu0 0
      %3129 = vmatmul.mubr.bf16.gmra.mxu0 %v2973
      %v3130 = vpop.f32.mrf.mxu0
      %v3131 = vadd.f32 0.0, %v3130
      %v3132 = vpop.f32.mrf.mxu0
      %v3133 = vpop.f32.mrf.mxu0
      %v3134 = vadd.f32 0.0, %v3133
      %v3135 = vpop.f32.mrf.mxu0
      %3136 = vmatprep.mubr.bf16.mxu0 0
      %3137 = vmatmul.mubr.bf16.gmra.mxu0 %v2976
      %v3138 = vpop.f32.mrf.mxu0
      %v3139 = vadd.f32 0.0, %v3138
      %v3140 = vpop.f32.mrf.mxu0
      %v3141 = vpop.f32.mrf.mxu0
      %v3142 = vadd.f32 0.0, %v3141
      %v3143 = vpop.f32.mrf.mxu0
      %3144 = vmatprep.mubr.bf16.mxu0 0
      %3145 = vmatmul.mubr.bf16.gmra.mxu0 %v2979
      %v3146 = vpop.f32.mrf.mxu0
      %v3147 = vadd.f32 0.0, %v3146
      %v3148 = vpop.f32.mrf.mxu0
      %v3149 = vpop.f32.mrf.mxu0
      %v3150 = vadd.f32 0.0, %v3149
      %v3151 = vpop.f32.mrf.mxu0
      %3152 = vdwg.mxu0
      %v3153 = vadd.f32 %v2631, %v3019
      %v3154 = vadd.f32 %v2632, %v3022
      %v3155 = vadd.f32 %v2633, %v3027
      %v3156 = vadd.f32 %v2634, %v3030
      %v3157 = vadd.f32 %v2635, %v3035
      %v3158 = vadd.f32 %v2636, %v3038
      %v3159 = vadd.f32 %v2637, %v3043
      %v3160 = vadd.f32 %v2638, %v3046
      %v3161 = vadd.f32 %v2639, %v3051
      %v3162 = vadd.f32 %v2640, %v3054
      %v3163 = vadd.f32 %v2641, %v3059
      %v3164 = vadd.f32 %v2642, %v3062
      %v3165 = vadd.f32 %v2643, %v3067
      %v3166 = vadd.f32 %v2644, %v3070
      %v3167 = vadd.f32 %v2645, %v3075
      %v3168 = vadd.f32 %v2646, %v3078
      %v3169 = vadd.f32 %v2647, %v3083
      %v3170 = vadd.f32 %v2648, %v3086
      %v3171 = vadd.f32 %v2649, %v3091
      %v3172 = vadd.f32 %v2650, %v3094
      %v3173 = vadd.f32 %v2651, %v3099
      %v3174 = vadd.f32 %v2652, %v3102
      %v3175 = vadd.f32 %v2653, %v3107
      %v3176 = vadd.f32 %v2654, %v3110
      %v3177 = vadd.f32 %v2655, %v3115
      %v3178 = vadd.f32 %v2656, %v3118
      %v3179 = vadd.f32 %v2657, %v3123
      %v3180 = vadd.f32 %v2658, %v3126
      %v3181 = vadd.f32 %v2659, %v3131
      %v3182 = vadd.f32 %v2660, %v3134
      %v3183 = vadd.f32 %v2661, %v3139
      %v3184 = vadd.f32 %v2662, %v3142
      %v3185 = vadd.f32 %v2663, %v3147
      %v3186 = vadd.f32 %v2664, %v3150
      %v3187 = vld [vmem:[%s239 + $0x8] sm:$0xe]
      %s3188 = scalar_lea.vmem %s2, 28
      %v3189 = vld [vmem:[%s3188] sm:$0x7]
      %v3191 = vunpack.c.l.b16 %v3187
      %v3192 = vpack.c.b16 %v2738, %v3191
      %v3193 = vrot.slane %v3192, 1
      %v3194 = vrot.slane %v2773, 1
      %v3195 = vsel %vm2372, %v3193, %v3194
      %v3196 = vrot.slane %v2774, 1
      %v3197 = vsel %vm2372, %v3194, %v3196
      %v3198 = vrot.slane %v2775, 1
      %v3199 = vsel %vm2372, %v3196, %v3198
      %v3200 = vrot.slane %v2776, 1
      %v3201 = vsel %vm2372, %v3198, %v3200
      %v3202 = vrot.slane %v2777, 1
      %v3203 = vsel %vm2372, %v3200, %v3202
      %v3204 = vrot.slane %v2778, 1
      %v3205 = vsel %vm2372, %v3202, %v3204
      %v3206 = vrot.slane %v2779, 1
      %v3207 = vsel %vm2372, %v3204, %v3206
      %v3208 = vrot.slane %v2780, 1
      %v3209 = vsel %vm2372, %v3206, %v3208
      %v3210 = vrot.slane %v2781, 1
      %v3211 = vsel %vm2372, %v3208, %v3210
      %v3212 = vrot.slane %v2782, 1
      %v3213 = vsel %vm2372, %v3210, %v3212
      %v3214 = vrot.slane %v2783, 1
      %v3215 = vsel %vm2372, %v3212, %v3214
      %v3216 = vrot.slane %v2784, 1
      %v3217 = vsel %vm2372, %v3214, %v3216
      %v3218 = vrot.slane %v2785, 1
      %v3219 = vsel %vm2372, %v3216, %v3218
      %v3220 = vrot.slane %v2786, 1
      %v3221 = vsel %vm2372, %v3218, %v3220
      %v3222 = vrot.slane %v2787, 1
      %v3223 = vsel %vm2372, %v3220, %v3222
      %v3224 = vrot.slane %v2788, 1
      %v3225 = vsel %vm2372, %v3222, %v3224
      %v3226 = vrot.slane %v2789, 1
      %v3227 = vsel %vm2372, %v3224, %v3226
      %v3229 = vsel %vm513, %v3195, 0
      %v3232 = vsel %vm513, %v3197, 0
      %v3235 = vsel %vm513, %v3199, 0
      %v3238 = vsel %vm513, %v3201, 0
      %v3241 = vsel %vm513, %v3203, 0
      %v3244 = vsel %vm513, %v3205, 0
      %v3247 = vsel %vm513, %v3207, 0
      %v3250 = vsel %vm513, %v3209, 0
      %v3253 = vsel %vm513, %v3211, 0
      %v3256 = vsel %vm513, %v3213, 0
      %v3259 = vsel %vm513, %v3215, 0
      %v3262 = vsel %vm513, %v3217, 0
      %v3265 = vsel %vm513, %v3219, 0
      %v3268 = vsel %vm513, %v3221, 0
      %v3271 = vsel %vm513, %v3223, 0
      %v3274 = vsel %vm513, %v3225, 0
      %v3277 = vsel %vm513, %v3227, 0
      %v3280 = vsel %vm565, %v3189, 0
      %3282 = vmatprep.subr.bf16.mxu0 0
      %3283 = vmatpush1.bf16.msra.mxu0 0
      %3284 = vmatprep.subr.bf16.mxu0 0
      %3285 = vmatpush1.bf16.msra.mxu0 0
      %3286 = vmatprep.subr.bf16.mxu0 0
      %3287 = vmatpush1.bf16.msra.mxu0 0
      %3288 = vmatprep.subr.bf16.mxu0 0
      %3289 = vmatpush1.bf16.msra.mxu0 0
      %3290 = vmatprep.subr.bf16.mxu0 0
      %3291 = vmatpush1.bf16.msra.mxu0 0
      %3292 = vmatprep.subr.bf16.mxu0 0
      %3293 = vmatpush1.bf16.msra.mxu0 0
      %3294 = vmatprep.subr.bf16.mxu0 0
      %3295 = vmatpush1.bf16.msra.mxu0 0
      %3296 = vmatprep.subr.bf16.mxu0 0
      %3297 = vmatpush1.bf16.msra.mxu0 %v3280
      %3298 = vmatprep.subr.bf16.mxu0 0
      %3299 = vmatpush2.bf16.msra.mxu0 0
      %3300 = vmatprep.subr.bf16.mxu0 0
      %3301 = vmatpush2.bf16.msra.mxu0 0
      %3302 = vmatprep.subr.bf16.mxu0 0
      %3303 = vmatpush2.bf16.msra.mxu0 0
      %3304 = vmatprep.subr.bf16.mxu0 0
      %3305 = vmatpush2.bf16.msra.mxu0 0
      %3306 = vmatprep.subr.bf16.mxu0 0
      %3307 = vmatpush2.bf16.msra.mxu0 0
      %3308 = vmatprep.subr.bf16.mxu0 0
      %3309 = vmatpush2.bf16.msra.mxu0 0
      %3310 = vmatprep.subr.bf16.mxu0 0
      %3311 = vmatpush2.bf16.msra.mxu0 0
      %3312 = vmatprep.subr.bf16.mxu0 0
      %3313 = vmatpush2.bf16.msra.mxu0 0
      %3314 = vmatprep.mubr.bf16.mxu0 0
      %3315 = vmatmul.mubr.bf16.gmra.mxu0 %v3229
      %v3316 = vpop.f32.mrf.mxu0
      %v3317 = vadd.f32 0.0, %v3316
      %v3318 = vpop.f32.mrf.mxu0
      %v3319 = vpop.f32.mrf.mxu0
      %v3320 = vadd.f32 0.0, %v3319
      %v3321 = vpop.f32.mrf.mxu0
      %3322 = vmatprep.mubr.bf16.mxu0 0
      %3323 = vmatmul.mubr.bf16.gmra.mxu0 %v3232
      %v3324 = vpop.f32.mrf.mxu0
      %v3325 = vadd.f32 0.0, %v3324
      %v3326 = vpop.f32.mrf.mxu0
      %v3327 = vpop.f32.mrf.mxu0
      %v3328 = vadd.f32 0.0, %v3327
      %v3329 = vpop.f32.mrf.mxu0
      %3330 = vmatprep.mubr.bf16.mxu0 0
      %3331 = vmatmul.mubr.bf16.gmra.mxu0 %v3235
      %v3332 = vpop.f32.mrf.mxu0
      %v3333 = vadd.f32 0.0, %v3332
      %v3334 = vpop.f32.mrf.mxu0
      %v3335 = vpop.f32.mrf.mxu0
      %v3336 = vadd.f32 0.0, %v3335
      %v3337 = vpop.f32.mrf.mxu0
      %3338 = vmatprep.mubr.bf16.mxu0 0
      %3339 = vmatmul.mubr.bf16.gmra.mxu0 %v3238
      %v3340 = vpop.f32.mrf.mxu0
      %v3341 = vadd.f32 0.0, %v3340
      %v3342 = vpop.f32.mrf.mxu0
      %v3343 = vpop.f32.mrf.mxu0
      %v3344 = vadd.f32 0.0, %v3343
      %v3345 = vpop.f32.mrf.mxu0
      %3346 = vmatprep.mubr.bf16.mxu0 0
      %3347 = vmatmul.mubr.bf16.gmra.mxu0 %v3241
      %v3348 = vpop.f32.mrf.mxu0
      %v3349 = vadd.f32 0.0, %v3348
      %v3350 = vpop.f32.mrf.mxu0
      %v3351 = vpop.f32.mrf.mxu0
      %v3352 = vadd.f32 0.0, %v3351
      %v3353 = vpop.f32.mrf.mxu0
      %3354 = vmatprep.mubr.bf16.mxu0 0
      %3355 = vmatmul.mubr.bf16.gmra.mxu0 %v3244
      %v3356 = vpop.f32.mrf.mxu0
      %v3357 = vadd.f32 0.0, %v3356
      %v3358 = vpop.f32.mrf.mxu0
      %v3359 = vpop.f32.mrf.mxu0
      %v3360 = vadd.f32 0.0, %v3359
      %v3361 = vpop.f32.mrf.mxu0
      %3362 = vmatprep.mubr.bf16.mxu0 0
      %3363 = vmatmul.mubr.bf16.gmra.mxu0 %v3247
      %v3364 = vpop.f32.mrf.mxu0
      %v3365 = vadd.f32 0.0, %v3364
      %v3366 = vpop.f32.mrf.mxu0
      %v3367 = vpop.f32.mrf.mxu0
      %v3368 = vadd.f32 0.0, %v3367
      %v3369 = vpop.f32.mrf.mxu0
      %3370 = vmatprep.mubr.bf16.mxu0 0
      %3371 = vmatmul.mubr.bf16.gmra.mxu0 %v3250
      %v3372 = vpop.f32.mrf.mxu0
      %v3373 = vadd.f32 0.0, %v3372
      %v3374 = vpop.f32.mrf.mxu0
      %v3375 = vpop.f32.mrf.mxu0
      %v3376 = vadd.f32 0.0, %v3375
      %v3377 = vpop.f32.mrf.mxu0
      %3378 = vmatprep.mubr.bf16.mxu0 0
      %3379 = vmatmul.mubr.bf16.gmra.mxu0 %v3253
      %v3380 = vpop.f32.mrf.mxu0
      %v3381 = vadd.f32 0.0, %v3380
      %v3382 = vpop.f32.mrf.mxu0
      %v3383 = vpop.f32.mrf.mxu0
      %v3384 = vadd.f32 0.0, %v3383
      %v3385 = vpop.f32.mrf.mxu0
      %3386 = vmatprep.mubr.bf16.mxu0 0
      %3387 = vmatmul.mubr.bf16.gmra.mxu0 %v3256
      %v3388 = vpop.f32.mrf.mxu0
      %v3389 = vadd.f32 0.0, %v3388
      %v3390 = vpop.f32.mrf.mxu0
      %v3391 = vpop.f32.mrf.mxu0
      %v3392 = vadd.f32 0.0, %v3391
      %v3393 = vpop.f32.mrf.mxu0
      %3394 = vmatprep.mubr.bf16.mxu0 0
      %3395 = vmatmul.mubr.bf16.gmra.mxu0 %v3259
      %v3396 = vpop.f32.mrf.mxu0
      %v3397 = vadd.f32 0.0, %v3396
      %v3398 = vpop.f32.mrf.mxu0
      %v3399 = vpop.f32.mrf.mxu0
      %v3400 = vadd.f32 0.0, %v3399
      %v3401 = vpop.f32.mrf.mxu0
      %3402 = vmatprep.mubr.bf16.mxu0 0
      %3403 = vmatmul.mubr.bf16.gmra.mxu0 %v3262
      %v3404 = vpop.f32.mrf.mxu0
      %v3405 = vadd.f32 0.0, %v3404
      %v3406 = vpop.f32.mrf.mxu0
      %v3407 = vpop.f32.mrf.mxu0
      %v3408 = vadd.f32 0.0, %v3407
      %v3409 = vpop.f32.mrf.mxu0
      %3410 = vmatprep.mubr.bf16.mxu0 0
      %3411 = vmatmul.mubr.bf16.gmra.mxu0 %v3265
      %v3412 = vpop.f32.mrf.mxu0
      %v3413 = vadd.f32 0.0, %v3412
      %v3414 = vpop.f32.mrf.mxu0
      %v3415 = vpop.f32.mrf.mxu0
      %v3416 = vadd.f32 0.0, %v3415
      %v3417 = vpop.f32.mrf.mxu0
      %3418 = vmatprep.mubr.bf16.mxu0 0
      %3419 = vmatmul.mubr.bf16.gmra.mxu0 %v3268
      %v3420 = vpop.f32.mrf.mxu0
      %v3421 = vadd.f32 0.0, %v3420
      %v3422 = vpop.f32.mrf.mxu0
      %v3423 = vpop.f32.mrf.mxu0
      %v3424 = vadd.f32 0.0, %v3423
      %v3425 = vpop.f32.mrf.mxu0
      %3426 = vmatprep.mubr.bf16.mxu0 0
      %3427 = vmatmul.mubr.bf16.gmra.mxu0 %v3271
      %v3428 = vpop.f32.mrf.mxu0
      %v3429 = vadd.f32 0.0, %v3428
      %v3430 = vpop.f32.mrf.mxu0
      %v3431 = vpop.f32.mrf.mxu0
      %v3432 = vadd.f32 0.0, %v3431
      %v3433 = vpop.f32.mrf.mxu0
      %3434 = vmatprep.mubr.bf16.mxu0 0
      %3435 = vmatmul.mubr.bf16.gmra.mxu0 %v3274
      %v3436 = vpop.f32.mrf.mxu0
      %v3437 = vadd.f32 0.0, %v3436
      %v3438 = vpop.f32.mrf.mxu0
      %v3439 = vpop.f32.mrf.mxu0
      %v3440 = vadd.f32 0.0, %v3439
      %v3441 = vpop.f32.mrf.mxu0
      %3442 = vmatprep.mubr.bf16.mxu0 0
      %3443 = vmatmul.mubr.bf16.gmra.mxu0 %v3277
      %v3444 = vpop.f32.mrf.mxu0
      %v3445 = vadd.f32 0.0, %v3444
      %v3446 = vpop.f32.mrf.mxu0
      %v3447 = vpop.f32.mrf.mxu0
      %v3448 = vadd.f32 0.0, %v3447
      %v3449 = vpop.f32.mrf.mxu0
      %3450 = vdwg.mxu0
      %v3451 = vadd.f32 %v3153, %v3317
      %v3452 = vadd.f32 %v3154, %v3320
      %v3453 = vadd.f32 %v3155, %v3325
      %v3454 = vadd.f32 %v3156, %v3328
      %v3455 = vadd.f32 %v3157, %v3333
      %v3456 = vadd.f32 %v3158, %v3336
      %v3457 = vadd.f32 %v3159, %v3341
      %v3458 = vadd.f32 %v3160, %v3344
      %v3459 = vadd.f32 %v3161, %v3349
      %v3460 = vadd.f32 %v3162, %v3352
      %v3461 = vadd.f32 %v3163, %v3357
      %v3462 = vadd.f32 %v3164, %v3360
      %v3463 = vadd.f32 %v3165, %v3365
      %v3464 = vadd.f32 %v3166, %v3368
      %v3465 = vadd.f32 %v3167, %v3373
      %v3466 = vadd.f32 %v3168, %v3376
      %v3467 = vadd.f32 %v3169, %v3381
      %v3468 = vadd.f32 %v3170, %v3384
      %v3469 = vadd.f32 %v3171, %v3389
      %v3470 = vadd.f32 %v3172, %v3392
      %v3471 = vadd.f32 %v3173, %v3397
      %v3472 = vadd.f32 %v3174, %v3400
      %v3473 = vadd.f32 %v3175, %v3405
      %v3474 = vadd.f32 %v3176, %v3408
      %v3475 = vadd.f32 %v3177, %v3413
      %v3476 = vadd.f32 %v3178, %v3416
      %v3477 = vadd.f32 %v3179, %v3421
      %v3478 = vadd.f32 %v3180, %v3424
      %v3479 = vadd.f32 %v3181, %v3429
      %v3480 = vadd.f32 %v3182, %v3432
      %v3481 = vadd.f32 %v3183, %v3437
      %v3482 = vadd.f32 %v3184, %v3440
      %v3483 = vadd.f32 %v3185, %v3445
      %v3484 = vadd.f32 %v3186, %v3448
      %v3485 = vld [vmem:[%s3] sm:$0x1]
      %v3487 = vlaneseq
      %v3488 = vshrl.u32 %v3487, 7
      %v3489 = vsub.s32 0, %v3488
      %v3490 = vrot.slane %v3485, %v3489
      %v3492 = vadd.f32 %v3451, %v3490
      %v3493 = vadd.f32 %v3452, %v3490
      %v3494 = vadd.f32 %v3453, %v3490
      %v3495 = vadd.f32 %v3454, %v3490
      %v3496 = vadd.f32 %v3455, %v3490
      %v3497 = vadd.f32 %v3456, %v3490
      %v3498 = vadd.f32 %v3457, %v3490
      %v3499 = vadd.f32 %v3458, %v3490
      %v3500 = vadd.f32 %v3459, %v3490
      %v3501 = vadd.f32 %v3460, %v3490
      %v3502 = vadd.f32 %v3461, %v3490
      %v3503 = vadd.f32 %v3462, %v3490
      %v3504 = vadd.f32 %v3463, %v3490
      %v3505 = vadd.f32 %v3464, %v3490
      %v3506 = vadd.f32 %v3465, %v3490
      %v3507 = vadd.f32 %v3466, %v3490
      %v3508 = vadd.f32 %v3467, %v3490
      %v3509 = vadd.f32 %v3468, %v3490
      %v3510 = vadd.f32 %v3469, %v3490
      %v3511 = vadd.f32 %v3470, %v3490
      %v3512 = vadd.f32 %v3471, %v3490
      %v3513 = vadd.f32 %v3472, %v3490
      %v3514 = vadd.f32 %v3473, %v3490
      %v3515 = vadd.f32 %v3474, %v3490
      %v3516 = vadd.f32 %v3475, %v3490
      %v3517 = vadd.f32 %v3476, %v3490
      %v3518 = vadd.f32 %v3477, %v3490
      %v3519 = vadd.f32 %v3478, %v3490
      %v3520 = vadd.f32 %v3479, %v3490
      %v3521 = vadd.f32 %v3480, %v3490
      %v3522 = vadd.f32 %v3481, %v3490
      %v3523 = vadd.f32 %v3482, %v3490
      %v3524 = vadd.f32 %v3483, %v3490
      %v3525 = vadd.f32 %v3484, %v3490
      %vm3526 = vcmp.ge.f32.partialorder %v3492, 0.0
      %vm3527 = vcmp.ge.f32.partialorder %v3493, 0.0
      %vm3528 = vcmp.ge.f32.partialorder %v3494, 0.0
      %vm3529 = vcmp.ge.f32.partialorder %v3495, 0.0
      %vm3530 = vcmp.ge.f32.partialorder %v3496, 0.0
      %vm3531 = vcmp.ge.f32.partialorder %v3497, 0.0
      %vm3532 = vcmp.ge.f32.partialorder %v3498, 0.0
      %vm3533 = vcmp.ge.f32.partialorder %v3499, 0.0
      %vm3534 = vcmp.ge.f32.partialorder %v3500, 0.0
      %vm3535 = vcmp.ge.f32.partialorder %v3501, 0.0
      %vm3536 = vcmp.ge.f32.partialorder %v3502, 0.0
      %vm3537 = vcmp.ge.f32.partialorder %v3503, 0.0
      %vm3538 = vcmp.ge.f32.partialorder %v3504, 0.0
      %vm3539 = vcmp.ge.f32.partialorder %v3505, 0.0
      %vm3540 = vcmp.ge.f32.partialorder %v3506, 0.0
      %vm3541 = vcmp.ge.f32.partialorder %v3507, 0.0
      %vm3542 = vcmp.ge.f32.partialorder %v3508, 0.0
      %vm3543 = vcmp.ge.f32.partialorder %v3509, 0.0
      %vm3544 = vcmp.ge.f32.partialorder %v3510, 0.0
      %vm3545 = vcmp.ge.f32.partialorder %v3511, 0.0
      %vm3546 = vcmp.ge.f32.partialorder %v3512, 0.0
      %vm3547 = vcmp.ge.f32.partialorder %v3513, 0.0
      %vm3548 = vcmp.ge.f32.partialorder %v3514, 0.0
      %vm3549 = vcmp.ge.f32.partialorder %v3515, 0.0
      %vm3550 = vcmp.ge.f32.partialorder %v3516, 0.0
      %vm3551 = vcmp.ge.f32.partialorder %v3517, 0.0
      %vm3552 = vcmp.ge.f32.partialorder %v3518, 0.0
      %vm3553 = vcmp.ge.f32.partialorder %v3519, 0.0
      %vm3554 = vcmp.ge.f32.partialorder %v3520, 0.0
      %vm3555 = vcmp.ge.f32.partialorder %v3521, 0.0
      %vm3556 = vcmp.ge.f32.partialorder %v3522, 0.0
      %vm3557 = vcmp.ge.f32.partialorder %v3523, 0.0
      %vm3558 = vcmp.ge.f32.partialorder %v3524, 0.0
      %vm3559 = vcmp.ge.f32.partialorder %v3525, 0.0
      %v3560 = vmul.f32 %v3492, 0.05
      %v3561 = vmul.f32 %v3493, 0.05
      %v3562 = vmul.f32 %v3494, 0.05
      %v3563 = vmul.f32 %v3495, 0.05
      %v3564 = vmul.f32 %v3496, 0.05
      %v3565 = vmul.f32 %v3497, 0.05
      %v3566 = vmul.f32 %v3498, 0.05
      %v3567 = vmul.f32 %v3499, 0.05
      %v3568 = vmul.f32 %v3500, 0.05
      %v3569 = vmul.f32 %v3501, 0.05
      %v3570 = vmul.f32 %v3502, 0.05
      %v3571 = vmul.f32 %v3503, 0.05
      %v3572 = vmul.f32 %v3504, 0.05
      %v3573 = vmul.f32 %v3505, 0.05
      %v3574 = vmul.f32 %v3506, 0.05
      %v3575 = vmul.f32 %v3507, 0.05
      %v3576 = vmul.f32 %v3508, 0.05
      %v3577 = vmul.f32 %v3509, 0.05
      %v3578 = vmul.f32 %v3510, 0.05
      %v3579 = vmul.f32 %v3511, 0.05
      %v3580 = vmul.f32 %v3512, 0.05
      %v3581 = vmul.f32 %v3513, 0.05
      %v3582 = vmul.f32 %v3514, 0.05
      %v3583 = vmul.f32 %v3515, 0.05
      %v3584 = vmul.f32 %v3516, 0.05
      %v3585 = vmul.f32 %v3517, 0.05
      %v3586 = vmul.f32 %v3518, 0.05
      %v3587 = vmul.f32 %v3519, 0.05
      %v3588 = vmul.f32 %v3520, 0.05
      %v3589 = vmul.f32 %v3521, 0.05
      %v3590 = vmul.f32 %v3522, 0.05
      %v3591 = vmul.f32 %v3523, 0.05
      %v3592 = vmul.f32 %v3524, 0.05
      %v3593 = vmul.f32 %v3525, 0.05
      %v3594 = vsel %vm3526, %v3492, %v3560
      %v3595 = vsel %vm3527, %v3493, %v3561
      %v3596 = vsel %vm3528, %v3494, %v3562
      %v3597 = vsel %vm3529, %v3495, %v3563
      %v3598 = vsel %vm3530, %v3496, %v3564
      %v3599 = vsel %vm3531, %v3497, %v3565
      %v3600 = vsel %vm3532, %v3498, %v3566
      %v3601 = vsel %vm3533, %v3499, %v3567
      %v3602 = vsel %vm3534, %v3500, %v3568
      %v3603 = vsel %vm3535, %v3501, %v3569
      %v3604 = vsel %vm3536, %v3502, %v3570
      %v3605 = vsel %vm3537, %v3503, %v3571
      %v3606 = vsel %vm3538, %v3504, %v3572
      %v3607 = vsel %vm3539, %v3505, %v3573
      %v3608 = vsel %vm3540, %v3506, %v3574
      %v3609 = vsel %vm3541, %v3507, %v3575
      %v3610 = vsel %vm3542, %v3508, %v3576
      %v3611 = vsel %vm3543, %v3509, %v3577
      %v3612 = vsel %vm3544, %v3510, %v3578
      %v3613 = vsel %vm3545, %v3511, %v3579
      %v3614 = vsel %vm3546, %v3512, %v3580
      %v3615 = vsel %vm3547, %v3513, %v3581
      %v3616 = vsel %vm3548, %v3514, %v3582
      %v3617 = vsel %vm3549, %v3515, %v3583
      %v3618 = vsel %vm3550, %v3516, %v3584
      %v3619 = vsel %vm3551, %v3517, %v3585
      %v3620 = vsel %vm3552, %v3518, %v3586
      %v3621 = vsel %vm3553, %v3519, %v3587
      %v3622 = vsel %vm3554, %v3520, %v3588
      %v3623 = vsel %vm3555, %v3521, %v3589
      %v3624 = vsel %vm3556, %v3522, %v3590
      %v3625 = vsel %vm3557, %v3523, %v3591
      %v3626 = vsel %vm3558, %v3524, %v3592
      %v3627 = vsel %vm3559, %v3525, %v3593
      %v3628 = vld [vmem:[%s4] sm:$0xff]
      %v3629 = vld [vmem:[%s4 + $0x8] sm:$0xff]
      %v3630 = vld [vmem:[%s4 + $0x10] sm:$0xff]
      %v3631 = vld [vmem:[%s4 + $0x18] sm:$0xff]
      %v3632 = vld [vmem:[%s4 + $0x20] sm:$0xff]
      %v3633 = vld [vmem:[%s4 + $0x28] sm:$0xff]
      %v3634 = vld [vmem:[%s4 + $0x30] sm:$0xff]
      %v3635 = vld [vmem:[%s4 + $0x38] sm:$0xff]
      %v3636 = vld [vmem:[%s4 + $0x40] sm:$0xff]
      %v3637 = vld [vmem:[%s4 + $0x48] sm:$0xff]
      %v3638 = vld [vmem:[%s4 + $0x50] sm:$0xff]
      %v3639 = vld [vmem:[%s4 + $0x58] sm:$0xff]
      %v3640 = vld [vmem:[%s4 + $0x60] sm:$0xff]
      %v3641 = vld [vmem:[%s4 + $0x68] sm:$0xff]
      %v3642 = vld [vmem:[%s4 + $0x70] sm:$0xff]
      %v3643 = vld [vmem:[%s4 + $0x78] sm:$0xff]
      %v3644 = vld [vmem:[%s4 + $0x80] sm:$0xff]
      %v3645 = vld [vmem:[%s4 + $0x88] sm:$0xff]
      %v3646 = vld [vmem:[%s4 + $0x90] sm:$0xff]
      %v3647 = vld [vmem:[%s4 + $0x98] sm:$0xff]
      %v3648 = vld [vmem:[%s4 + $0xa0] sm:$0xff]
      %v3649 = vld [vmem:[%s4 + $0xa8] sm:$0xff]
      %v3650 = vld [vmem:[%s4 + $0xb0] sm:$0xff]
      %v3651 = vld [vmem:[%s4 + $0xb8] sm:$0xff]
      %v3652 = vld [vmem:[%s4 + $0xc0] sm:$0xff]
      %v3653 = vld [vmem:[%s4 + $0xc8] sm:$0xff]
      %v3654 = vld [vmem:[%s4 + $0xd0] sm:$0xff]
      %v3655 = vld [vmem:[%s4 + $0xd8] sm:$0xff]
      %v3656 = vld [vmem:[%s4 + $0xe0] sm:$0xff]
      %v3657 = vld [vmem:[%s4 + $0xe8] sm:$0xff]
      %v3658 = vld [vmem:[%s4 + $0xf0] sm:$0xff]
      %v3659 = vld [vmem:[%s4 + $0xf8] sm:$0xff]
      %v3660 = vld [vmem:[%s4 + $0x100] sm:$0xff]
      %v3661 = vld [vmem:[%s4 + $0x108] sm:$0xff]
      %3663 = vset.pattern.permute.xlu0 0
      %3664 = vperm.xlu0 %3663, %v3628
      %v3665 = vpop.permute.xlu0 %3664
      %3668 = vset.pattern.permute.xlu0 0
      %3669 = vperm.xlu0 %3668, %v3629
      %v3670 = vpop.permute.xlu0 %3669
      %3673 = vset.pattern.permute.xlu0 0
      %3674 = vperm.xlu0 %3673, %v3630
      %v3675 = vpop.permute.xlu0 %3674
      %3678 = vset.pattern.permute.xlu0 0
      %3679 = vperm.xlu0 %3678, %v3631
      %v3680 = vpop.permute.xlu0 %3679
      %3683 = vset.pattern.permute.xlu0 0
      %3684 = vperm.xlu0 %3683, %v3632
      %v3685 = vpop.permute.xlu0 %3684
      %3688 = vset.pattern.permute.xlu0 0
      %3689 = vperm.xlu0 %3688, %v3633
      %v3690 = vpop.permute.xlu0 %3689
      %3693 = vset.pattern.permute.xlu0 0
      %3694 = vperm.xlu0 %3693, %v3634
      %v3695 = vpop.permute.xlu0 %3694
      %3698 = vset.pattern.permute.xlu0 0
      %3699 = vperm.xlu0 %3698, %v3635
      %v3700 = vpop.permute.xlu0 %3699
      %3703 = vset.pattern.permute.xlu0 0
      %3704 = vperm.xlu0 %3703, %v3636
      %v3705 = vpop.permute.xlu0 %3704
      %3708 = vset.pattern.permute.xlu0 0
      %3709 = vperm.xlu0 %3708, %v3637
      %v3710 = vpop.permute.xlu0 %3709
      %3713 = vset.pattern.permute.xlu0 0
      %3714 = vperm.xlu0 %3713, %v3638
      %v3715 = vpop.permute.xlu0 %3714
      %3718 = vset.pattern.permute.xlu0 0
      %3719 = vperm.xlu0 %3718, %v3639
      %v3720 = vpop.permute.xlu0 %3719
      %3723 = vset.pattern.permute.xlu0 0
      %3724 = vperm.xlu0 %3723, %v3640
      %v3725 = vpop.permute.xlu0 %3724
      %3728 = vset.pattern.permute.xlu0 0
      %3729 = vperm.xlu0 %3728, %v3641
      %v3730 = vpop.permute.xlu0 %3729
      %3733 = vset.pattern.permute.xlu0 0
      %3734 = vperm.xlu0 %3733, %v3642
      %v3735 = vpop.permute.xlu0 %3734
      %3738 = vset.pattern.permute.xlu0 0
      %3739 = vperm.xlu0 %3738, %v3643
      %v3740 = vpop.permute.xlu0 %3739
      %3743 = vset.pattern.permute.xlu0 0
      %3744 = vperm.xlu0 %3743, %v3644
      %v3745 = vpop.permute.xlu0 %3744
      %3748 = vset.pattern.permute.xlu0 0
      %3749 = vperm.xlu0 %3748, %v3645
      %v3750 = vpop.permute.xlu0 %3749
      %3753 = vset.pattern.permute.xlu0 0
      %3754 = vperm.xlu0 %3753, %v3646
      %v3755 = vpop.permute.xlu0 %3754
      %3758 = vset.pattern.permute.xlu0 0
      %3759 = vperm.xlu0 %3758, %v3647
      %v3760 = vpop.permute.xlu0 %3759
      %3763 = vset.pattern.permute.xlu0 0
      %3764 = vperm.xlu0 %3763, %v3648
      %v3765 = vpop.permute.xlu0 %3764
      %3768 = vset.pattern.permute.xlu0 0
      %3769 = vperm.xlu0 %3768, %v3649
      %v3770 = vpop.permute.xlu0 %3769
      %3773 = vset.pattern.permute.xlu0 0
      %3774 = vperm.xlu0 %3773, %v3650
      %v3775 = vpop.permute.xlu0 %3774
      %3778 = vset.pattern.permute.xlu0 0
      %3779 = vperm.xlu0 %3778, %v3651
      %v3780 = vpop.permute.xlu0 %3779
      %3783 = vset.pattern.permute.xlu0 0
      %3784 = vperm.xlu0 %3783, %v3652
      %v3785 = vpop.permute.xlu0 %3784
      %3788 = vset.pattern.permute.xlu0 0
      %3789 = vperm.xlu0 %3788, %v3653
      %v3790 = vpop.permute.xlu0 %3789
      %3793 = vset.pattern.permute.xlu0 0
      %3794 = vperm.xlu0 %3793, %v3654
      %v3795 = vpop.permute.xlu0 %3794
      %3798 = vset.pattern.permute.xlu0 0
      %3799 = vperm.xlu0 %3798, %v3655
      %v3800 = vpop.permute.xlu0 %3799
      %3803 = vset.pattern.permute.xlu0 0
      %3804 = vperm.xlu0 %3803, %v3656
      %v3805 = vpop.permute.xlu0 %3804
      %3808 = vset.pattern.permute.xlu0 0
      %3809 = vperm.xlu0 %3808, %v3657
      %v3810 = vpop.permute.xlu0 %3809
      %3813 = vset.pattern.permute.xlu0 0
      %3814 = vperm.xlu0 %3813, %v3658
      %v3815 = vpop.permute.xlu0 %3814
      %3818 = vset.pattern.permute.xlu0 0
      %3819 = vperm.xlu0 %3818, %v3659
      %v3820 = vpop.permute.xlu0 %3819
      %3823 = vset.pattern.permute.xlu0 0
      %3824 = vperm.xlu0 %3823, %v3660
      %v3825 = vpop.permute.xlu0 %3824
      %3828 = vset.pattern.permute.xlu0 0
      %3829 = vperm.xlu0 %3828, %v3661
      %v3830 = vpop.permute.xlu0 %3829
      %v3832 = vmul.f32 %v3594, %v3665
      %v3833 = vmul.f32 %v3595, %v3670
      %v3834 = vmul.f32 %v3596, %v3675
      %v3835 = vmul.f32 %v3597, %v3680
      %v3836 = vmul.f32 %v3598, %v3685
      %v3837 = vmul.f32 %v3599, %v3690
      %v3838 = vmul.f32 %v3600, %v3695
      %v3839 = vmul.f32 %v3601, %v3700
      %v3840 = vmul.f32 %v3602, %v3705
      %v3841 = vmul.f32 %v3603, %v3710
      %v3842 = vmul.f32 %v3604, %v3715
      %v3843 = vmul.f32 %v3605, %v3720
      %v3844 = vmul.f32 %v3606, %v3725
      %v3845 = vmul.f32 %v3607, %v3730
      %v3846 = vmul.f32 %v3608, %v3735
      %v3847 = vmul.f32 %v3609, %v3740
      %v3848 = vmul.f32 %v3610, %v3745
      %v3849 = vmul.f32 %v3611, %v3750
      %v3850 = vmul.f32 %v3612, %v3755
      %v3851 = vmul.f32 %v3613, %v3760
      %v3852 = vmul.f32 %v3614, %v3765
      %v3853 = vmul.f32 %v3615, %v3770
      %v3854 = vmul.f32 %v3616, %v3775
      %v3855 = vmul.f32 %v3617, %v3780
      %v3856 = vmul.f32 %v3618, %v3785
      %v3857 = vmul.f32 %v3619, %v3790
      %v3858 = vmul.f32 %v3620, %v3795
      %v3859 = vmul.f32 %v3621, %v3800
      %v3860 = vmul.f32 %v3622, %v3805
      %v3861 = vmul.f32 %v3623, %v3810
      %v3862 = vmul.f32 %v3624, %v3815
      %v3863 = vmul.f32 %v3625, %v3820
      %v3864 = vmul.f32 %v3626, %v3825
      %v3865 = vmul.f32 %v3627, %v3830
      %v3866 = vpack.c.bf16 %v3833, %v3832
      %v3867 = vpack.c.bf16 %v3835, %v3834
      %v3868 = vpack.c.bf16 %v3837, %v3836
      %v3869 = vpack.c.bf16 %v3839, %v3838
      %v3870 = vpack.c.bf16 %v3841, %v3840
      %v3871 = vpack.c.bf16 %v3843, %v3842
      %v3872 = vpack.c.bf16 %v3845, %v3844
      %v3873 = vpack.c.bf16 %v3847, %v3846
      %v3874 = vpack.c.bf16 %v3849, %v3848
      %v3875 = vpack.c.bf16 %v3851, %v3850
      %v3876 = vpack.c.bf16 %v3853, %v3852
      %v3877 = vpack.c.bf16 %v3855, %v3854
      %v3878 = vpack.c.bf16 %v3857, %v3856
      %v3879 = vpack.c.bf16 %v3859, %v3858
      %v3880 = vpack.c.bf16 %v3861, %v3860
      %v3881 = vpack.c.bf16 %v3863, %v3862
      %v3882 = vpack.c.bf16 %v3865, %v3864
      %v3900 = vunpack.c.l.b16 %v3866
      %v3901 = vunpack.c.h.b16 %v3866
      %v3902 = vunpack.c.l.b16 %v3867
      %v3903 = vunpack.c.h.b16 %v3867
      %v3904 = vunpack.c.l.b16 %v3868
      %v3905 = vunpack.c.h.b16 %v3868
      %v3906 = vunpack.c.l.b16 %v3869
      %v3907 = vunpack.c.h.b16 %v3869
      %v3908 = vunpack.c.l.b16 %v3870
      %v3909 = vunpack.c.h.b16 %v3870
      %v3910 = vunpack.c.l.b16 %v3871
      %v3911 = vunpack.c.h.b16 %v3871
      %v3912 = vunpack.c.l.b16 %v3872
      %v3913 = vunpack.c.h.b16 %v3872
      %v3914 = vunpack.c.l.b16 %v3873
      %v3915 = vunpack.c.h.b16 %v3873
      %v3916 = vunpack.c.l.b16 %v3874
      %v3917 = vunpack.c.h.b16 %v3874
      %v3918 = vunpack.c.l.b16 %v3875
      %v3919 = vunpack.c.h.b16 %v3875
      %v3920 = vunpack.c.l.b16 %v3876
      %v3921 = vunpack.c.h.b16 %v3876
      %v3922 = vunpack.c.l.b16 %v3877
      %v3923 = vunpack.c.h.b16 %v3877
      %v3924 = vunpack.c.l.b16 %v3878
      %v3925 = vunpack.c.h.b16 %v3878
      %v3926 = vunpack.c.l.b16 %v3879
      %v3927 = vunpack.c.h.b16 %v3879
      %v3928 = vunpack.c.l.b16 %v3880
      %v3929 = vunpack.c.h.b16 %v3880
      %v3930 = vunpack.c.l.b16 %v3881
      %v3931 = vunpack.c.h.b16 %v3881
      %v3932 = vunpack.c.l.b16 %v3882
      %v3933 = vunpack.c.h.b16 %v3882
      %v3934 = vpack.c.b16 %v3900, %v3900
      %v3935 = vpack.c.b16 %v3901, %v3901
      %v3936 = vpack.c.b16 %v3902, %v3902
      %v3937 = vpack.c.b16 %v3903, %v3903
      %v3938 = vpack.c.b16 %v3904, %v3904
      %v3939 = vpack.c.b16 %v3905, %v3905
      %v3940 = vpack.c.b16 %v3906, %v3906
      %v3941 = vpack.c.b16 %v3907, %v3907
      %v3942 = vpack.c.b16 %v3908, %v3908
      %v3943 = vpack.c.b16 %v3909, %v3909
      %v3944 = vpack.c.b16 %v3910, %v3910
      %v3945 = vpack.c.b16 %v3911, %v3911
      %v3946 = vpack.c.b16 %v3912, %v3912
      %v3947 = vpack.c.b16 %v3913, %v3913
      %v3948 = vpack.c.b16 %v3914, %v3914
      %v3949 = vpack.c.b16 %v3915, %v3915
      %v3950 = vpack.c.b16 %v3916, %v3916
      %v3951 = vpack.c.b16 %v3917, %v3917
      %v3952 = vpack.c.b16 %v3918, %v3918
      %v3953 = vpack.c.b16 %v3919, %v3919
      %v3954 = vpack.c.b16 %v3920, %v3920
      %v3955 = vpack.c.b16 %v3921, %v3921
      %v3956 = vpack.c.b16 %v3922, %v3922
      %v3957 = vpack.c.b16 %v3923, %v3923
      %v3958 = vpack.c.b16 %v3924, %v3924
      %v3959 = vpack.c.b16 %v3925, %v3925
      %v3960 = vpack.c.b16 %v3926, %v3926
      %v3961 = vpack.c.b16 %v3927, %v3927
      %v3962 = vpack.c.b16 %v3928, %v3928
      %v3963 = vpack.c.b16 %v3929, %v3929
      %v3964 = vpack.c.b16 %v3930, %v3930
      %v3965 = vpack.c.b16 %v3931, %v3931
      %v3966 = vpack.c.b16 %v3932, %v3932
      %v3967 = vpack.c.b16 %v3933, %v3933
      %vm4002 = vcmask 60416
      %4003 = vst.msk [vmem:[%s244] sm:$0xf] %vm4002, %v3934
      %4004 = vst.msk [vmem:[%s244 + $0x4] sm:$0xf] %vm4002, %v3935
      %4005 = vst.msk [vmem:[%s244 + $0x8] sm:$0xf] %vm4002, %v3936
      %4006 = vst.msk [vmem:[%s244 + $0xc] sm:$0xf] %vm4002, %v3937
      %4007 = vst.msk [vmem:[%s244 + $0x10] sm:$0xf] %vm4002, %v3938
      %4008 = vst.msk [vmem:[%s244 + $0x14] sm:$0xf] %vm4002, %v3939
      %4009 = vst.msk [vmem:[%s244 + $0x18] sm:$0xf] %vm4002, %v3940
      %4010 = vst.msk [vmem:[%s244 + $0x1c] sm:$0xf] %vm4002, %v3941
      %4011 = vst.msk [vmem:[%s244 + $0x20] sm:$0xf] %vm4002, %v3942
      %4012 = vst.msk [vmem:[%s244 + $0x24] sm:$0xf] %vm4002, %v3943
      %4013 = vst.msk [vmem:[%s244 + $0x28] sm:$0xf] %vm4002, %v3944
      %4014 = vst.msk [vmem:[%s244 + $0x2c] sm:$0xf] %vm4002, %v3945
      %4015 = vst.msk [vmem:[%s244 + $0x30] sm:$0xf] %vm4002, %v3946
      %4016 = vst.msk [vmem:[%s244 + $0x34] sm:$0xf] %vm4002, %v3947
      %4017 = vst.msk [vmem:[%s244 + $0x38] sm:$0xf] %vm4002, %v3948
      %4018 = vst.msk [vmem:[%s244 + $0x3c] sm:$0xf] %vm4002, %v3949
      %4019 = vst.msk [vmem:[%s244 + $0x40] sm:$0xf] %vm4002, %v3950
      %4020 = vst.msk [vmem:[%s244 + $0x44] sm:$0xf] %vm4002, %v3951
      %4021 = vst.msk [vmem:[%s244 + $0x48] sm:$0xf] %vm4002, %v3952
      %4022 = vst.msk [vmem:[%s244 + $0x4c] sm:$0xf] %vm4002, %v3953
      %4023 = vst.msk [vmem:[%s244 + $0x50] sm:$0xf] %vm4002, %v3954
      %4024 = vst.msk [vmem:[%s244 + $0x54] sm:$0xf] %vm4002, %v3955
      %4025 = vst.msk [vmem:[%s244 + $0x58] sm:$0xf] %vm4002, %v3956
      %4026 = vst.msk [vmem:[%s244 + $0x5c] sm:$0xf] %vm4002, %v3957
      %4027 = vst.msk [vmem:[%s244 + $0x60] sm:$0xf] %vm4002, %v3958
      %4028 = vst.msk [vmem:[%s244 + $0x64] sm:$0xf] %vm4002, %v3959
      %4029 = vst.msk [vmem:[%s244 + $0x68] sm:$0xf] %vm4002, %v3960
      %4030 = vst.msk [vmem:[%s244 + $0x6c] sm:$0xf] %vm4002, %v3961
      %4031 = vst.msk [vmem:[%s244 + $0x70] sm:$0xf] %vm4002, %v3962
      %4032 = vst.msk [vmem:[%s244 + $0x74] sm:$0xf] %vm4002, %v3963
      %4033 = vst.msk [vmem:[%s244 + $0x78] sm:$0xf] %vm4002, %v3964
      %4034 = vst.msk [vmem:[%s244 + $0x7c] sm:$0xf] %vm4002, %v3965
      %4035 = vst.msk [vmem:[%s244 + $0x80] sm:$0xf] %vm4002, %v3966
      %4036 = vst.msk [vmem:[%s244 + $0x84] sm:$0xf] %vm4002, %v3967
      %p4037 = scmp.lt.s32.totalorder %s16, 1
      %s4038 = scalar_select %p4037, %s16, 1
      %s4039 = smul.addr %s4038, 34
      %s4040 = smul.addr %s4039, 4
      %s4041 = scalar_lea.vmem %s5, %s4040
      // Predicated region
      $region41: #{d2_forward.3} parent=39 // pred_check
        %p4042 = pneg %p149
      $region42: #{d2_forward.3} parent=39 // pred_check_branch
        %4044 = sbr.rel (%p4042) target = $region44
      $region43: #{d2_forward.3} parent=39 // pred_region
        _
      $region44: #{d2_forward.3} parent=39 // pred_fallthru
        _
    $region40: #{d2_forward.3} parent=5 // pred_fallthru
      _
    %p4045 = scmp.le.s32.totalorder 2, %s11
    // Predicated region
    $region45: #{d2_forward.3} parent=5 // pred_check
      %p4046 = pneg %p4045
    $region46: #{d2_forward.3} parent=5 // pred_check_branch
      %4048 = sbr.rel (%p4046) target = $region48
    $region47: #{d2_forward.3} parent=5 // pred_region
      %s4049 = ssub.s32 %s11, 2
      // Predicated region
      $region49: #{d2_forward.3} parent=47 // pred_check
        %p4050 = pneg %p155
      $region50: #{d2_forward.3} parent=47 // pred_check_branch
        %4052 = sbr.rel (%p4050) target = $region52
      $region51: #{d2_forward.3} parent=47 // pred_region
        %p4053 = scmp.lt.s32.totalorder %s17, 1
        %s4054 = scalar_select %p4053, %s17, 1
        %s4055 = smul.addr %s4054, 34
        %s4056 = smul.addr %s4055, 4
        %s4057 = scalar_lea.vmem %s5, %s4056
      $region52: #{d2_forward.3} parent=47 // pred_fallthru
        _
    $region48: #{d2_forward.3} parent=5 // pred_fallthru
      _
  $region6: #{d2_forward.3} parent=0 // loop_footer
    %s15 = sadd.s32 1, %s11
  $region7: #{d2_forward.3} parent=0 // loop_footer_branch
    %10 = sbr.rel target = $region3
  $region8: #{d2_forward.3} parent=0 // loop_exit
    _

// kernel: d2_forward.5
$region0: #{d2_forward.5}
  #allocation0 [shape = 'u32[]', space=smem, size = 0x4, offset = 0x4, fixed_abs, tag = 'smem constant byte address 0x4 - core index']
  #allocation1 [shape = 'u32[144,128]{1,0:T(1,128)}', space=vmem, size = 0x12000, scoped, tag = 'internal scratch']
  #allocation2 [shape = 'f32[1,1]{1,0:T(1,128)S(1)}', space=vmem, size = 0x200, scoped, tag = 'scoped memory for d2_forward.5']
  %s0 = inlined_call_operand.vmem [shape: bf16[2,26,32], index: 0, kind: input, shape index: {}]
  %s1 = inlined_call_operand.vmem [shape: bf16[2,26,32], index: 1, kind: input, shape index: {}]
  %s2 = inlined_call_operand.vmem [shape: bf16[8,32,32], index: 2, kind: input, shape index: {}]
  %s3 = inlined_call_operand.vmem [shape: f32[1,32], index: 3, kind: input, shape index: {}]
  %s4 = inlined_call_operand.vmem [shape: f32[20,32], index: 4, kind: input, shape index: {}]
  %s5 = inlined_call_operand.<no memory space> [shape: f32[1,1], index: 5, kind: input, shape index: {}]
  %s6 = inlined_call_operand.vmem [shape: f32[2,1,1], index: 6, kind: output, shape index: {}]
  %s7 = sld [smem:[#allocation0]]
  $region57: #{d2_forward.5} parent=0
    _
  %s9 = ssub.s32 1, %s7
  %s10 = scalar_select 0, %s9, %s7
  %v11 = vstv %s5
  %12 = vst [vmem:[#allocation2] sm:$0x1] %v11
  loop: start=0, step=1, limit=4
  $region2: #{d2_forward.5} parent=0 // loop_pre_header
    _
  $region3: #{d2_forward.5} parent=0 // loop_header
    %s14 = sphi 0, %s18
    %p15 = scmp.ge.s32.totalorder %s14, 4
    %s24 = sphi 0, %s26
    %s27 = sphi 0, %s24
    %s28 = sphi 0, %s27
    %s44 = sphi 0, %s28
    %s50 = sphi 0, %s52
    %s53 = sphi 0, %s50
    %s54 = sphi 0, %s53
    %s70 = sphi 0, %s54
    %s74 = sphi 0, %s74
    %s76 = sphi 0, %s74
    %s77 = sphi 0, %s76
    %s91 = sphi 0, %s77
    %s95 = sphi 0, %s95
    %s97 = sphi 0, %s95
    %s98 = sphi 0, %s97
    %s112 = sphi 0, %s98
    %s116 = sphi 0, %s116
    %s118 = sphi 0, %s116
    %s119 = sphi 0, %s118
    %s133 = sphi 0, %s119
    %s137 = sphi 0, %s137
    %s139 = sphi 0, %s137
    %s140 = sphi 0, %s139
    %s154 = sphi 0, %s140
    %s160 = sphi 0, %s162
    %s163 = sphi 0, %s160
    %s164 = sphi 0, %s163
    %s180 = sphi 0, %s164
  $region4: #{d2_forward.5} parent=0 // loop_header_branch
    %17 = sbr.rel (%p15) target = $region8
  $region5: #{d2_forward.5} parent=0 // loop_body
    %s19 = ssub.s32 %s14, 1
    %s20 = ssub.s32 %s14, 2
    %s21 = sadd.s32 %s14, 1
    %s22 = ssub.s32 %s14, %s21
    %p23 = scmp.eq.s32.totalorder %s22, 0
    %s25 = sadd.s32 %s24, 1
    %s26 = scalar_select %p23, %s24, %s25
    %p29 = pneg %p23
    %p30 = scmp.eq.s32.totalorder %s14, 1
    %p31 = por %p29, %p30
    %p32 = scmp.ne.s32.totalorder %s24, %s27
    %p33 = scmp.eq.s32.totalorder %s14, 0
    %p34 = por %p32, %p33
    %p35 = scmp.ne.s32.totalorder %s24, %s27
    %p36 = scmp.eq.s32.totalorder %s19, 1
    %p37 = por %p35, %p36
    %p38 = scmp.ne.s32.totalorder %s27, %s28
    %p39 = scmp.eq.s32.totalorder %s19, 0
    %p40 = por %p38, %p39
    %p41 = scmp.ne.s32.totalorder %s27, %s28
    %p42 = scmp.eq.s32.totalorder %s20, 1
    %p43 = por %p41, %p42
    %p45 = scmp.ne.s32.totalorder %s28, %s44
    %p46 = scmp.eq.s32.totalorder %s20, 0
    %p47 = por %p45, %p46
    %s48 = ssub.s32 %s14, %s21
    %p49 = scmp.eq.s32.totalorder %s48, 0
    %s51 = sadd.s32 %s50, 1
    %s52 = scalar_select %p49, %s50, %s51
    %p55 = pneg %p49
    %p56 = scmp.eq.s32.totalorder %s14, 1
    %p57 = por %p55, %p56
    %p58 = scmp.ne.s32.totalorder %s50, %s53
    %p59 = scmp.eq.s32.totalorder %s14, 0
    %p60 = por %p58, %p59
    %p61 = scmp.ne.s32.totalorder %s50, %s53
    %p62 = scmp.eq.s32.totalorder %s19, 1
    %p63 = por %p61, %p62
    %p64 = scmp.ne.s32.totalorder %s53, %s54
    %p65 = scmp.eq.s32.totalorder %s19, 0
    %p66 = por %p64, %p65
    %p67 = scmp.ne.s32.totalorder %s53, %s54
    %p68 = scmp.eq.s32.totalorder %s20, 1
    %p69 = por %p67, %p68
    %p71 = scmp.ne.s32.totalorder %s54, %s70
    %p72 = scmp.eq.s32.totalorder %s20, 0
    %p73 = por %p71, %p72
    %s75 = sadd.s32 %s74, 1
    %p78 = scmp.eq.s32.totalorder %s14, 1
    %p79 = scmp.ne.s32.totalorder %s74, %s76
    %p80 = scmp.eq.s32.totalorder %s14, 0
    %p81 = por %p79, %p80
    %p82 = scmp.ne.s32.totalorder %s74, %s76
    %p83 = scmp.eq.s32.totalorder %s19, 1
    %p84 = por %p82, %p83
    %p85 = scmp.ne.s32.totalorder %s76, %s77
    %p86 = scmp.eq.s32.totalorder %s19, 0
    %p87 = por %p85, %p86
    %p88 = scmp.ne.s32.totalorder %s76, %s77
    %p89 = scmp.eq.s32.totalorder %s20, 1
    %p90 = por %p88, %p89
    %p92 = scmp.ne.s32.totalorder %s77, %s91
    %p93 = scmp.eq.s32.totalorder %s20, 0
    %p94 = por %p92, %p93
    %s96 = sadd.s32 %s95, 1
    %p99 = scmp.eq.s32.totalorder %s14, 1
    %p100 = scmp.ne.s32.totalorder %s95, %s97
    %p101 = scmp.eq.s32.totalorder %s14, 0
    %p102 = por %p100, %p101
    %p103 = scmp.ne.s32.totalorder %s95, %s97
    %p104 = scmp.eq.s32.totalorder %s19, 1
    %p105 = por %p103, %p104
    %p106 = scmp.ne.s32.totalorder %s97, %s98
    %p107 = scmp.eq.s32.totalorder %s19, 0
    %p108 = por %p106, %p107
    %p109 = scmp.ne.s32.totalorder %s97, %s98
    %p110 = scmp.eq.s32.totalorder %s20, 1
    %p111 = por %p109, %p110
    %p113 = scmp.ne.s32.totalorder %s98, %s112
    %p114 = scmp.eq.s32.totalorder %s20, 0
    %p115 = por %p113, %p114
    %s117 = sadd.s32 %s116, 1
    %p120 = scmp.eq.s32.totalorder %s14, 1
    %p121 = scmp.ne.s32.totalorder %s116, %s118
    %p122 = scmp.eq.s32.totalorder %s14, 0
    %p123 = por %p121, %p122
    %p124 = scmp.ne.s32.totalorder %s116, %s118
    %p125 = scmp.eq.s32.totalorder %s19, 1
    %p126 = por %p124, %p125
    %p127 = scmp.ne.s32.totalorder %s118, %s119
    %p128 = scmp.eq.s32.totalorder %s19, 0
    %p129 = por %p127, %p128
    %p130 = scmp.ne.s32.totalorder %s118, %s119
    %p131 = scmp.eq.s32.totalorder %s20, 1
    %p132 = por %p130, %p131
    %p134 = scmp.ne.s32.totalorder %s119, %s133
    %p135 = scmp.eq.s32.totalorder %s20, 0
    %p136 = por %p134, %p135
    %s138 = sadd.s32 %s137, 1
    %p141 = scmp.eq.s32.totalorder %s14, 1
    %p142 = scmp.ne.s32.totalorder %s137, %s139
    %p143 = scmp.eq.s32.totalorder %s14, 0
    %p144 = por %p142, %p143
    %p145 = scmp.ne.s32.totalorder %s137, %s139
    %p146 = scmp.eq.s32.totalorder %s19, 1
    %p147 = por %p145, %p146
    %p148 = scmp.ne.s32.totalorder %s139, %s140
    %p149 = scmp.eq.s32.totalorder %s19, 0
    %p150 = por %p148, %p149
    %p151 = scmp.ne.s32.totalorder %s139, %s140
    %p152 = scmp.eq.s32.totalorder %s20, 1
    %p153 = por %p151, %p152
    %p155 = scmp.ne.s32.totalorder %s140, %s154
    %p156 = scmp.eq.s32.totalorder %s20, 0
    %p157 = por %p155, %p156
    %s158 = ssub.s32 %s14, %s21
    %p159 = scmp.eq.s32.totalorder %s158, 0
    %s161 = sadd.s32 %s160, 1
    %s162 = scalar_select %p159, %s160, %s161
    %p165 = pneg %p159
    %p166 = scmp.eq.s32.totalorder %s14, 1
    %p167 = por %p165, %p166
    %p168 = scmp.ne.s32.totalorder %s160, %s163
    %p169 = scmp.eq.s32.totalorder %s14, 0
    %p170 = por %p168, %p169
    %p171 = scmp.ne.s32.totalorder %s160, %s163
    %p172 = scmp.eq.s32.totalorder %s19, 1
    %p173 = por %p171, %p172
    %p174 = scmp.ne.s32.totalorder %s163, %s164
    %p175 = scmp.eq.s32.totalorder %s19, 0
    %p176 = por %p174, %p175
    %p177 = scmp.ne.s32.totalorder %s163, %s164
    %p178 = scmp.eq.s32.totalorder %s20, 1
    %p179 = por %p177, %p178
    %p181 = scmp.ne.s32.totalorder %s164, %s180
    %p182 = scmp.eq.s32.totalorder %s20, 0
    %p183 = por %p181, %p182
    %p184 = scmp.le.s32.totalorder 1, %s14
    %p185 = scmp.lt.s32.totalorder %s14, 3
    %p186 = pnand %p184, %p185
    %p187 = pneg %p186
    // Predicated region
    $region9: #{d2_forward.5} parent=5 // pred_check
      _
    $region10: #{d2_forward.5} parent=5 // pred_check_branch
      %189 = sbr.rel (%p186) target = $region12
    $region11: #{d2_forward.5} parent=5 // pred_region
      %s190 = ssub.s32 %s14, 1
      // Predicated region
      $region13: #{d2_forward.5} parent=11 // pred_check
        %p191 = pneg %p87
      $region14: #{d2_forward.5} parent=11 // pred_check_branch
        %193 = sbr.rel (%p191) target = $region16
      $region15: #{d2_forward.5} parent=11 // pred_region
        _
      $region16: #{d2_forward.5} parent=11 // pred_fallthru
        _
      // Predicated region
      $region17: #{d2_forward.5} parent=11 // pred_check
        %p194 = pneg %p108
      $region18: #{d2_forward.5} parent=11 // pred_check_branch
        %196 = sbr.rel (%p194) target = $region20
      $region19: #{d2_forward.5} parent=11 // pred_region
        _
      $region20: #{d2_forward.5} parent=11 // pred_fallthru
        _
      // Predicated region
      $region21: #{d2_forward.5} parent=11 // pred_check
        %p197 = pneg %p129
      $region22: #{d2_forward.5} parent=11 // pred_check_branch
        %199 = sbr.rel (%p197) target = $region24
      $region23: #{d2_forward.5} parent=11 // pred_region
        _
      $region24: #{d2_forward.5} parent=11 // pred_fallthru
        _
      // Predicated region
      $region25: #{d2_forward.5} parent=11 // pred_check
        %p200 = pneg %p150
      $region26: #{d2_forward.5} parent=11 // pred_check_branch
        %202 = sbr.rel (%p200) target = $region28
      $region27: #{d2_forward.5} parent=11 // pred_region
        _
      $region28: #{d2_forward.5} parent=11 // pred_fallthru
        _
    $region12: #{d2_forward.5} parent=5 // pred_fallthru
      _
    %p203 = scmp.lt.s32.totalorder %s14, 2
    // Predicated region
    $region29: #{d2_forward.5} parent=5 // pred_check
      %p204 = pneg %p203
    $region30: #{d2_forward.5} parent=5 // pred_check_branch
      %206 = sbr.rel (%p204) target = $region32
    $region31: #{d2_forward.5} parent=5 // pred_region
      // Predicated region
      $region33: #{d2_forward.5} parent=31 // pred_check
        %p207 = pneg %p34
      $region34: #{d2_forward.5} parent=31 // pred_check_branch
        %209 = sbr.rel (%p207) target = $region36
      $region35: #{d2_forward.5} parent=31 // pred_region
        %p210 = scmp.lt.s32.totalorder %s14, 1
        %s211 = scalar_select %p210, %s14, 1
        %s212 = smul.addr %s211, 4
        %s213 = smul.addr %s212, 4
        %s214 = scalar_lea.vmem %s0, %s213
      $region36: #{d2_forward.5} parent=31 // pred_fallthru
        _
      // Predicated region
      $region37: #{d2_forward.5} parent=31 // pred_check
        %p215 = pneg %p60
      $region38: #{d2_forward.5} parent=31 // pred_check_branch
        %217 = sbr.rel (%p215) target = $region40
      $region39: #{d2_forward.5} parent=31 // pred_region
        %p218 = scmp.lt.s32.totalorder %s14, 1
        %s219 = scalar_select %p218, %s14, 1
        %s220 = smul.addr %s219, 4
        %s221 = smul.addr %s220, 4
        %s222 = scalar_lea.vmem %s1, %s221
      $region40: #{d2_forward.5} parent=31 // pred_fallthru
        _
    $region32: #{d2_forward.5} parent=5 // pred_fallthru
      _
    %p223 = scmp.le.s32.totalorder 1, %s14
    %p224 = scmp.lt.s32.totalorder %s14, 3
    %p225 = pnand %p223, %p224
    %p226 = pneg %p225
    // Predicated region
    $region41: #{d2_forward.5} parent=5 // pred_check
      _
    $region42: #{d2_forward.5} parent=5 // pred_check_branch
      %228 = sbr.rel (%p225) target = $region44
    $region43: #{d2_forward.5} parent=5 // pred_region
      %s229 = ssub.s32 %s14, 1
      %p230 = scmp.lt.s32.totalorder %s19, 1
      %s231 = scalar_select %p230, %s19, 1
      %s232 = smul.addr %s231, 4
      %s233 = smul.addr %s232, 4
      %s234 = scalar_lea.vmem %s0, %s233
      %p235 = pneg %p40
      %p236 = pneg %p37
      %p237 = scmp.lt.s32.totalorder %s19, 1
      %s238 = scalar_select %p237, %s19, 1
      %s239 = smul.addr %s238, 4
      %s240 = smul.addr %s239, 4
      %s241 = scalar_lea.vmem %s1, %s240
      %p242 = pneg %p66
      %p243 = pneg %p63
      %p244 = pneg %p87
      %p245 = pneg %p84
      %p246 = pneg %p108
      %p247 = pneg %p105
      %p248 = pneg %p129
      %p249 = pneg %p126
      %p250 = pneg %p150
      %p251 = pneg %p147
      %p252 = pneg %p176
      %p253 = pneg %p173
      %p254 = scmp.lt.s32.totalorder %s19, 1
      %s255 = scalar_select %p254, %s19, 1
      %s256 = scalar_lea.vmem %s6, %s255
      %p257 = scmp.lt.s32.totalorder %s19, 1
      %s258 = scalar_select %p257, %s19, 1
      %s259 = smul.addr %s258, 4
      %s260 = smul.addr %s259, 4
      %s261 = scalar_lea.vmem %s0, %s260
      %p262 = scmp.lt.s32.totalorder %s19, 1
      %s263 = scalar_select %p262, %s19, 1
      %s264 = smul.addr %s263, 4
      %s265 = smul.addr %s264, 4
      %s266 = scalar_lea.vmem %s1, %s265
      %p267 = scmp.lt.s32.totalorder %s19, 1
      %s268 = scalar_select %p267, %s19, 1
      %s269 = scalar_lea.vmem %s6, %s268
      %v271 = vld [vmem:[%s261] sm:$0xf]
      %v272 = vld [vmem:[%s261 + $0x4] sm:$0xf]
      %v273 = vld [vmem:[%s261 + $0x8] sm:$0x3]
      %v274 = vld [vmem:[%s2] sm:$0xf]
      %v275 = vld [vmem:[%s2 + $0x4] sm:$0xf]
      %v276 = vld [vmem:[%s2 + $0x8] sm:$0xf]
      %v277 = vld [vmem:[%s2 + $0xc] sm:$0xf]
      %v278 = vld [vmem:[%s261 + $0x8] sm:$0x7]
      %s279 = scalar_lea.vmem %s2, 16
      %v280 = vld [vmem:[%s279] sm:$0xf]
      %v281 = vld [vmem:[%s279 + $0x4] sm:$0xf]
      %v282 = vld [vmem:[%s279 + $0x8] sm:$0xf]
      %v283 = vld [vmem:[%s279 + $0xc] sm:$0xf]
      %v287 = vunpack.c.l.b16 %v271
      %v288 = vunpack.c.l.b16 %v272
      %v289 = vunpack.c.l.b16 %v278
      %v290 = vpack.c.b16 %v288, %v287
      %v291 = vpack.c.b16 %v289, %v289
      %vm292 = vsmask.f32 7424
      %v294 = vshrl.u32 %v290, 16
      %v296 = vshll.u32 %v290, 16
      %v298 = vrot.slane %v296, 1
      %v299 = vor.u32 %v294, %v298
      %v301 = vshll.u32 %v291, 16
      %v303 = vrot.slane %v301, 1
      %v304 = vsel %vm292, %v299, %v303
      %v305 = vshrl.u32 %v291, 16
      %v307 = vor.u32 %v305, %v303
      %v312 = vunpack.c.l.b16 %v280
      %v313 = vunpack.c.l.b16 %v281
      %v314 = vunpack.c.l.b16 %v282
      %v315 = vunpack.c.l.b16 %v283
      %v316 = vpack.c.b16 %v313, %v312
      %v317 = vpack.c.b16 %v315, %v314
      %vm320 = vcmask 261120
      %v322 = vsel %vm320, %v304, 0
      %v325 = vsel %vm320, %v307, 0
      %327 = vmatprep.subr.bf16.mxu0 0
      %328 = vmatpush1.bf16.msra.mxu0 0
      %329 = vmatprep.subr.bf16.mxu0 0
      %330 = vmatpush1.bf16.msra.mxu0 0
      %331 = vmatprep.subr.bf16.mxu0 0
      %332 = vmatpush1.bf16.msra.mxu0 0
      %333 = vmatprep.subr.bf16.mxu0 0
      %334 = vmatpush1.bf16.msra.mxu0 0
      %335 = vmatprep.subr.bf16.mxu0 0
      %336 = vmatpush1.bf16.msra.mxu0 0
      %337 = vmatprep.subr.bf16.mxu0 0
      %338 = vmatpush1.bf16.msra.mxu0 0
      %339 = vmatprep.subr.bf16.mxu0 0
      %340 = vmatpush1.bf16.msra.mxu0 %v317
      %341 = vmatprep.subr.bf16.mxu0 0
      %342 = vmatpush1.bf16.msra.mxu0 %v316
      %343 = vmatprep.subr.bf16.mxu0 0
      %344 = vmatpush2.bf16.msra.mxu0 0
      %345 = vmatprep.subr.bf16.mxu0 0
      %346 = vmatpush2.bf16.msra.mxu0 0
      %347 = vmatprep.subr.bf16.mxu0 0
      %348 = vmatpush2.bf16.msra.mxu0 0
      %349 = vmatprep.subr.bf16.mxu0 0
      %350 = vmatpush2.bf16.msra.mxu0 0
      %351 = vmatprep.subr.bf16.mxu0 0
      %352 = vmatpush2.bf16.msra.mxu0 0
      %353 = vmatprep.subr.bf16.mxu0 0
      %354 = vmatpush2.bf16.msra.mxu0 0
      %355 = vmatprep.subr.bf16.mxu0 0
      %356 = vmatpush2.bf16.msra.mxu0 0
      %357 = vmatprep.subr.bf16.mxu0 0
      %358 = vmatpush2.bf16.msra.mxu0 0
      %359 = vmatprep.mubr.bf16.mxu0 0
      %360 = vmatmul.mubr.bf16.gmra.mxu0 %v322
      %v361 = vpop.f32.mrf.mxu0
      %v362 = vadd.f32 0.0, %v361
      %v363 = vpop.f32.mrf.mxu0
      %v364 = vpop.f32.mrf.mxu0
      %v365 = vadd.f32 0.0, %v364
      %v366 = vpop.f32.mrf.mxu0
      %367 = vmatprep.mubr.bf16.mxu0 0
      %368 = vmatmul.mubr.bf16.gmra.mxu0 %v325
      %v369 = vpop.f32.mrf.mxu0
      %v370 = vadd.f32 0.0, %v369
      %v371 = vpop.f32.mrf.mxu0
      %v372 = vpop.f32.mrf.mxu0
      %v373 = vpop.f32.mrf.mxu0
      %374 = vdwg.mxu0
      %v376 = vunpack.c.l.b16 %v273
      %v377 = vpack.c.b16 %v376, %v376
      %v382 = vunpack.c.l.b16 %v274
      %v383 = vunpack.c.l.b16 %v275
      %v384 = vunpack.c.l.b16 %v276
      %v385 = vunpack.c.l.b16 %v277
      %v386 = vpack.c.b16 %v383, %v382
      %v387 = vpack.c.b16 %v385, %v384
      %v390 = vsel %vm320, %v290, 0
      %v393 = vsel %vm320, %v377, 0
      %395 = vmatprep.subr.bf16.mxu0 0
      %396 = vmatpush1.bf16.msra.mxu0 0
      %397 = vmatprep.subr.bf16.mxu0 0
      %398 = vmatpush1.bf16.msra.mxu0 0
      %399 = vmatprep.subr.bf16.mxu0 0
      %400 = vmatpush1.bf16.msra.mxu0 0
      %401 = vmatprep.subr.bf16.mxu0 0
      %402 = vmatpush1.bf16.msra.mxu0 0
      %403 = vmatprep.subr.bf16.mxu0 0
      %404 = vmatpush1.bf16.msra.mxu0 0
      %405 = vmatprep.subr.bf16.mxu0 0
      %406 = vmatpush1.bf16.msra.mxu0 0
      %407 = vmatprep.subr.bf16.mxu0 0
      %408 = vmatpush1.bf16.msra.mxu0 %v387
      %409 = vmatprep.subr.bf16.mxu0 0
      %410 = vmatpush1.bf16.msra.mxu0 %v386
      %411 = vmatprep.subr.bf16.mxu0 0
      %412 = vmatpush2.bf16.msra.mxu0 0
      %413 = vmatprep.subr.bf16.mxu0 0
      %414 = vmatpush2.bf16.msra.mxu0 0
      %415 = vmatprep.subr.bf16.mxu0 0
      %416 = vmatpush2.bf16.msra.mxu0 0
      %417 = vmatprep.subr.bf16.mxu0 0
      %418 = vmatpush2.bf16.msra.mxu0 0
      %419 = vmatprep.subr.bf16.mxu0 0
      %420 = vmatpush2.bf16.msra.mxu0 0
      %421 = vmatprep.subr.bf16.mxu0 0
      %422 = vmatpush2.bf16.msra.mxu0 0
      %423 = vmatprep.subr.bf16.mxu0 0
      %424 = vmatpush2.bf16.msra.mxu0 0
      %425 = vmatprep.subr.bf16.mxu0 0
      %426 = vmatpush2.bf16.msra.mxu0 0
      %427 = vmatprep.mubr.bf16.mxu0 0
      %428 = vmatmul.mubr.bf16.gmra.mxu0 %v390
      %v429 = vpop.f32.mrf.mxu0
      %v430 = vadd.f32 %v362, %v429
      %v431 = vpop.f32.mrf.mxu0
      %v432 = vpop.f32.mrf.mxu0
      %v433 = vadd.f32 %v365, %v432
      %v434 = vpop.f32.mrf.mxu0
      %435 = vmatprep.mubr.bf16.mxu0 0
      %436 = vmatmul.mubr.bf16.gmra.mxu0 %v393
      %v437 = vpop.f32.mrf.mxu0
      %v438 = vadd.f32 %v370, %v437
      %v439 = vpop.f32.mrf.mxu0
      %v440 = vpop.f32.mrf.mxu0
      %v441 = vpop.f32.mrf.mxu0
      %442 = vdwg.mxu0
      %v443 = vld [vmem:[%s266] sm:$0xf]
      %v444 = vld [vmem:[%s266 + $0x4] sm:$0xf]
      %v445 = vld [vmem:[%s266 + $0x8] sm:$0x3]
      %s446 = scalar_lea.vmem %s2, 32
      %v447 = vld [vmem:[%s446] sm:$0xf]
      %v448 = vld [vmem:[%s446 + $0x4] sm:$0xf]
      %v449 = vld [vmem:[%s446 + $0x8] sm:$0xf]
      %v450 = vld [vmem:[%s446 + $0xc] sm:$0xf]
      %v454 = vunpack.c.l.b16 %v443
      %v455 = vunpack.c.l.b16 %v444
      %v456 = vunpack.c.l.b16 %v445
      %v457 = vpack.c.b16 %v455, %v454
      %v458 = vpack.c.b16 %v456, %v456
      %v463 = vunpack.c.l.b16 %v447
      %v464 = vunpack.c.l.b16 %v448
      %v465 = vunpack.c.l.b16 %v449
      %v466 = vunpack.c.l.b16 %v450
      %v467 = vpack.c.b16 %v464, %v463
      %v468 = vpack.c.b16 %v466, %v465
      %v472 = vsel %vm320, %v457, 0
      %v475 = vsel %vm320, %v458, 0
      %477 = vmatprep.subr.bf16.mxu0 0
      %478 = vmatpush1.bf16.msra.mxu0 0
      %479 = vmatprep.subr.bf16.mxu0 0
      %480 = vmatpush1.bf16.msra.mxu0 0
      %481 = vmatprep.subr.bf16.mxu0 0
      %482 = vmatpush1.bf16.msra.mxu0 0
      %483 = vmatprep.subr.bf16.mxu0 0
      %484 = vmatpush1.bf16.msra.mxu0 0
      %485 = vmatprep.subr.bf16.mxu0 0
      %486 = vmatpush1.bf16.msra.mxu0 0
      %487 = vmatprep.subr.bf16.mxu0 0
      %488 = vmatpush1.bf16.msra.mxu0 0
      %489 = vmatprep.subr.bf16.mxu0 0
      %490 = vmatpush1.bf16.msra.mxu0 %v468
      %491 = vmatprep.subr.bf16.mxu0 0
      %492 = vmatpush1.bf16.msra.mxu0 %v467
      %493 = vmatprep.subr.bf16.mxu0 0
      %494 = vmatpush2.bf16.msra.mxu0 0
      %495 = vmatprep.subr.bf16.mxu0 0
      %496 = vmatpush2.bf16.msra.mxu0 0
      %497 = vmatprep.subr.bf16.mxu0 0
      %498 = vmatpush2.bf16.msra.mxu0 0
      %499 = vmatprep.subr.bf16.mxu0 0
      %500 = vmatpush2.bf16.msra.mxu0 0
      %501 = vmatprep.subr.bf16.mxu0 0
      %502 = vmatpush2.bf16.msra.mxu0 0
      %503 = vmatprep.subr.bf16.mxu0 0
      %504 = vmatpush2.bf16.msra.mxu0 0
      %505 = vmatprep.subr.bf16.mxu0 0
      %506 = vmatpush2.bf16.msra.mxu0 0
      %507 = vmatprep.subr.bf16.mxu0 0
      %508 = vmatpush2.bf16.msra.mxu0 0
      %509 = vmatprep.mubr.bf16.mxu0 0
      %510 = vmatmul.mubr.bf16.gmra.mxu0 %v472
      %v511 = vpop.f32.mrf.mxu0
      %v512 = vadd.f32 0.0, %v511
      %v513 = vpop.f32.mrf.mxu0
      %v514 = vpop.f32.mrf.mxu0
      %v515 = vadd.f32 0.0, %v514
      %v516 = vpop.f32.mrf.mxu0
      %517 = vmatprep.mubr.bf16.mxu0 0
      %518 = vmatmul.mubr.bf16.gmra.mxu0 %v475
      %v519 = vpop.f32.mrf.mxu0
      %v520 = vadd.f32 0.0, %v519
      %v521 = vpop.f32.mrf.mxu0
      %v522 = vpop.f32.mrf.mxu0
      %v523 = vpop.f32.mrf.mxu0
      %524 = vdwg.mxu0
      %v525 = vadd.f32 %v430, %v512
      %v526 = vadd.f32 %v433, %v515
      %v527 = vadd.f32 %v438, %v520
      %v528 = vld [vmem:[%s266 + $0x8] sm:$0x7]
      %s529 = scalar_lea.vmem %s2, 48
      %v530 = vld [vmem:[%s529] sm:$0xf]
      %v531 = vld [vmem:[%s529 + $0x4] sm:$0xf]
      %v532 = vld [vmem:[%s529 + $0x8] sm:$0xf]
      %v533 = vld [vmem:[%s529 + $0xc] sm:$0xf]
      %v535 = vunpack.c.l.b16 %v528
      %v536 = vpack.c.b16 %v535, %v535
      %v537 = vshrl.u32 %v457, 16
      %v539 = vshll.u32 %v457, 16
      %v541 = vrot.slane %v539, 1
      %v542 = vor.u32 %v537, %v541
      %v544 = vshll.u32 %v536, 16
      %v546 = vrot.slane %v544, 1
      %v547 = vsel %vm292, %v542, %v546
      %v548 = vshrl.u32 %v536, 16
      %v550 = vor.u32 %v548, %v546
      %v555 = vunpack.c.l.b16 %v530
      %v556 = vunpack.c.l.b16 %v531
      %v557 = vunpack.c.l.b16 %v532
      %v558 = vunpack.c.l.b16 %v533
      %v559 = vpack.c.b16 %v556, %v555
      %v560 = vpack.c.b16 %v558, %v557
      %v564 = vsel %vm320, %v547, 0
      %v567 = vsel %vm320, %v550, 0
      %569 = vmatprep.subr.bf16.mxu0 0
      %570 = vmatpush1.bf16.msra.mxu0 0
      %571 = vmatprep.subr.bf16.mxu0 0
      %572 = vmatpush1.bf16.msra.mxu0 0
      %573 = vmatprep.subr.bf16.mxu0 0
      %574 = vmatpush1.bf16.msra.mxu0 0
      %575 = vmatprep.subr.bf16.mxu0 0
      %576 = vmatpush1.bf16.msra.mxu0 0
      %577 = vmatprep.subr.bf16.mxu0 0
      %578 = vmatpush1.bf16.msra.mxu0 0
      %579 = vmatprep.subr.bf16.mxu0 0
      %580 = vmatpush1.bf16.msra.mxu0 0
      %581 = vmatprep.subr.bf16.mxu0 0
      %582 = vmatpush1.bf16.msra.mxu0 %v560
      %583 = vmatprep.subr.bf16.mxu0 0
      %584 = vmatpush1.bf16.msra.mxu0 %v559
      %585 = vmatprep.subr.bf16.mxu0 0
      %586 = vmatpush2.bf16.msra.mxu0 0
      %587 = vmatprep.subr.bf16.mxu0 0
      %588 = vmatpush2.bf16.msra.mxu0 0
      %589 = vmatprep.subr.bf16.mxu0 0
      %590 = vmatpush2.bf16.msra.mxu0 0
      %591 = vmatprep.subr.bf16.mxu0 0
      %592 = vmatpush2.bf16.msra.mxu0 0
      %593 = vmatprep.subr.bf16.mxu0 0
      %594 = vmatpush2.bf16.msra.mxu0 0
      %595 = vmatprep.subr.bf16.mxu0 0
      %596 = vmatpush2.bf16.msra.mxu0 0
      %597 = vmatprep.subr.bf16.mxu0 0
      %598 = vmatpush2.bf16.msra.mxu0 0
      %599 = vmatprep.subr.bf16.mxu0 0
      %600 = vmatpush2.bf16.msra.mxu0 0
      %601 = vmatprep.mubr.bf16.mxu0 0
      %602 = vmatmul.mubr.bf16.gmra.mxu0 %v564
      %v603 = vpop.f32.mrf.mxu0
      %v604 = vadd.f32 0.0, %v603
      %v605 = vpop.f32.mrf.mxu0
      %v606 = vpop.f32.mrf.mxu0
      %v607 = vadd.f32 0.0, %v606
      %v608 = vpop.f32.mrf.mxu0
      %609 = vmatprep.mubr.bf16.mxu0 0
      %610 = vmatmul.mubr.bf16.gmra.mxu0 %v567
      %v611 = vpop.f32.mrf.mxu0
      %v612 = vadd.f32 0.0, %v611
      %v613 = vpop.f32.mrf.mxu0
      %v614 = vpop.f32.mrf.mxu0
      %v615 = vpop.f32.mrf.mxu0
      %616 = vdwg.mxu0
      %v617 = vadd.f32 %v525, %v604
      %v618 = vadd.f32 %v526, %v607
      %v619 = vadd.f32 %v527, %v612
      %v620 = vld [vmem:[%s261] sm:$0xc]
      %v621 = vld [vmem:[%s261 + $0x4] sm:$0xf]
      %v622 = vld [vmem:[%s261 + $0x8] sm:$0xf]
      %v623 = vld [vmem:[%s261 + $0xc] sm:$0x1]
      %s624 = scalar_lea.vmem %s2, 64
      %v625 = vld [vmem:[%s624] sm:$0xf]
      %v626 = vld [vmem:[%s624 + $0x4] sm:$0xf]
      %v627 = vld [vmem:[%s624 + $0x8] sm:$0xf]
      %v628 = vld [vmem:[%s624 + $0xc] sm:$0xf]
      %v633 = vunpack.c.l.b16 %v620
      %v634 = vunpack.c.l.b16 %v621
      %v635 = vunpack.c.l.b16 %v622
      %v636 = vunpack.c.l.b16 %v623
      %v637 = vpack.c.b16 %v634, %v633
      %v638 = vpack.c.b16 %v636, %v635
      %vm639 = vsmask.f32 5376
      %v641 = vshrl.u32 %v637, 16
      %v643 = vrot.slane %v641, 2
      %v644 = vshll.u32 %v637, 16
      %v646 = vrot.slane %v644, 3
      %v647 = vor.u32 %v643, %v646
      %v649 = vshrl.u32 %v638, 16
      %v651 = vrot.slane %v649, 2
      %v652 = vshll.u32 %v638, 16
      %v654 = vrot.slane %v652, 3
      %v655 = vor.u32 %v651, %v654
      %v656 = vsel %vm639, %v647, %v655
      %v661 = vunpack.c.l.b16 %v625
      %v662 = vunpack.c.l.b16 %v626
      %v663 = vunpack.c.l.b16 %v627
      %v664 = vunpack.c.l.b16 %v628
      %v665 = vpack.c.b16 %v662, %v661
      %v666 = vpack.c.b16 %v664, %v663
      %v670 = vsel %vm320, %v656, 0
      %v673 = vsel %vm320, %v655, 0
      %675 = vmatprep.subr.bf16.mxu0 0
      %676 = vmatpush1.bf16.msra.mxu0 0
      %677 = vmatprep.subr.bf16.mxu0 0
      %678 = vmatpush1.bf16.msra.mxu0 0
      %679 = vmatprep.subr.bf16.mxu0 0
      %680 = vmatpush1.bf16.msra.mxu0 0
      %681 = vmatprep.subr.bf16.mxu0 0
      %682 = vmatpush1.bf16.msra.mxu0 0
      %683 = vmatprep.subr.bf16.mxu0 0
      %684 = vmatpush1.bf16.msra.mxu0 0
      %685 = vmatprep.subr.bf16.mxu0 0
      %686 = vmatpush1.bf16.msra.mxu0 0
      %687 = vmatprep.subr.bf16.mxu0 0
      %688 = vmatpush1.bf16.msra.mxu0 %v666
      %689 = vmatprep.subr.bf16.mxu0 0
      %690 = vmatpush1.bf16.msra.mxu0 %v665
      %691 = vmatprep.subr.bf16.mxu0 0
      %692 = vmatpush2.bf16.msra.mxu0 0
      %693 = vmatprep.subr.bf16.mxu0 0
      %694 = vmatpush2.bf16.msra.mxu0 0
      %695 = vmatprep.subr.bf16.mxu0 0
      %696 = vmatpush2.bf16.msra.mxu0 0
      %697 = vmatprep.subr.bf16.mxu0 0
      %698 = vmatpush2.bf16.msra.mxu0 0
      %699 = vmatprep.subr.bf16.mxu0 0
      %700 = vmatpush2.bf16.msra.mxu0 0
      %701 = vmatprep.subr.bf16.mxu0 0
      %702 = vmatpush2.bf16.msra.mxu0 0
      %703 = vmatprep.subr.bf16.mxu0 0
      %704 = vmatpush2.bf16.msra.mxu0 0
      %705 = vmatprep.subr.bf16.mxu0 0
      %706 = vmatpush2.bf16.msra.mxu0 0
      %707 = vmatprep.mubr.bf16.mxu0 0
      %708 = vmatmul.mubr.bf16.gmra.mxu0 %v670
      %v709 = vpop.f32.mrf.mxu0
      %v710 = vadd.f32 0.0, %v709
      %v711 = vpop.f32.mrf.mxu0
      %v712 = vpop.f32.mrf.mxu0
      %v713 = vadd.f32 0.0, %v712
      %v714 = vpop.f32.mrf.mxu0
      %715 = vmatprep.mubr.bf16.mxu0 0
      %716 = vmatmul.mubr.bf16.gmra.mxu0 %v673
      %v717 = vpop.f32.mrf.mxu0
      %v718 = vadd.f32 0.0, %v717
      %v719 = vpop.f32.mrf.mxu0
      %v720 = vpop.f32.mrf.mxu0
      %v721 = vpop.f32.mrf.mxu0
      %722 = vdwg.mxu0
      %v723 = vadd.f32 %v617, %v710
      %v724 = vadd.f32 %v618, %v713
      %v725 = vadd.f32 %v619, %v718
      %v726 = vld [vmem:[%s261] sm:$0x8]
      %s727 = scalar_lea.vmem %s2, 80
      %v728 = vld [vmem:[%s727] sm:$0xf]
      %v729 = vld [vmem:[%s727 + $0x4] sm:$0xf]
      %v730 = vld [vmem:[%s727 + $0x8] sm:$0xf]
      %v731 = vld [vmem:[%s727 + $0xc] sm:$0xf]
      %v733 = vunpack.c.l.b16 %v726
      %v734 = vpack.c.b16 %v634, %v733
      %vm735 = vcmask 1044480
      %v736 = vrot.slane %v734, 3
      %v737 = vrot.slane %v638, 3
      %v738 = vsel %vm735, %v736, %v737
      %v743 = vunpack.c.l.b16 %v728
      %v744 = vunpack.c.l.b16 %v729
      %v745 = vunpack.c.l.b16 %v730
      %v746 = vunpack.c.l.b16 %v731
      %v747 = vpack.c.b16 %v744, %v743
      %v748 = vpack.c.b16 %v746, %v745
      %v752 = vsel %vm320, %v738, 0
      %v755 = vsel %vm320, %v737, 0
      %757 = vmatprep.subr.bf16.mxu0 0
      %758 = vmatpush1.bf16.msra.mxu0 0
      %759 = vmatprep.subr.bf16.mxu0 0
      %760 = vmatpush1.bf16.msra.mxu0 0
      %761 = vmatprep.subr.bf16.mxu0 0
      %762 = vmatpush1.bf16.msra.mxu0 0
      %763 = vmatprep.subr.bf16.mxu0 0
      %764 = vmatpush1.bf16.msra.mxu0 0
      %765 = vmatprep.subr.bf16.mxu0 0
      %766 = vmatpush1.bf16.msra.mxu0 0
      %767 = vmatprep.subr.bf16.mxu0 0
      %768 = vmatpush1.bf16.msra.mxu0 0
      %769 = vmatprep.subr.bf16.mxu0 0
      %770 = vmatpush1.bf16.msra.mxu0 %v748
      %771 = vmatprep.subr.bf16.mxu0 0
      %772 = vmatpush1.bf16.msra.mxu0 %v747
      %773 = vmatprep.subr.bf16.mxu0 0
      %774 = vmatpush2.bf16.msra.mxu0 0
      %775 = vmatprep.subr.bf16.mxu0 0
      %776 = vmatpush2.bf16.msra.mxu0 0
      %777 = vmatprep.subr.bf16.mxu0 0
      %778 = vmatpush2.bf16.msra.mxu0 0
      %779 = vmatprep.subr.bf16.mxu0 0
      %780 = vmatpush2.bf16.msra.mxu0 0
      %781 = vmatprep.subr.bf16.mxu0 0
      %782 = vmatpush2.bf16.msra.mxu0 0
      %783 = vmatprep.subr.bf16.mxu0 0
      %784 = vmatpush2.bf16.msra.mxu0 0
      %785 = vmatprep.subr.bf16.mxu0 0
      %786 = vmatpush2.bf16.msra.mxu0 0
      %787 = vmatprep.subr.bf16.mxu0 0
      %788 = vmatpush2.bf16.msra.mxu0 0
      %789 = vmatprep.mubr.bf16.mxu0 0
      %790 = vmatmul.mubr.bf16.gmra.mxu0 %v752
      %v791 = vpop.f32.mrf.mxu0
      %v792 = vadd.f32 0.0, %v791
      %v793 = vpop.f32.mrf.mxu0
      %v794 = vpop.f32.mrf.mxu0
      %v795 = vadd.f32 0.0, %v794
      %v796 = vpop.f32.mrf.mxu0
      %797 = vmatprep.mubr.bf16.mxu0 0
      %798 = vmatmul.mubr.bf16.gmra.mxu0 %v755
      %v799 = vpop.f32.mrf.mxu0
      %v800 = vadd.f32 0.0, %v799
      %v801 = vpop.f32.mrf.mxu0
      %v802 = vpop.f32.mrf.mxu0
      %v803 = vpop.f32.mrf.mxu0
      %804 = vdwg.mxu0
      %v805 = vadd.f32 %v723, %v792
      %v806 = vadd.f32 %v724, %v795
      %v807 = vadd.f32 %v725, %v800
      %v808 = vld [vmem:[%s266] sm:$0xc]
      %v809 = vld [vmem:[%s266 + $0x4] sm:$0xf]
      %v810 = vld [vmem:[%s266 + $0x8] sm:$0xf]
      %v811 = vld [vmem:[%s266 + $0xc] sm:$0x1]
      %s812 = scalar_lea.vmem %s2, 96
      %v813 = vld [vmem:[%s812] sm:$0xf]
      %v814 = vld [vmem:[%s812 + $0x4] sm:$0xf]
      %v815 = vld [vmem:[%s812 + $0x8] sm:$0xf]
      %v816 = vld [vmem:[%s812 + $0xc] sm:$0xf]
      %v821 = vunpack.c.l.b16 %v808
      %v822 = vunpack.c.l.b16 %v809
      %v823 = vunpack.c.l.b16 %v810
      %v824 = vunpack.c.l.b16 %v811
      %v825 = vpack.c.b16 %v822, %v821
      %v826 = vpack.c.b16 %v824, %v823
      %v828 = vshrl.u32 %v825, 16
      %v830 = vrot.slane %v828, 2
      %v831 = vshll.u32 %v825, 16
      %v833 = vrot.slane %v831, 3
      %v834 = vor.u32 %v830, %v833
      %v836 = vshrl.u32 %v826, 16
      %v838 = vrot.slane %v836, 2
      %v839 = vshll.u32 %v826, 16
      %v841 = vrot.slane %v839, 3
      %v842 = vor.u32 %v838, %v841
      %v843 = vsel %vm639, %v834, %v842
      %v848 = vunpack.c.l.b16 %v813
      %v849 = vunpack.c.l.b16 %v814
      %v850 = vunpack.c.l.b16 %v815
      %v851 = vunpack.c.l.b16 %v816
      %v852 = vpack.c.b16 %v849, %v848
      %v853 = vpack.c.b16 %v851, %v850
      %v857 = vsel %vm320, %v843, 0
      %v860 = vsel %vm320, %v842, 0
      %862 = vmatprep.subr.bf16.mxu0 0
      %863 = vmatpush1.bf16.msra.mxu0 0
      %864 = vmatprep.subr.bf16.mxu0 0
      %865 = vmatpush1.bf16.msra.mxu0 0
      %866 = vmatprep.subr.bf16.mxu0 0
      %867 = vmatpush1.bf16.msra.mxu0 0
      %868 = vmatprep.subr.bf16.mxu0 0
      %869 = vmatpush1.bf16.msra.mxu0 0
      %870 = vmatprep.subr.bf16.mxu0 0
      %871 = vmatpush1.bf16.msra.mxu0 0
      %872 = vmatprep.subr.bf16.mxu0 0
      %873 = vmatpush1.bf16.msra.mxu0 0
      %874 = vmatprep.subr.bf16.mxu0 0
      %875 = vmatpush1.bf16.msra.mxu0 %v853
      %876 = vmatprep.subr.bf16.mxu0 0
      %877 = vmatpush1.bf16.msra.mxu0 %v852
      %878 = vmatprep.subr.bf16.mxu0 0
      %879 = vmatpush2.bf16.msra.mxu0 0
      %880 = vmatprep.subr.bf16.mxu0 0
      %881 = vmatpush2.bf16.msra.mxu0 0
      %882 = vmatprep.subr.bf16.mxu0 0
      %883 = vmatpush2.bf16.msra.mxu0 0
      %884 = vmatprep.subr.bf16.mxu0 0
      %885 = vmatpush2.bf16.msra.mxu0 0
      %886 = vmatprep.subr.bf16.mxu0 0
      %887 = vmatpush2.bf16.msra.mxu0 0
      %888 = vmatprep.subr.bf16.mxu0 0
      %889 = vmatpush2.bf16.msra.mxu0 0
      %890 = vmatprep.subr.bf16.mxu0 0
      %891 = vmatpush2.bf16.msra.mxu0 0
      %892 = vmatprep.subr.bf16.mxu0 0
      %893 = vmatpush2.bf16.msra.mxu0 0
      %894 = vmatprep.mubr.bf16.mxu0 0
      %895 = vmatmul.mubr.bf16.gmra.mxu0 %v857
      %v896 = vpop.f32.mrf.mxu0
      %v897 = vadd.f32 0.0, %v896
      %v898 = vpop.f32.mrf.mxu0
      %v899 = vpop.f32.mrf.mxu0
      %v900 = vadd.f32 0.0, %v899
      %v901 = vpop.f32.mrf.mxu0
      %902 = vmatprep.mubr.bf16.mxu0 0
      %903 = vmatmul.mubr.bf16.gmra.mxu0 %v860
      %v904 = vpop.f32.mrf.mxu0
      %v905 = vadd.f32 0.0, %v904
      %v906 = vpop.f32.mrf.mxu0
      %v907 = vpop.f32.mrf.mxu0
      %v908 = vpop.f32.mrf.mxu0
      %909 = vdwg.mxu0
      %v910 = vadd.f32 %v805, %v897
      %v911 = vadd.f32 %v806, %v900
      %v912 = vadd.f32 %v807, %v905
      %v913 = vld [vmem:[%s266] sm:$0x8]
      %s914 = scalar_lea.vmem %s2, 112
      %v915 = vld [vmem:[%s914] sm:$0xf]
      %v916 = vld [vmem:[%s914 + $0x4] sm:$0xf]
      %v917 = vld [vmem:[%s914 + $0x8] sm:$0xf]
      %v918 = vld [vmem:[%s914 + $0xc] sm:$0xf]
      %v920 = vunpack.c.l.b16 %v913
      %v921 = vpack.c.b16 %v822, %v920
      %v922 = vrot.slane %v921, 3
      %v923 = vrot.slane %v826, 3
      %v924 = vsel %vm735, %v922, %v923
      %v929 = vunpack.c.l.b16 %v915
      %v930 = vunpack.c.l.b16 %v916
      %v931 = vunpack.c.l.b16 %v917
      %v932 = vunpack.c.l.b16 %v918
      %v933 = vpack.c.b16 %v930, %v929
      %v934 = vpack.c.b16 %v932, %v931
      %v938 = vsel %vm320, %v924, 0
      %v941 = vsel %vm320, %v923, 0
      %943 = vmatprep.subr.bf16.mxu0 0
      %944 = vmatpush1.bf16.msra.mxu0 0
      %945 = vmatprep.subr.bf16.mxu0 0
      %946 = vmatpush1.bf16.msra.mxu0 0
      %947 = vmatprep.subr.bf16.mxu0 0
      %948 = vmatpush1.bf16.msra.mxu0 0
      %949 = vmatprep.subr.bf16.mxu0 0
      %950 = vmatpush1.bf16.msra.mxu0 0
      %951 = vmatprep.subr.bf16.mxu0 0
      %952 = vmatpush1.bf16.msra.mxu0 0
      %953 = vmatprep.subr.bf16.mxu0 0
      %954 = vmatpush1.bf16.msra.mxu0 0
      %955 = vmatprep.subr.bf16.mxu0 0
      %956 = vmatpush1.bf16.msra.mxu0 %v934
      %957 = vmatprep.subr.bf16.mxu0 0
      %958 = vmatpush1.bf16.msra.mxu0 %v933
      %959 = vmatprep.subr.bf16.mxu0 0
      %960 = vmatpush2.bf16.msra.mxu0 0
      %961 = vmatprep.subr.bf16.mxu0 0
      %962 = vmatpush2.bf16.msra.mxu0 0
      %963 = vmatprep.subr.bf16.mxu0 0
      %964 = vmatpush2.bf16.msra.mxu0 0
      %965 = vmatprep.subr.bf16.mxu0 0
      %966 = vmatpush2.bf16.msra.mxu0 0
      %967 = vmatprep.subr.bf16.mxu0 0
      %968 = vmatpush2.bf16.msra.mxu0 0
      %969 = vmatprep.subr.bf16.mxu0 0
      %970 = vmatpush2.bf16.msra.mxu0 0
      %971 = vmatprep.subr.bf16.mxu0 0
      %972 = vmatpush2.bf16.msra.mxu0 0
      %973 = vmatprep.subr.bf16.mxu0 0
      %974 = vmatpush2.bf16.msra.mxu0 0
      %975 = vmatprep.mubr.bf16.mxu0 0
      %976 = vmatmul.mubr.bf16.gmra.mxu0 %v938
      %v977 = vpop.f32.mrf.mxu0
      %v978 = vadd.f32 0.0, %v977
      %v979 = vpop.f32.mrf.mxu0
      %v980 = vpop.f32.mrf.mxu0
      %v981 = vadd.f32 0.0, %v980
      %v982 = vpop.f32.mrf.mxu0
      %983 = vmatprep.mubr.bf16.mxu0 0
      %984 = vmatmul.mubr.bf16.gmra.mxu0 %v941
      %v985 = vpop.f32.mrf.mxu0
      %v986 = vadd.f32 0.0, %v985
      %v987 = vpop.f32.mrf.mxu0
      %v988 = vpop.f32.mrf.mxu0
      %v989 = vpop.f32.mrf.mxu0
      %990 = vdwg.mxu0
      %v991 = vadd.f32 %v910, %v978
      %v992 = vadd.f32 %v911, %v981
      %v993 = vadd.f32 %v912, %v986
      %v994 = vld [vmem:[%s3] sm:$0x1]
      %v996 = vlaneseq
      %v997 = vshrl.u32 %v996, 7
      %v998 = vsub.s32 0, %v997
      %v999 = vrot.slane %v994, %v998
      %v1001 = vadd.f32 %v991, %v999
      %v1002 = vadd.f32 %v992, %v999
      %v1003 = vadd.f32 %v993, %v999
      %vm1004 = vcmp.ge.f32.partialorder %v1001, 0.0
      %vm1005 = vcmp.ge.f32.partialorder %v1002, 0.0
      %vm1006 = vcmp.ge.f32.partialorder %v1003, 0.0
      %v1007 = vmul.f32 %v1001, 0.05
      %v1008 = vmul.f32 %v1002, 0.05
      %v1009 = vmul.f32 %v1003, 0.05
      %v1010 = vsel %vm1004, %v1001, %v1007
      %v1011 = vsel %vm1005, %v1002, %v1008
      %v1012 = vsel %vm1006, %v1003, %v1009
      %v1013 = vld [vmem:[%s4] sm:$0xff]
      %v1014 = vld [vmem:[%s4 + $0x8] sm:$0xff]
      %v1015 = vld [vmem:[%s4 + $0x10] sm:$0xf]
      %v1016 = vmul.f32 %v1010, %v1013
      %v1017 = vmul.f32 %v1011, %v1014
      %v1018 = vmul.f32 %v1012, %v1015
      %v1019 = vsel %vm320, %v1016, 0.0
      %1020 = vadd.xlane.f32.xlu0 %v1019
      %v1021 = vpop.xlane.xlu0 %1020
      %v1022 = vsel %vm320, %v1017, 0.0
      %1023 = vadd.xlane.f32.xlu0 %v1022
      %v1024 = vpop.xlane.xlu0 %1023
      %vm1025 = vcmask 257024
      %v1026 = vsel %vm1025, %v1018, 0.0
      %1027 = vadd.xlane.f32.xlu0 %v1026
      %v1028 = vpop.xlane.xlu0 %1027
      %v1029 = vadd.f32 %v1021, %v1024
      %vm1030 = vcmask 1043456
      %v1031 = vsel %vm1030, %v1028, 0.0
      %v1032 = vadd.f32 %v1029, %v1031
      %v1033 = vrot.slane %v1032, 4
      %v1034 = vadd.f32 %v1032, %v1033
      %v1035 = vrot.slane %v1034, 2
      %v1036 = vadd.f32 %v1034, %v1035
      %v1037 = vrot.slane %v1036, 1
      %v1038 = vadd.f32 %v1036, %v1037
      %v1039 = vld [vmem:[#allocation2] sm:$0x1]
      %v1040 = vadd.f32 %v1038, %v1039
      %vm1041 = vcmask 0
      %1042 = vst.msk [vmem:[%s269] sm:$0x1] %vm1041, %v1040
      %p1043 = scmp.lt.s32.totalorder %s19, 1
      %s1044 = scalar_select %p1043, %s19, 1
      %s1045 = scalar_lea.vmem %s6, %s1044
      // Predicated region
      $region45: #{d2_forward.5} parent=43 // pred_check
        %p1046 = pneg %p173
      $region46: #{d2_forward.5} parent=43 // pred_check_branch
        %1048 = sbr.rel (%p1046) target = $region48
      $region47: #{d2_forward.5} parent=43 // pred_region
        _
      $region48: #{d2_forward.5} parent=43 // pred_fallthru
        _
    $region44: #{d2_forward.5} parent=5 // pred_fallthru
      _
    %p1049 = scmp.le.s32.totalorder 2, %s14
    // Predicated region
    $region49: #{d2_forward.5} parent=5 // pred_check
      %p1050 = pneg %p1049
    $region50: #{d2_forward.5} parent=5 // pred_check_branch
      %1052 = sbr.rel (%p1050) target = $region52
    $region51: #{d2_forward.5} parent=5 // pred_region
      %s1053 = ssub.s32 %s14, 2
      // Predicated region
      $region53: #{d2_forward.5} parent=51 // pred_check
        %p1054 = pneg %p179
      $region54: #{d2_forward.5} parent=51 // pred_check_branch
        %1056 = sbr.rel (%p1054) target = $region56
      $region55: #{d2_forward.5} parent=51 // pred_region
        %p1057 = scmp.lt.s32.totalorder %s20, 1
        %s1058 = scalar_select %p1057, %s20, 1
        %s1059 = scalar_lea.vmem %s6, %s1058
      $region56: #{d2_forward.5} parent=51 // pred_fallthru
        _
    $region52: #{d2_forward.5} parent=5 // pred_fallthru
      _
  $region6: #{d2_forward.5} parent=0 // loop_footer
    %s18 = sadd.s32 1, %s14
  $region7: #{d2_forward.5} parent=0 // loop_footer_branch
    %13 = sbr.rel target = $region3
  $region8: #{d2_forward.5} parent=0 // loop_exit
    _

</llo_original>
